<compile_context>
chip_gen: v7x
topology: tpu7x:2x2x1
jax: 0.10.0
libtpu: 0.0.40
codegen_flags: <defaults>
</compile_context>

<pallas_src>
import jax
import jax.numpy as jnp
import numpy as np
from jax.experimental import pallas as pl
from jax.experimental.pallas import tpu as pltpu

_EPS = 1e-5


# ------------------------------ fused kernel ---------------------------------

def _fused_block_kernel(x_ref, xu_ref, xd_ref,
                        w1_ref, s1_ref, t1_ref,
                        w2_ref, s2_ref, t2_ref,
                        w3_ref, s3_ref, t3_ref,
                        o_ref, hbuf_ref):
    """One (batch, row-tile) grid step of the fused bottleneck block.

    x_ref : (th, W, Cin)      f32  current row-tile (also the residual input)
    xu_ref: (1,  W, Cin)      f32  row above the tile (clamped; masked at t==0)
    xd_ref: (1,  W, Cin)      f32  row below the tile (clamped; masked at t==T-1)
    w1    : (Cin, C1p)        bf16
    w2    : (9, C1p, C1p)     bf16 per-tap 3x3 weights, tap index = dy*3+dx
    w3    : (C1p, Cout)       bf16
    s*/t* : (1, 1, C)         f32  folded BatchNorm scale / bias
    o_ref : (th, W, Cout)     f32
    hbuf  : (th+2, W+2, C1p)  f32  conv1 output with a 1-pixel zero halo
    """
    th, W, _ = x_ref.shape
    C1p = w1_ref.shape[1]
    t = pl.program_id(1)
    num_t = pl.num_programs(1)

    cdims = (((2,), (0,)), ((), ()))        # contract channel dim vs weight rows

    def conv1_bn_relu(rows_f32):
        h = jax.lax.dot_general(rows_f32.astype(jnp.bfloat16), w1_ref[...],
                                cdims, preferred_element_type=jnp.float32)
        return jnp.maximum(h * s1_ref[...] + t1_ref[...], 0.0)

    # ---- stage 1: conv1 (1x1) + bn1 + relu into the haloed scratch ----------
    # Side columns stay exactly zero (== conv2's width padding).  They are
    # (re)zeroed every step because the scratch is per-core and a
    # pl.when(first-step) hoist is unsafe under megacore grid sharding.
    zcol = jnp.zeros((th + 2, 1, C1p), hbuf_ref.dtype)
    hbuf_ref[:, 0:1, :] = zcol
    hbuf_ref[:, W + 1:W + 2, :] = zcol

    # Tile rows (one big dot, M = th*W).
    hbuf_ref[1:th + 1, 1:W + 1, :] = conv1_bn_relu(x_ref[...]).astype(hbuf_ref.dtype)

    # Halo rows: recompute conv1+bn1+relu on the single row above / below the
    # tile.  At the image border the fetched row is a clamped in-image row;
    # the keep-multiplier forces the stored halo to *exact* zeros there
    # (conv2's padding is applied to bn1's output, so the pad value must be 0,
    # not bn1(0)).
    top_keep = (t > 0).astype(jnp.float32)
    bot_keep = (t < num_t - 1).astype(jnp.float32)
    hbuf_ref[0:1, 1:W + 1, :] = (
        conv1_bn_relu(xu_ref[...]) * top_keep).astype(hbuf_ref.dtype)
    hbuf_ref[th + 1:th + 2, 1:W + 1, :] = (
        conv1_bn_relu(xd_ref[...]) * bot_keep).astype(hbuf_ref.dtype)

    # ---- stage 2: conv2 (3x3, pad=1) as 9 accumulating per-tap matmuls ------
    # No im2col patch matrix, no concat: each tap is a direct bf16 load from
    # the haloed scratch contracted against its (C1p, C1p) weight slab, with
    # f32 accumulation across taps.
    acc2 = None
    for dy in range(3):
        for dx in range(3):
            tap = hbuf_ref[dy:dy + th, dx:dx + W, :].astype(jnp.bfloat16)
            part = jax.lax.dot_general(tap, w2_ref[dy * 3 + dx], cdims,
                                       preferred_element_type=jnp.float32)
            acc2 = part if acc2 is None else acc2 + part
    h2 = jnp.maximum(acc2 * s2_ref[...] + t2_ref[...], 0.0)

    # ---- stage 3: conv3 (1x1) + bn3 + relu, residual add, final relu --------
    h3 = jax.lax.dot_general(h2.astype(jnp.bfloat16), w3_ref[...], cdims,
                             preferred_element_type=jnp.float32)
    h3 = jnp.maximum(h3 * s3_ref[...] + t3_ref[...], 0.0)
    o_ref[...] = jnp.maximum(h3 + x_ref[...], 0.0).astype(o_ref.dtype)


# ------------------------------ wrapper ---------------------------------------

def _fold_bn(conv_bias, gamma, beta, mean, var, width, eps=_EPS):
    # relu(BN(conv(x)+b)) == relu(conv(x)*s + t); zero-pad to `width` lanes.
    s = gamma / jnp.sqrt(var + eps)
    t = (conv_bias - mean) * s + beta
    c = s.shape[0]
    sp = jnp.zeros((1, 1, width), jnp.float32).at[0, 0, :c].set(s.astype(jnp.float32))
    tp = jnp.zeros((1, 1, width), jnp.float32).at[0, 0, :c].set(t.astype(jnp.float32))
    return sp, tp


def _pad_matrix(w, rows, cols):
    out = jnp.zeros((rows, cols), jnp.float32)
    return out.at[:w.shape[0], :w.shape[1]].set(w)


def _vmem_limit_bytes():
    """Per-generation VMEM budget (v5e/v6e: ~96 MiB, v7x: ~48 MiB)."""
    cap = 64 * 1024 * 1024
    try:
        info = pltpu.get_tpu_info()
        cap = int(getattr(info, "vmem_capacity_bytes", cap))
    except Exception:
        pass
    return min(cap * 3 // 4, 100 * 1024 * 1024)


def _pick_tile_h(N, H, W, Cin, Cout, C1p, vmem_limit):
    """Largest divisor of H whose working set fits ~half the VMEM budget."""
    budget = vmem_limit // 2
    divs = [d for d in range(1, H + 1) if H % d == 0]
    tile_h = 1
    for d in divs:
        need = ((d + 2) * (W + 2) * C1p * 4          # f32 halo scratch
                + 2 * d * W * Cin * 4                # double-buffered input tile
                + 2 * d * W * Cout * 4               # double-buffered output tile
                + 4 * W * Cin * 4)                   # halo-row input blocks
        if need <= budget:
            tile_h = d
    # v7x has 2 TensorCores sharded over "parallel" grid axes: keep >= 2 steps.
    if N * (H // tile_h) < 2:
        smaller = [d for d in divs if d < tile_h]
        if smaller:
            tile_h = smaller[-1]
    return tile_h


def block_forward(x_nhwc, p, *, tile_h=None):
    """Fused bottleneck block.  NHWC f32 in -> NHWC f32 out.

    NCHW callers should fuse the layout change into their producer/consumer
    rather than wrapping this call in transposes (each transpose is a full
    HBM round trip on a bandwidth-bound block).
    """
    x = x_nhwc.astype(jnp.float32)
    N, H, W, Cin = x.shape
    C1 = p["w1"].shape[1]
    Cout = p["w3"].shape[1]
    assert Cout == Cin, "identity_downsample is None: need in_ch == out_ch*expansion"
    assert Cin % 128 == 0 and W % 8 == 0, "expect lane/sublane-friendly input dims"

    # Lane-dense bottleneck width (zero cols are free-ish on the MXU and keep
    # every intermediate unmasked; kept at 128 granularity — see TODO above).
    C1p = ((C1 + 127) // 128) * 128

    vmem_limit = _vmem_limit_bytes()
    if tile_h is None:
        tile_h = _pick_tile_h(N, H, W, Cin, Cout, C1p, vmem_limit)
    assert H % tile_h == 0
    th = tile_h
    num_t = H // th

    w1m = _pad_matrix(p["w1"], Cin, C1p).astype(jnp.bfloat16)
    w3m = _pad_matrix(p["w3"], C1p, Cout).astype(jnp.bfloat16)
    w2p = jnp.zeros((3, 3, C1p, C1p), jnp.float32).at[:, :, :C1, :C1].set(p["w2"])
    w2m = w2p.reshape(9, C1p, C1p).astype(jnp.bfloat16)     # per-tap weight slabs

    s1, t1 = _fold_bn(p["b1"], p["g1"], p["be1"], p["m1"], p["v1"], C1p)
    s2, t2 = _fold_bn(p["b2"], p["g2"], p["be2"], p["m2"], p["v2"], C1p)
    s3, t3 = _fold_bn(p["b3"], p["g3"], p["be3"], p["m3"], p["v3"], Cout)

    def const_spec(arr):
        nd = arr.ndim
        return pl.BlockSpec(arr.shape, lambda n, t, _nd=nd: (0,) * _nd)

    in_specs = [
        # current row-tile (also the residual input)
        pl.BlockSpec((None, th, W, Cin), lambda n, t: (n, t, 0, 0)),
        # single row just above / below the tile (clamped at the image edges;
        # the kernel masks them to exact zeros there)
        pl.BlockSpec((None, 1, W, Cin),
                     lambda n, t: (n, jnp.maximum(t * th - 1, 0), 0, 0)),
        pl.BlockSpec((None, 1, W, Cin),
                     lambda n, t: (n, jnp.minimum((t + 1) * th, H - 1), 0, 0)),
        # weights / folded BN params: whole-array blocks, resident across grid
        const_spec(w1m), const_spec(s1), const_spec(t1),
        const_spec(w2m), const_spec(s2), const_spec(t2),
        const_spec(w3m), const_spec(s3), const_spec(t3),
    ]
    out_spec = pl.BlockSpec((None, th, W, Cout), lambda n, t: (n, t, 0, 0))

    # Advisory cost estimate (counts the padded MXU work actually issued).
    flops = 2 * N * H * W * (Cin * C1p + 9 * C1p * C1p + C1p * Cout)
    bytes_accessed = (x.size + N * H * W * Cout) * 4 \
        + (w1m.size + w2m.size + w3m.size) * 2 \
        + (s1.size + t1.size + s2.size + t2.size + s3.size + t3.size) * 4

    out = pl.pallas_call(
        _fused_block_kernel,
        out_shape=jax.ShapeDtypeStruct((N, H, W, Cout), jnp.float32),
        grid=(N, num_t),
        in_specs=in_specs,
        out_specs=out_spec,
        scratch_shapes=[pltpu.VMEM((th + 2, W + 2, C1p), jnp.float32)],
        compiler_params=pltpu.CompilerParams(
            dimension_semantics=("parallel", "parallel"),
            vmem_limit_bytes=int(vmem_limit)),
        cost_estimate=pl.CostEstimate(flops=int(flops), transcendentals=0,
                                      bytes_accessed=int(bytes_accessed)),
    )(x, x, x, w1m, s1, t1, w2m, s2, t2, w3m, s3, t3)

    return out


# --------------------------- pure-JAX reference -------------------------------
# Matches the kernel's numerics: bf16 MXU operands, f32 accumulation, f32
# BatchNorm / ReLU / residual math.  NHWC in / NHWC out.

def block_reference(x_nhwc, p, eps=_EPS):
    x = x_nhwc.astype(jnp.float32)

    def bn(h, b, g, be, m, v):
        return ((h + b) - m) / jnp.sqrt(v + eps) * g + be

    def mm(a, w):
        return jnp.einsum("nhwc,cd->nhwd", a.astype(jnp.bfloat16),
                          w.astype(jnp.bfloat16),
                          preferred_element_type=jnp.float32)

    h = mm(x, p["w1"])
    h = jax.nn.relu(bn(h, p["b1"], p["g1"], p["be1"], p["m1"], p["v1"]))
    h = jax.lax.conv_general_dilated(
        h.astype(jnp.bfloat16), p["w2"].astype(jnp.bfloat16),
        window_strides=(1, 1), padding="SAME",
        dimension_numbers=("NHWC", "HWIO", "NHWC"),
        preferred_element_type=jnp.float32)
    h = jax.nn.relu(bn(h, p["b2"], p["g2"], p["be2"], p["m2"], p["v2"]))
    h = mm(h, p["w3"])
    h = jax.nn.relu(bn(h, p["b3"], p["g3"], p["be3"], p["m3"], p["v3"]))
    return jax.nn.relu(h + x)


# --------------------------------- main ----------------------------------------

if __name__ == "__main__":
    N, H, W = 2, 16, 16
    out_channels = 4
    expansion = 32
    Cout = out_channels * expansion          # 128
    Cin = Cout                               # identity_downsample=None => equal

    key = jax.random.PRNGKey(0)
    ks = jax.random.split(key, 20)

    def nrm(k, shape, scale=0.1):
        return scale * jax.random.normal(k, shape, jnp.float32)

    params = {
        # conv1 (1x1): stored as (Cin, C1)
        "w1": nrm(ks[0], (Cin, out_channels)),
        "b1": nrm(ks[1], (out_channels,)),
        "g1": 1.0 + nrm(ks[2], (out_channels,)),
        "be1": nrm(ks[3], (out_channels,)),
        "m1": nrm(ks[4], (out_channels,)),
        "v1": jax.random.uniform(ks[5], (out_channels,), jnp.float32, 0.5, 1.5),
        # conv2 (3x3): HWIO
        "w2": nrm(ks[6], (3, 3, out_channels, out_channels)),
        "b2": nrm(ks[7], (out_channels,)),
        "g2": 1.0 + nrm(ks[8], (out_channels,)),
        "be2": nrm(ks[9], (out_channels,)),
        "m2": nrm(ks[10], (out_channels,)),
        "v2": jax.random.uniform(ks[11], (out_channels,), jnp.float32, 0.5, 1.5),
        # conv3 (1x1): (C1, Cout)
        "w3": nrm(ks[12], (out_channels, Cout)),
        "b3": nrm(ks[13], (Cout,)),
        "g3": 1.0 + nrm(ks[14], (Cout,)),
        "be3": nrm(ks[15], (Cout,)),
        "m3": nrm(ks[16], (Cout,)),
        "v3": jax.random.uniform(ks[17], (Cout,), jnp.float32, 0.5, 1.5),
    }

    # NHWC input (layout change for NCHW callers belongs in the producer).
    x = jax.random.normal(ks[19], (N, H, W, Cin), jnp.float32)

    fwd = jax.jit(block_forward)
    y = jax.block_until_ready(fwd(x, params))
    y_ref = jax.block_until_ready(block_reference(x, params))

    np.testing.assert_allclose(np.asarray(y), np.asarray(y_ref),
                               rtol=2e-2, atol=2e-2)
    print("KERNEL_OK")
</pallas_src>

<mosaic_0001>
module attributes {stable_mosaic.version = 11 : i64} {
  func.func @_fused_block_kernel(%arg0: i32, %arg1: i32, %arg2: memref<1x16x16x128xf32, #tpu.memory_space<vmem>>, %arg3: memref<1x1x16x128xf32, #tpu.memory_space<vmem>>, %arg4: memref<1x1x16x128xf32, #tpu.memory_space<vmem>>, %arg5: memref<128x128xbf16, #tpu.memory_space<vmem>>, %arg6: memref<1x1x128xf32, #tpu.memory_space<vmem>>, %arg7: memref<1x1x128xf32, #tpu.memory_space<vmem>>, %arg8: memref<9x128x128xbf16, #tpu.memory_space<vmem>>, %arg9: memref<1x1x128xf32, #tpu.memory_space<vmem>>, %arg10: memref<1x1x128xf32, #tpu.memory_space<vmem>>, %arg11: memref<128x128xbf16, #tpu.memory_space<vmem>>, %arg12: memref<1x1x128xf32, #tpu.memory_space<vmem>>, %arg13: memref<1x1x128xf32, #tpu.memory_space<vmem>>, %arg14: memref<1x16x16x128xf32, #tpu.memory_space<vmem>>, %arg15: memref<18x18x128xf32, #tpu.memory_space<vmem>>) attributes {dimension_semantics = [#tpu.dimension_semantics<parallel>, #tpu.dimension_semantics<parallel>], iteration_bounds = array<i64: 2, 1>, scalar_prefetch = 0 : i64, scratch_operands = 1 : i64, tpu.core_type = #tpu.core_type<tc>, window_params = [{transform_indices = @transform_0, window_bounds = array<i64: 1, 16, 16, 128>}, {transform_indices = @transform_1, window_bounds = array<i64: 1, 1, 16, 128>}, {transform_indices = @transform_2, window_bounds = array<i64: 1, 1, 16, 128>}, {pipeline_mode = #tpu.pipeline_mode<synchronous>, transform_indices = @transform_3, window_bounds = array<i64: 128, 128>}, {pipeline_mode = #tpu.pipeline_mode<synchronous>, transform_indices = @transform_4, window_bounds = array<i64: 1, 1, 128>}, {pipeline_mode = #tpu.pipeline_mode<synchronous>, transform_indices = @transform_5, window_bounds = array<i64: 1, 1, 128>}, {pipeline_mode = #tpu.pipeline_mode<synchronous>, transform_indices = @transform_6, window_bounds = array<i64: 9, 128, 128>}, {pipeline_mode = #tpu.pipeline_mode<synchronous>, transform_indices = @transform_7, window_bounds = array<i64: 1, 1, 128>}, {pipeline_mode = #tpu.pipeline_mode<synchronous>, transform_indices = @transform_8, window_bounds = array<i64: 1, 1, 128>}, {pipeline_mode = #tpu.pipeline_mode<synchronous>, transform_indices = @transform_9, window_bounds = array<i64: 128, 128>}, {pipeline_mode = #tpu.pipeline_mode<synchronous>, transform_indices = @transform_10, window_bounds = array<i64: 1, 1, 128>}, {pipeline_mode = #tpu.pipeline_mode<synchronous>, transform_indices = @transform_11, window_bounds = array<i64: 1, 1, 128>}, {transform_indices = @transform_12, window_bounds = array<i64: 1, 16, 16, 128>}]} {
    %cst = arith.constant 0.000000e+00 : f32
    %0 = vector.broadcast %cst : f32 to vector<18x1x128xf32>
    %c0 = arith.constant 0 : index
    %c0_0 = arith.constant 0 : index
    %c0_1 = arith.constant 0 : index
    %1 = vector.load %arg15[%c0, %c0_0, %c0_1] : memref<18x18x128xf32, #tpu.memory_space<vmem>>, vector<18x1x128xf32>
    tpu.vector_store %arg15[%c0, %c0_0, %c0_1], %0 {strides = array<i32>} : memref<18x18x128xf32, #tpu.memory_space<vmem>>, vector<18x1x128xf32>,
    %c0_2 = arith.constant 0 : index
    %c17 = arith.constant 17 : index
    %c0_3 = arith.constant 0 : index
    %2 = vector.load %arg15[%c0_2, %c17, %c0_3] : memref<18x18x128xf32, #tpu.memory_space<vmem>>, vector<18x1x128xf32>
    tpu.vector_store %arg15[%c0_2, %c17, %c0_3], %0 {strides = array<i32>} : memref<18x18x128xf32, #tpu.memory_space<vmem>>, vector<18x1x128xf32>,
    %c0_4 = arith.constant 0 : index
    %c0_5 = arith.constant 0 : index
    %c0_6 = arith.constant 0 : index
    %c0_7 = arith.constant 0 : index
    %3 = vector.load %arg2[%c0_4, %c0_5, %c0_6, %c0_7] : memref<1x16x16x128xf32, #tpu.memory_space<vmem>>, vector<1x16x16x128xf32>
    %4 = vector.shape_cast %3 : vector<1x16x16x128xf32> to vector<16x16x128xf32>
    %5 = arith.truncf %4 : vector<16x16x128xf32> to vector<16x16x128xbf16>
    %c0_8 = arith.constant 0 : index
    %c0_9 = arith.constant 0 : index
    %6 = vector.load %arg5[%c0_8, %c0_9] : memref<128x128xbf16, #tpu.memory_space<vmem>>, vector<128x128xbf16>
    %cst_10 = arith.constant dense<0.000000e+00> : vector<16x16x128xf32>
    %7 = tpu.matmul %5, %6, %cst_10 {dimension_numbers = #tpu.dot_dimension_numbers<[2], [0], [0, 1], [1], [0, 0, 0, 1, 1, 1], [], []>} : vector<16x16x128xbf16>, vector<128x128xbf16>, vector<16x16x128xf32> -> vector<16x16x128xf32>
    %c0_11 = arith.constant 0 : index
    %c0_12 = arith.constant 0 : index
    %c0_13 = arith.constant 0 : index
    %8 = vector.load %arg6[%c0_11, %c0_12, %c0_13] : memref<1x1x128xf32, #tpu.memory_space<vmem>>, vector<1x1x128xf32>
    %9 = vector.broadcast %8 : vector<1x1x128xf32> to vector<16x16x128xf32>
    %10 = arith.mulf %7, %9 : vector<16x16x128xf32>
    %c0_14 = arith.constant 0 : index
    %c0_15 = arith.constant 0 : index
    %c0_16 = arith.constant 0 : index
    %11 = vector.load %arg7[%c0_14, %c0_15, %c0_16] : memref<1x1x128xf32, #tpu.memory_space<vmem>>, vector<1x1x128xf32>
    %12 = vector.broadcast %11 : vector<1x1x128xf32> to vector<16x16x128xf32>
    %13 = arith.addf %10, %12 : vector<16x16x128xf32>
    %cst_17 = arith.constant 0.000000e+00 : f32
    %14 = vector.broadcast %cst_17 : f32 to vector<16x16x128xf32>
    %15 = arith.maximumf %13, %14 : vector<16x16x128xf32>
    %c1 = arith.constant 1 : index
    %c1_18 = arith.constant 1 : index
    %c0_19 = arith.constant 0 : index
    %16 = vector.load %arg15[%c1, %c1_18, %c0_19] : memref<18x18x128xf32, #tpu.memory_space<vmem>>, vector<16x16x128xf32>
    tpu.vector_store %arg15[%c1, %c1_18, %c0_19], %15 {strides = array<i32>} : memref<18x18x128xf32, #tpu.memory_space<vmem>>, vector<16x16x128xf32>,
    %c0_i32 = arith.constant 0 : i32
    %17 = arith.cmpi sgt, %arg1, %c0_i32 : i32
    %18 = arith.extui %17 : i1 to i32
    %19 = arith.sitofp %18 : i32 to f32
    %c0_i32_20 = arith.constant 0 : i32
    %20 = arith.cmpi slt, %arg1, %c0_i32_20 : i32
    %21 = arith.extui %20 : i1 to i32
    %22 = arith.sitofp %21 : i32 to f32
    %c0_21 = arith.constant 0 : index
    %c0_22 = arith.constant 0 : index
    %c0_23 = arith.constant 0 : index
    %c0_24 = arith.constant 0 : index
    %23 = vector.load %arg3[%c0_21, %c0_22, %c0_23, %c0_24] : memref<1x1x16x128xf32, #tpu.memory_space<vmem>>, vector<1x1x16x128xf32>
    %24 = vector.shape_cast %23 : vector<1x1x16x128xf32> to vector<1x16x128xf32>
    %25 = arith.truncf %24 : vector<1x16x128xf32> to vector<1x16x128xbf16>
    %c0_25 = arith.constant 0 : index
    %c0_26 = arith.constant 0 : index
    %26 = vector.load %arg5[%c0_25, %c0_26] : memref<128x128xbf16, #tpu.memory_space<vmem>>, vector<128x128xbf16>
    %cst_27 = arith.constant dense<0.000000e+00> : vector<1x16x128xf32>
    %27 = tpu.matmul %25, %26, %cst_27 {dimension_numbers = #tpu.dot_dimension_numbers<[2], [0], [0, 1], [1], [0, 0, 0, 1, 1, 1], [], []>} : vector<1x16x128xbf16>, vector<128x128xbf16>, vector<1x16x128xf32> -> vector<1x16x128xf32>
    %c0_28 = arith.constant 0 : index
    %c0_29 = arith.constant 0 : index
    %c0_30 = arith.constant 0 : index
    %28 = vector.load %arg6[%c0_28, %c0_29, %c0_30] : memref<1x1x128xf32, #tpu.memory_space<vmem>>, vector<1x1x128xf32>
    %29 = vector.broadcast %28 : vector<1x1x128xf32> to vector<1x16x128xf32>
    %30 = arith.mulf %27, %29 : vector<1x16x128xf32>
    %c0_31 = arith.constant 0 : index
    %c0_32 = arith.constant 0 : index
    %c0_33 = arith.constant 0 : index
    %31 = vector.load %arg7[%c0_31, %c0_32, %c0_33] : memref<1x1x128xf32, #tpu.memory_space<vmem>>, vector<1x1x128xf32>
    %32 = vector.broadcast %31 : vector<1x1x128xf32> to vector<1x16x128xf32>
    %33 = arith.addf %30, %32 : vector<1x16x128xf32>
    %cst_34 = arith.constant 0.000000e+00 : f32
    %34 = vector.broadcast %cst_34 : f32 to vector<1x16x128xf32>
    %35 = arith.maximumf %33, %34 : vector<1x16x128xf32>
    %36 = vector.broadcast %19 : f32 to vector<1x16x128xf32>
    %37 = arith.mulf %35, %36 : vector<1x16x128xf32>
    %c0_35 = arith.constant 0 : index
    %c1_36 = arith.constant 1 : index
    %c0_37 = arith.constant 0 : index
    %38 = vector.load %arg15[%c0_35, %c1_36, %c0_37] : memref<18x18x128xf32, #tpu.memory_space<vmem>>, vector<1x16x128xf32>
    tpu.vector_store %arg15[%c0_35, %c1_36, %c0_37], %37 {strides = array<i32>} : memref<18x18x128xf32, #tpu.memory_space<vmem>>, vector<1x16x128xf32>,
    %c0_38 = arith.constant 0 : index
    %c0_39 = arith.constant 0 : index
    %c0_40 = arith.constant 0 : index
    %c0_41 = arith.constant 0 : index
    %39 = vector.load %arg4[%c0_38, %c0_39, %c0_40, %c0_41] : memref<1x1x16x128xf32, #tpu.memory_space<vmem>>, vector<1x1x16x128xf32>
    %40 = vector.shape_cast %39 : vector<1x1x16x128xf32> to vector<1x16x128xf32>
    %41 = arith.truncf %40 : vector<1x16x128xf32> to vector<1x16x128xbf16>
    %c0_42 = arith.constant 0 : index
    %c0_43 = arith.constant 0 : index
    %42 = vector.load %arg5[%c0_42, %c0_43] : memref<128x128xbf16, #tpu.memory_space<vmem>>, vector<128x128xbf16>
    %cst_44 = arith.constant dense<0.000000e+00> : vector<1x16x128xf32>
    %43 = tpu.matmul %41, %42, %cst_44 {dimension_numbers = #tpu.dot_dimension_numbers<[2], [0], [0, 1], [1], [0, 0, 0, 1, 1, 1], [], []>} : vector<1x16x128xbf16>, vector<128x128xbf16>, vector<1x16x128xf32> -> vector<1x16x128xf32>
    %c0_45 = arith.constant 0 : index
    %c0_46 = arith.constant 0 : index
    %c0_47 = arith.constant 0 : index
    %44 = vector.load %arg6[%c0_45, %c0_46, %c0_47] : memref<1x1x128xf32, #tpu.memory_space<vmem>>, vector<1x1x128xf32>
    %45 = vector.broadcast %44 : vector<1x1x128xf32> to vector<1x16x128xf32>
    %46 = arith.mulf %43, %45 : vector<1x16x128xf32>
    %c0_48 = arith.constant 0 : index
    %c0_49 = arith.constant 0 : index
    %c0_50 = arith.constant 0 : index
    %47 = vector.load %arg7[%c0_48, %c0_49, %c0_50] : memref<1x1x128xf32, #tpu.memory_space<vmem>>, vector<1x1x128xf32>
    %48 = vector.broadcast %47 : vector<1x1x128xf32> to vector<1x16x128xf32>
    %49 = arith.addf %46, %48 : vector<1x16x128xf32>
    %cst_51 = arith.constant 0.000000e+00 : f32
    %50 = vector.broadcast %cst_51 : f32 to vector<1x16x128xf32>
    %51 = arith.maximumf %49, %50 : vector<1x16x128xf32>
    %52 = vector.broadcast %22 : f32 to vector<1x16x128xf32>
    %53 = arith.mulf %51, %52 : vector<1x16x128xf32>
    %c17_52 = arith.constant 17 : index
    %c1_53 = arith.constant 1 : index
    %c0_54 = arith.constant 0 : index
    %54 = vector.load %arg15[%c17_52, %c1_53, %c0_54] : memref<18x18x128xf32, #tpu.memory_space<vmem>>, vector<1x16x128xf32>
    tpu.vector_store %arg15[%c17_52, %c1_53, %c0_54], %53 {strides = array<i32>} : memref<18x18x128xf32, #tpu.memory_space<vmem>>, vector<1x16x128xf32>,
    %c0_55 = arith.constant 0 : index
    %c0_56 = arith.constant 0 : index
    %c0_57 = arith.constant 0 : index
    %55 = vector.load %arg15[%c0_55, %c0_56, %c0_57] : memref<18x18x128xf32, #tpu.memory_space<vmem>>, vector<16x16x128xf32>
    %56 = arith.truncf %55 : vector<16x16x128xf32> to vector<16x16x128xbf16>
    %c0_58 = arith.constant 0 : index
    %c0_59 = arith.constant 0 : index
    %c0_60 = arith.constant 0 : index
    %57 = vector.load %arg8[%c0_58, %c0_59, %c0_60] : memref<9x128x128xbf16, #tpu.memory_space<vmem>>, vector<1x128x128xbf16>
    %58 = vector.shape_cast %57 : vector<1x128x128xbf16> to vector<128x128xbf16>
    %cst_61 = arith.constant dense<0.000000e+00> : vector<16x16x128xf32>
    %59 = tpu.matmul %56, %58, %cst_61 {dimension_numbers = #tpu.dot_dimension_numbers<[2], [0], [0, 1], [1], [0, 0, 0, 1, 1, 1], [], []>} : vector<16x16x128xbf16>, vector<128x128xbf16>, vector<16x16x128xf32> -> vector<16x16x128xf32>
    %c0_62 = arith.constant 0 : index
    %c1_63 = arith.constant 1 : index
    %c0_64 = arith.constant 0 : index
    %60 = vector.load %arg15[%c0_62, %c1_63, %c0_64] : memref<18x18x128xf32, #tpu.memory_space<vmem>>, vector<16x16x128xf32>
    %61 = arith.truncf %60 : vector<16x16x128xf32> to vector<16x16x128xbf16>
    %c1_65 = arith.constant 1 : index
    %c0_66 = arith.constant 0 : index
    %c0_67 = arith.constant 0 : index
    %62 = vector.load %arg8[%c1_65, %c0_66, %c0_67] : memref<9x128x128xbf16, #tpu.memory_space<vmem>>, vector<1x128x128xbf16>
    %63 = vector.shape_cast %62 : vector<1x128x128xbf16> to vector<128x128xbf16>
    %cst_68 = arith.constant dense<0.000000e+00> : vector<16x16x128xf32>
    %64 = tpu.matmul %61, %63, %cst_68 {dimension_numbers = #tpu.dot_dimension_numbers<[2], [0], [0, 1], [1], [0, 0, 0, 1, 1, 1], [], []>} : vector<16x16x128xbf16>, vector<128x128xbf16>, vector<16x16x128xf32> -> vector<16x16x128xf32>
    %65 = arith.addf %59, %64 : vector<16x16x128xf32>
    %c0_69 = arith.constant 0 : index
    %c2 = arith.constant 2 : index
    %c0_70 = arith.constant 0 : index
    %66 = vector.load %arg15[%c0_69, %c2, %c0_70] : memref<18x18x128xf32, #tpu.memory_space<vmem>>, vector<16x16x128xf32>
    %67 = arith.truncf %66 : vector<16x16x128xf32> to vector<16x16x128xbf16>
    %c2_71 = arith.constant 2 : index
    %c0_72 = arith.constant 0 : index
    %c0_73 = arith.constant 0 : index
    %68 = vector.load %arg8[%c2_71, %c0_72, %c0_73] : memref<9x128x128xbf16, #tpu.memory_space<vmem>>, vector<1x128x128xbf16>
    %69 = vector.shape_cast %68 : vector<1x128x128xbf16> to vector<128x128xbf16>
    %cst_74 = arith.constant dense<0.000000e+00> : vector<16x16x128xf32>
    %70 = tpu.matmul %67, %69, %cst_74 {dimension_numbers = #tpu.dot_dimension_numbers<[2], [0], [0, 1], [1], [0, 0, 0, 1, 1, 1], [], []>} : vector<16x16x128xbf16>, vector<128x128xbf16>, vector<16x16x128xf32> -> vector<16x16x128xf32>
    %71 = arith.addf %65, %70 : vector<16x16x128xf32>
    %c1_75 = arith.constant 1 : index
    %c0_76 = arith.constant 0 : index
    %c0_77 = arith.constant 0 : index
    %72 = vector.load %arg15[%c1_75, %c0_76, %c0_77] : memref<18x18x128xf32, #tpu.memory_space<vmem>>, vector<16x16x128xf32>
    %73 = arith.truncf %72 : vector<16x16x128xf32> to vector<16x16x128xbf16>
    %c3 = arith.constant 3 : index
    %c0_78 = arith.constant 0 : index
    %c0_79 = arith.constant 0 : index
    %74 = vector.load %arg8[%c3, %c0_78, %c0_79] : memref<9x128x128xbf16, #tpu.memory_space<vmem>>, vector<1x128x128xbf16>
    %75 = vector.shape_cast %74 : vector<1x128x128xbf16> to vector<128x128xbf16>
    %cst_80 = arith.constant dense<0.000000e+00> : vector<16x16x128xf32>
    %76 = tpu.matmul %73, %75, %cst_80 {dimension_numbers = #tpu.dot_dimension_numbers<[2], [0], [0, 1], [1], [0, 0, 0, 1, 1, 1], [], []>} : vector<16x16x128xbf16>, vector<128x128xbf16>, vector<16x16x128xf32> -> vector<16x16x128xf32>
    %77 = arith.addf %71, %76 : vector<16x16x128xf32>
    %c1_81 = arith.constant 1 : index
    %c1_82 = arith.constant 1 : index
    %c0_83 = arith.constant 0 : index
    %78 = vector.load %arg15[%c1_81, %c1_82, %c0_83] : memref<18x18x128xf32, #tpu.memory_space<vmem>>, vector<16x16x128xf32>
    %79 = arith.truncf %78 : vector<16x16x128xf32> to vector<16x16x128xbf16>
    %c4 = arith.constant 4 : index
    %c0_84 = arith.constant 0 : index
    %c0_85 = arith.constant 0 : index
    %80 = vector.load %arg8[%c4, %c0_84, %c0_85] : memref<9x128x128xbf16, #tpu.memory_space<vmem>>, vector<1x128x128xbf16>
    %81 = vector.shape_cast %80 : vector<1x128x128xbf16> to vector<128x128xbf16>
    %cst_86 = arith.constant dense<0.000000e+00> : vector<16x16x128xf32>
    %82 = tpu.matmul %79, %81, %cst_86 {dimension_numbers = #tpu.dot_dimension_numbers<[2], [0], [0, 1], [1], [0, 0, 0, 1, 1, 1], [], []>} : vector<16x16x128xbf16>, vector<128x128xbf16>, vector<16x16x128xf32> -> vector<16x16x128xf32>
    %83 = arith.addf %77, %82 : vector<16x16x128xf32>
    %c1_87 = arith.constant 1 : index
    %c2_88 = arith.constant 2 : index
    %c0_89 = arith.constant 0 : index
    %84 = vector.load %arg15[%c1_87, %c2_88, %c0_89] : memref<18x18x128xf32, #tpu.memory_space<vmem>>, vector<16x16x128xf32>
    %85 = arith.truncf %84 : vector<16x16x128xf32> to vector<16x16x128xbf16>
    %c5 = arith.constant 5 : index
    %c0_90 = arith.constant 0 : index
    %c0_91 = arith.constant 0 : index
    %86 = vector.load %arg8[%c5, %c0_90, %c0_91] : memref<9x128x128xbf16, #tpu.memory_space<vmem>>, vector<1x128x128xbf16>
    %87 = vector.shape_cast %86 : vector<1x128x128xbf16> to vector<128x128xbf16>
    %cst_92 = arith.constant dense<0.000000e+00> : vector<16x16x128xf32>
    %88 = tpu.matmul %85, %87, %cst_92 {dimension_numbers = #tpu.dot_dimension_numbers<[2], [0], [0, 1], [1], [0, 0, 0, 1, 1, 1], [], []>} : vector<16x16x128xbf16>, vector<128x128xbf16>, vector<16x16x128xf32> -> vector<16x16x128xf32>
    %89 = arith.addf %83, %88 : vector<16x16x128xf32>
    %c2_93 = arith.constant 2 : index
    %c0_94 = arith.constant 0 : index
    %c0_95 = arith.constant 0 : index
    %90 = vector.load %arg15[%c2_93, %c0_94, %c0_95] : memref<18x18x128xf32, #tpu.memory_space<vmem>>, vector<16x16x128xf32>
    %91 = arith.truncf %90 : vector<16x16x128xf32> to vector<16x16x128xbf16>
    %c6 = arith.constant 6 : index
    %c0_96 = arith.constant 0 : index
    %c0_97 = arith.constant 0 : index
    %92 = vector.load %arg8[%c6, %c0_96, %c0_97] : memref<9x128x128xbf16, #tpu.memory_space<vmem>>, vector<1x128x128xbf16>
    %93 = vector.shape_cast %92 : vector<1x128x128xbf16> to vector<128x128xbf16>
    %cst_98 = arith.constant dense<0.000000e+00> : vector<16x16x128xf32>
    %94 = tpu.matmul %91, %93, %cst_98 {dimension_numbers = #tpu.dot_dimension_numbers<[2], [0], [0, 1], [1], [0, 0, 0, 1, 1, 1], [], []>} : vector<16x16x128xbf16>, vector<128x128xbf16>, vector<16x16x128xf32> -> vector<16x16x128xf32>
    %95 = arith.addf %89, %94 : vector<16x16x128xf32>
    %c2_99 = arith.constant 2 : index
    %c1_100 = arith.constant 1 : index
    %c0_101 = arith.constant 0 : index
    %96 = vector.load %arg15[%c2_99, %c1_100, %c0_101] : memref<18x18x128xf32, #tpu.memory_space<vmem>>, vector<16x16x128xf32>
    %97 = arith.truncf %96 : vector<16x16x128xf32> to vector<16x16x128xbf16>
    %c7 = arith.constant 7 : index
    %c0_102 = arith.constant 0 : index
    %c0_103 = arith.constant 0 : index
    %98 = vector.load %arg8[%c7, %c0_102, %c0_103] : memref<9x128x128xbf16, #tpu.memory_space<vmem>>, vector<1x128x128xbf16>
    %99 = vector.shape_cast %98 : vector<1x128x128xbf16> to vector<128x128xbf16>
    %cst_104 = arith.constant dense<0.000000e+00> : vector<16x16x128xf32>
    %100 = tpu.matmul %97, %99, %cst_104 {dimension_numbers = #tpu.dot_dimension_numbers<[2], [0], [0, 1], [1], [0, 0, 0, 1, 1, 1], [], []>} : vector<16x16x128xbf16>, vector<128x128xbf16>, vector<16x16x128xf32> -> vector<16x16x128xf32>
    %101 = arith.addf %95, %100 : vector<16x16x128xf32>
    %c2_105 = arith.constant 2 : index
    %c2_106 = arith.constant 2 : index
    %c0_107 = arith.constant 0 : index
    %102 = vector.load %arg15[%c2_105, %c2_106, %c0_107] : memref<18x18x128xf32, #tpu.memory_space<vmem>>, vector<16x16x128xf32>
    %103 = arith.truncf %102 : vector<16x16x128xf32> to vector<16x16x128xbf16>
    %c8 = arith.constant 8 : index
    %c0_108 = arith.constant 0 : index
    %c0_109 = arith.constant 0 : index
    %104 = vector.load %arg8[%c8, %c0_108, %c0_109] : memref<9x128x128xbf16, #tpu.memory_space<vmem>>, vector<1x128x128xbf16>
    %105 = vector.shape_cast %104 : vector<1x128x128xbf16> to vector<128x128xbf16>
    %cst_110 = arith.constant dense<0.000000e+00> : vector<16x16x128xf32>
    %106 = tpu.matmul %103, %105, %cst_110 {dimension_numbers = #tpu.dot_dimension_numbers<[2], [0], [0, 1], [1], [0, 0, 0, 1, 1, 1], [], []>} : vector<16x16x128xbf16>, vector<128x128xbf16>, vector<16x16x128xf32> -> vector<16x16x128xf32>
    %107 = arith.addf %101, %106 : vector<16x16x128xf32>
    %c0_111 = arith.constant 0 : index
    %c0_112 = arith.constant 0 : index
    %c0_113 = arith.constant 0 : index
    %108 = vector.load %arg9[%c0_111, %c0_112, %c0_113] : memref<1x1x128xf32, #tpu.memory_space<vmem>>, vector<1x1x128xf32>
    %109 = vector.broadcast %108 : vector<1x1x128xf32> to vector<16x16x128xf32>
    %110 = arith.mulf %107, %109 : vector<16x16x128xf32>
    %c0_114 = arith.constant 0 : index
    %c0_115 = arith.constant 0 : index
    %c0_116 = arith.constant 0 : index
    %111 = vector.load %arg10[%c0_114, %c0_115, %c0_116] : memref<1x1x128xf32, #tpu.memory_space<vmem>>, vector<1x1x128xf32>
    %112 = vector.broadcast %111 : vector<1x1x128xf32> to vector<16x16x128xf32>
    %113 = arith.addf %110, %112 : vector<16x16x128xf32>
    %cst_117 = arith.constant 0.000000e+00 : f32
    %114 = vector.broadcast %cst_117 : f32 to vector<16x16x128xf32>
    %115 = arith.maximumf %113, %114 : vector<16x16x128xf32>
    %116 = arith.truncf %115 : vector<16x16x128xf32> to vector<16x16x128xbf16>
    %c0_118 = arith.constant 0 : index
    %c0_119 = arith.constant 0 : index
    %117 = vector.load %arg11[%c0_118, %c0_119] : memref<128x128xbf16, #tpu.memory_space<vmem>>, vector<128x128xbf16>
    %cst_120 = arith.constant dense<0.000000e+00> : vector<16x16x128xf32>
    %118 = tpu.matmul %116, %117, %cst_120 {dimension_numbers = #tpu.dot_dimension_numbers<[2], [0], [0, 1], [1], [0, 0, 0, 1, 1, 1], [], []>} : vector<16x16x128xbf16>, vector<128x128xbf16>, vector<16x16x128xf32> -> vector<16x16x128xf32>
    %c0_121 = arith.constant 0 : index
    %c0_122 = arith.constant 0 : index
    %c0_123 = arith.constant 0 : index
    %119 = vector.load %arg12[%c0_121, %c0_122, %c0_123] : memref<1x1x128xf32, #tpu.memory_space<vmem>>, vector<1x1x128xf32>
    %120 = vector.broadcast %119 : vector<1x1x128xf32> to vector<16x16x128xf32>
    %121 = arith.mulf %118, %120 : vector<16x16x128xf32>
    %c0_124 = arith.constant 0 : index
    %c0_125 = arith.constant 0 : index
    %c0_126 = arith.constant 0 : index
    %122 = vector.load %arg13[%c0_124, %c0_125, %c0_126] : memref<1x1x128xf32, #tpu.memory_space<vmem>>, vector<1x1x128xf32>
    %123 = vector.broadcast %122 : vector<1x1x128xf32> to vector<16x16x128xf32>
    %124 = arith.addf %121, %123 : vector<16x16x128xf32>
    %cst_127 = arith.constant 0.000000e+00 : f32
    %125 = vector.broadcast %cst_127 : f32 to vector<16x16x128xf32>
    %126 = arith.maximumf %124, %125 : vector<16x16x128xf32>
    %c0_128 = arith.constant 0 : index
    %c0_129 = arith.constant 0 : index
    %c0_130 = arith.constant 0 : index
    %c0_131 = arith.constant 0 : index
    %127 = vector.load %arg2[%c0_128, %c0_129, %c0_130, %c0_131] : memref<1x16x16x128xf32, #tpu.memory_space<vmem>>, vector<1x16x16x128xf32>
    %128 = vector.shape_cast %127 : vector<1x16x16x128xf32> to vector<16x16x128xf32>
    %129 = arith.addf %126, %128 : vector<16x16x128xf32>
    %cst_132 = arith.constant 0.000000e+00 : f32
    %130 = vector.broadcast %cst_132 : f32 to vector<16x16x128xf32>
    %131 = arith.maximumf %129, %130 : vector<16x16x128xf32>
    %c0_133 = arith.constant 0 : index
    %c0_134 = arith.constant 0 : index
    %c0_135 = arith.constant 0 : index
    %c0_136 = arith.constant 0 : index
    %132 = vector.load %arg14[%c0_133, %c0_134, %c0_135, %c0_136] : memref<1x16x16x128xf32, #tpu.memory_space<vmem>>, vector<1x16x16x128xf32>
    %133 = vector.shape_cast %132 : vector<1x16x16x128xf32> to vector<16x16x128xf32>
    %134 = vector.shape_cast %131 : vector<16x16x128xf32> to vector<1x16x16x128xf32>
    tpu.vector_store %arg14[%c0_133, %c0_134, %c0_135, %c0_136], %134 {strides = array<i32>} : memref<1x16x16x128xf32, #tpu.memory_space<vmem>>, vector<1x16x16x128xf32>,
    return
  }
  func.func @transform_0(%arg0: i32, %arg1: i32) -> (i32, i32, i32, i32) {
    %c0_i32 = arith.constant 0 : i32
    %c0_i32_0 = arith.constant 0 : i32
    %c0_i32_1 = arith.constant 0 : i32
    return %arg0, %arg1, %c0_i32, %c0_i32_0 : i32, i32, i32, i32
  }
  func.func @transform_1(%arg0: i32, %arg1: i32) -> (i32, i32, i32, i32) {
    %c16_i32 = arith.constant 16 : i32
    %0 = arith.muli %arg1, %c16_i32 : i32
    %c1_i32 = arith.constant 1 : i32
    %1 = arith.subi %0, %c1_i32 : i32
    %c0_i32 = arith.constant 0 : i32
    %2 = arith.maxsi %1, %c0_i32 : i32
    %c0_i32_0 = arith.constant 0 : i32
    %c0_i32_1 = arith.constant 0 : i32
    %c0_i32_2 = arith.constant 0 : i32
    return %arg0, %2, %c0_i32_0, %c0_i32_1 : i32, i32, i32, i32
  }
  func.func @transform_2(%arg0: i32, %arg1: i32) -> (i32, i32, i32, i32) {
    %c1_i32 = arith.constant 1 : i32
    %0 = arith.addi %arg1, %c1_i32 : i32
    %c16_i32 = arith.constant 16 : i32
    %1 = arith.muli %0, %c16_i32 : i32
    %c15_i32 = arith.constant 15 : i32
    %2 = arith.minsi %1, %c15_i32 : i32
    %c0_i32 = arith.constant 0 : i32
    %c0_i32_0 = arith.constant 0 : i32
    %c0_i32_1 = arith.constant 0 : i32
    return %arg0, %2, %c0_i32, %c0_i32_0 : i32, i32, i32, i32
  }
  func.func @transform_3(%arg0: i32, %arg1: i32) -> (i32, i32) {
    %c0_i32 = arith.constant 0 : i32
    %c0_i32_0 = arith.constant 0 : i32
    %c0_i32_1 = arith.constant 0 : i32
    return %c0_i32, %c0_i32_0 : i32, i32
  }
  func.func @transform_4(%arg0: i32, %arg1: i32) -> (i32, i32, i32) {
    %c0_i32 = arith.constant 0 : i32
    %c0_i32_0 = arith.constant 0 : i32
    %c0_i32_1 = arith.constant 0 : i32
    %c0_i32_2 = arith.constant 0 : i32
    return %c0_i32, %c0_i32_0, %c0_i32_1 : i32, i32, i32
  }
  func.func @transform_5(%arg0: i32, %arg1: i32) -> (i32, i32, i32) {
    %c0_i32 = arith.constant 0 : i32
    %c0_i32_0 = arith.constant 0 : i32
    %c0_i32_1 = arith.constant 0 : i32
    %c0_i32_2 = arith.constant 0 : i32
    return %c0_i32, %c0_i32_0, %c0_i32_1 : i32, i32, i32
  }
  func.func @transform_6(%arg0: i32, %arg1: i32) -> (i32, i32, i32) {
    %c0_i32 = arith.constant 0 : i32
    %c0_i32_0 = arith.constant 0 : i32
    %c0_i32_1 = arith.constant 0 : i32
    %c0_i32_2 = arith.constant 0 : i32
    return %c0_i32, %c0_i32_0, %c0_i32_1 : i32, i32, i32
  }
  func.func @transform_7(%arg0: i32, %arg1: i32) -> (i32, i32, i32) {
    %c0_i32 = arith.constant 0 : i32
    %c0_i32_0 = arith.constant 0 : i32
    %c0_i32_1 = arith.constant 0 : i32
    %c0_i32_2 = arith.constant 0 : i32
    return %c0_i32, %c0_i32_0, %c0_i32_1 : i32, i32, i32
  }
  func.func @transform_8(%arg0: i32, %arg1: i32) -> (i32, i32, i32) {
    %c0_i32 = arith.constant 0 : i32
    %c0_i32_0 = arith.constant 0 : i32
    %c0_i32_1 = arith.constant 0 : i32
    %c0_i32_2 = arith.constant 0 : i32
    return %c0_i32, %c0_i32_0, %c0_i32_1 : i32, i32, i32
  }
  func.func @transform_9(%arg0: i32, %arg1: i32) -> (i32, i32) {
    %c0_i32 = arith.constant 0 : i32
    %c0_i32_0 = arith.constant 0 : i32
    %c0_i32_1 = arith.constant 0 : i32
    return %c0_i32, %c0_i32_0 : i32, i32
  }
  func.func @transform_10(%arg0: i32, %arg1: i32) -> (i32, i32, i32) {
    %c0_i32 = arith.constant 0 : i32
    %c0_i32_0 = arith.constant 0 : i32
    %c0_i32_1 = arith.constant 0 : i32
    %c0_i32_2 = arith.constant 0 : i32
    return %c0_i32, %c0_i32_0, %c0_i32_1 : i32, i32, i32
  }
  func.func @transform_11(%arg0: i32, %arg1: i32) -> (i32, i32, i32) {
    %c0_i32 = arith.constant 0 : i32
    %c0_i32_0 = arith.constant 0 : i32
    %c0_i32_1 = arith.constant 0 : i32
    %c0_i32_2 = arith.constant 0 : i32
    return %c0_i32, %c0_i32_0, %c0_i32_1 : i32, i32, i32
  }
  func.func @transform_12(%arg0: i32, %arg1: i32) -> (i32, i32, i32, i32) {
    %c0_i32 = arith.constant 0 : i32
    %c0_i32_0 = arith.constant 0 : i32
    %c0_i32_1 = arith.constant 0 : i32
    return %arg0, %arg1, %c0_i32, %c0_i32_0 : i32, i32, i32, i32
  }
}

</mosaic_0001>

<llo_original>
// kernel: block_forward.1
$region0: #{block_forward.1}
  #allocation0 [shape = 'u32[]', space=smem, size = 0x4, offset = 0x4, fixed_abs, tag = 'smem constant byte address 0x4 - core index']
  #allocation1 [shape = 'u32[144,128]{1,0:T(1,128)}', space=vmem, size = 0x12000, scoped, tag = 'internal scratch']
  #allocation2 [shape = 'f32[18,18,128]{2,1,0:T(8,128)}', space=vmem, size = 0x36000, scoped, tag = 'scratch operand']
  %s0 = inlined_call_operand.vmem [shape: f32[2,16,16,128], index: 0, kind: input, shape index: {}, may-alias: {0,1,2}]
  %s1 = inlined_call_operand.vmem [shape: f32[2,16,16,128], index: 1, kind: input, shape index: {}, may-alias: {0,1,2}]
  %s2 = inlined_call_operand.vmem [shape: f32[2,16,16,128], index: 2, kind: input, shape index: {}, may-alias: {0,1,2}]
  %s3 = inlined_call_operand.vmem [shape: bf16[128,128], index: 3, kind: input, shape index: {}]
  %s4 = inlined_call_operand.vmem [shape: f32[1,1,128], index: 4, kind: input, shape index: {}]
  %s5 = inlined_call_operand.vmem [shape: f32[1,1,128], index: 5, kind: input, shape index: {}]
  %s6 = inlined_call_operand.vmem [shape: bf16[9,128,128], index: 6, kind: input, shape index: {}]
  %s7 = inlined_call_operand.vmem [shape: f32[1,1,128], index: 7, kind: input, shape index: {}]
  %s8 = inlined_call_operand.vmem [shape: f32[1,1,128], index: 8, kind: input, shape index: {}]
  %s9 = inlined_call_operand.vmem [shape: bf16[128,128], index: 9, kind: input, shape index: {}]
  %s10 = inlined_call_operand.vmem [shape: f32[1,1,128], index: 10, kind: input, shape index: {}]
  %s11 = inlined_call_operand.vmem [shape: f32[1,1,128], index: 11, kind: input, shape index: {}]
  %s12 = inlined_call_operand.hbm [shape: f32[2,16,16,128], index: 12, kind: output, shape index: {}]
  %s13 = sld [smem:[#allocation0]]
  $region81: #{block_forward.1} parent=0
    _
  %s15 = ssub.s32 1, %s13
  %s16 = scalar_select 0, %s15, %s13
  $region1: #{block_forward.1} parent=0
    #allocation3 [shape = 'u8[262144]{0}', space=vmem, size = 0x40000, scoped, tag = 'output window, operand 0']
    #allocation4 [shape = 's32[2]{0}', space=sflag, size = 0x8, scoped, tag = 'scoped memory for block_forward.1']
    %17 = vsyncpa [#allocation4], 0
    %s18 = scalar_lea.sflag [#allocation4], 1
    %19 = vsyncpa %s18, 0
    loop: start=0, step=1, limit=4
    $region2: #{block_forward.1} parent=1 // loop_pre_header
      _
    $region3: #{block_forward.1} parent=1 // loop_header
      %s21 = sphi 0, %s25
      %p22 = scmp.ge.s32.totalorder %s21, 4
      %s28 = sphi 0, %s40
      %s29 = sphi 0, %s36
      %s30 = sphi 0, %s28
      %s31 = sphi 0, %s29
      %s32 = sphi 0, %s30
      %s33 = sphi 0, %s31
      %s45 = sphi 0, %s47
      %s48 = sphi 0, %s45
      %s49 = sphi 0, %s48
      %s65 = sphi 0, %s49
      %s81 = sphi 0, %s83
      %s84 = sphi 0, %s81
      %s85 = sphi 0, %s84
      %s101 = sphi 0, %s85
      %s117 = sphi 0, %s119
      %s120 = sphi 0, %s117
      %s121 = sphi 0, %s120
      %s137 = sphi 0, %s121
      %s141 = sphi 0, %s141
      %s143 = sphi 0, %s141
      %s144 = sphi 0, %s143
      %s158 = sphi 0, %s144
      %s162 = sphi 0, %s162
      %s164 = sphi 0, %s162
      %s165 = sphi 0, %s164
      %s179 = sphi 0, %s165
      %s183 = sphi 0, %s183
      %s185 = sphi 0, %s183
      %s186 = sphi 0, %s185
      %s200 = sphi 0, %s186
      %s204 = sphi 0, %s204
      %s206 = sphi 0, %s204
      %s207 = sphi 0, %s206
      %s221 = sphi 0, %s207
      %s225 = sphi 0, %s225
      %s227 = sphi 0, %s225
      %s228 = sphi 0, %s227
      %s242 = sphi 0, %s228
      %s246 = sphi 0, %s246
      %s248 = sphi 0, %s246
      %s249 = sphi 0, %s248
      %s263 = sphi 0, %s249
      %s267 = sphi 0, %s267
      %s269 = sphi 0, %s267
      %s270 = sphi 0, %s269
      %s284 = sphi 0, %s270
      %s288 = sphi 0, %s288
      %s290 = sphi 0, %s288
      %s291 = sphi 0, %s290
      %s305 = sphi 0, %s291
      %s309 = sphi 0, %s309
      %s311 = sphi 0, %s309
      %s312 = sphi 0, %s311
      %s326 = sphi 0, %s312
      %s334 = sphi 0, %s336
      %s337 = sphi 0, %s334
      %s338 = sphi 0, %s337
      %s354 = sphi 0, %s338
    $region4: #{block_forward.1} parent=1 // loop_header_branch
      %24 = sbr.rel (%p22) target = $region8
    $region5: #{block_forward.1} parent=1 // loop_body
      %s26 = ssub.s32 %s21, 1
      %s27 = ssub.s32 %s21, 2
      %s34 = sadd.s32 1, %s29
      %p35 = scmp.ge.s32.totalorder %s34, 1
      %s36 = scalar_select %p35, 0, %s34
      %s37 = sadd.s32 1, %s28
      %s38 = scalar_select %p35, %s37, %s28
      %p39 = scmp.ge.s32.totalorder %s38, 2
      %s40 = scalar_select %p39, 0, %s38
      %s41 = ssub.s32 %s28, %s40
      %s42 = ssub.s32 %s29, %s36
      %s43 = sor.u32 %s41, %s42
      %p44 = scmp.eq.s32.totalorder %s43, 0
      %s46 = sadd.s32 %s45, 1
      %s47 = scalar_select %p44, %s45, %s46
      %p50 = pneg %p44
      %p51 = scmp.eq.s32.totalorder %s21, 1
      %p52 = por %p50, %p51
      %p53 = scmp.ne.s32.totalorder %s45, %s48
      %p54 = scmp.eq.s32.totalorder %s21, 0
      %p55 = por %p53, %p54
      %p56 = scmp.ne.s32.totalorder %s45, %s48
      %p57 = scmp.eq.s32.totalorder %s26, 1
      %p58 = por %p56, %p57
      %p59 = scmp.ne.s32.totalorder %s48, %s49
      %p60 = scmp.eq.s32.totalorder %s26, 0
      %p61 = por %p59, %p60
      %p62 = scmp.ne.s32.totalorder %s48, %s49
      %p63 = scmp.eq.s32.totalorder %s27, 1
      %p64 = por %p62, %p63
      %p66 = scmp.ne.s32.totalorder %s49, %s65
      %p67 = scmp.eq.s32.totalorder %s27, 0
      %p68 = por %p66, %p67
      %s69 = smul.u32 %s29, 16
      %s70 = ssub.s32 %s69, 1
      %p71 = scmp.gt.s32.totalorder %s70, 0
      %s72 = scalar_select %p71, %s70, 0
      %s73 = smul.u32 %s36, 16
      %s74 = ssub.s32 %s73, 1
      %p75 = scmp.gt.s32.totalorder %s74, 0
      %s76 = scalar_select %p75, %s74, 0
      %s77 = ssub.s32 %s28, %s40
      %s78 = ssub.s32 %s72, %s76
      %s79 = sor.u32 %s77, %s78
      %p80 = scmp.eq.s32.totalorder %s79, 0
      %s82 = sadd.s32 %s81, 1
      %s83 = scalar_select %p80, %s81, %s82
      %p86 = pneg %p80
      %p87 = scmp.eq.s32.totalorder %s21, 1
      %p88 = por %p86, %p87
      %p89 = scmp.ne.s32.totalorder %s81, %s84
      %p90 = scmp.eq.s32.totalorder %s21, 0
      %p91 = por %p89, %p90
      %p92 = scmp.ne.s32.totalorder %s81, %s84
      %p93 = scmp.eq.s32.totalorder %s26, 1
      %p94 = por %p92, %p93
      %p95 = scmp.ne.s32.totalorder %s84, %s85
      %p96 = scmp.eq.s32.totalorder %s26, 0
      %p97 = por %p95, %p96
      %p98 = scmp.ne.s32.totalorder %s84, %s85
      %p99 = scmp.eq.s32.totalorder %s27, 1
      %p100 = por %p98, %p99
      %p102 = scmp.ne.s32.totalorder %s85, %s101
      %p103 = scmp.eq.s32.totalorder %s27, 0
      %p104 = por %p102, %p103
      %s105 = sadd.s32 %s29, 1
      %s106 = smul.u32 %s105, 16
      %p107 = scmp.lt.s32.totalorder %s106, 15
      %s108 = scalar_select %p107, %s106, 15
      %s109 = sadd.s32 %s36, 1
      %s110 = smul.u32 %s109, 16
      %p111 = scmp.lt.s32.totalorder %s110, 15
      %s112 = scalar_select %p111, %s110, 15
      %s113 = ssub.s32 %s28, %s40
      %s114 = ssub.s32 %s108, %s112
      %s115 = sor.u32 %s113, %s114
      %p116 = scmp.eq.s32.totalorder %s115, 0
      %s118 = sadd.s32 %s117, 1
      %s119 = scalar_select %p116, %s117, %s118
      %p122 = pneg %p116
      %p123 = scmp.eq.s32.totalorder %s21, 1
      %p124 = por %p122, %p123
      %p125 = scmp.ne.s32.totalorder %s117, %s120
      %p126 = scmp.eq.s32.totalorder %s21, 0
      %p127 = por %p125, %p126
      %p128 = scmp.ne.s32.totalorder %s117, %s120
      %p129 = scmp.eq.s32.totalorder %s26, 1
      %p130 = por %p128, %p129
      %p131 = scmp.ne.s32.totalorder %s120, %s121
      %p132 = scmp.eq.s32.totalorder %s26, 0
      %p133 = por %p131, %p132
      %p134 = scmp.ne.s32.totalorder %s120, %s121
      %p135 = scmp.eq.s32.totalorder %s27, 1
      %p136 = por %p134, %p135
      %p138 = scmp.ne.s32.totalorder %s121, %s137
      %p139 = scmp.eq.s32.totalorder %s27, 0
      %p140 = por %p138, %p139
      %s142 = sadd.s32 %s141, 1
      %p145 = scmp.eq.s32.totalorder %s21, 1
      %p146 = scmp.ne.s32.totalorder %s141, %s143
      %p147 = scmp.eq.s32.totalorder %s21, 0
      %p148 = por %p146, %p147
      %p149 = scmp.ne.s32.totalorder %s141, %s143
      %p150 = scmp.eq.s32.totalorder %s26, 1
      %p151 = por %p149, %p150
      %p152 = scmp.ne.s32.totalorder %s143, %s144
      %p153 = scmp.eq.s32.totalorder %s26, 0
      %p154 = por %p152, %p153
      %p155 = scmp.ne.s32.totalorder %s143, %s144
      %p156 = scmp.eq.s32.totalorder %s27, 1
      %p157 = por %p155, %p156
      %p159 = scmp.ne.s32.totalorder %s144, %s158
      %p160 = scmp.eq.s32.totalorder %s27, 0
      %p161 = por %p159, %p160
      %s163 = sadd.s32 %s162, 1
      %p166 = scmp.eq.s32.totalorder %s21, 1
      %p167 = scmp.ne.s32.totalorder %s162, %s164
      %p168 = scmp.eq.s32.totalorder %s21, 0
      %p169 = por %p167, %p168
      %p170 = scmp.ne.s32.totalorder %s162, %s164
      %p171 = scmp.eq.s32.totalorder %s26, 1
      %p172 = por %p170, %p171
      %p173 = scmp.ne.s32.totalorder %s164, %s165
      %p174 = scmp.eq.s32.totalorder %s26, 0
      %p175 = por %p173, %p174
      %p176 = scmp.ne.s32.totalorder %s164, %s165
      %p177 = scmp.eq.s32.totalorder %s27, 1
      %p178 = por %p176, %p177
      %p180 = scmp.ne.s32.totalorder %s165, %s179
      %p181 = scmp.eq.s32.totalorder %s27, 0
      %p182 = por %p180, %p181
      %s184 = sadd.s32 %s183, 1
      %p187 = scmp.eq.s32.totalorder %s21, 1
      %p188 = scmp.ne.s32.totalorder %s183, %s185
      %p189 = scmp.eq.s32.totalorder %s21, 0
      %p190 = por %p188, %p189
      %p191 = scmp.ne.s32.totalorder %s183, %s185
      %p192 = scmp.eq.s32.totalorder %s26, 1
      %p193 = por %p191, %p192
      %p194 = scmp.ne.s32.totalorder %s185, %s186
      %p195 = scmp.eq.s32.totalorder %s26, 0
      %p196 = por %p194, %p195
      %p197 = scmp.ne.s32.totalorder %s185, %s186
      %p198 = scmp.eq.s32.totalorder %s27, 1
      %p199 = por %p197, %p198
      %p201 = scmp.ne.s32.totalorder %s186, %s200
      %p202 = scmp.eq.s32.totalorder %s27, 0
      %p203 = por %p201, %p202
      %s205 = sadd.s32 %s204, 1
      %p208 = scmp.eq.s32.totalorder %s21, 1
      %p209 = scmp.ne.s32.totalorder %s204, %s206
      %p210 = scmp.eq.s32.totalorder %s21, 0
      %p211 = por %p209, %p210
      %p212 = scmp.ne.s32.totalorder %s204, %s206
      %p213 = scmp.eq.s32.totalorder %s26, 1
      %p214 = por %p212, %p213
      %p215 = scmp.ne.s32.totalorder %s206, %s207
      %p216 = scmp.eq.s32.totalorder %s26, 0
      %p217 = por %p215, %p216
      %p218 = scmp.ne.s32.totalorder %s206, %s207
      %p219 = scmp.eq.s32.totalorder %s27, 1
      %p220 = por %p218, %p219
      %p222 = scmp.ne.s32.totalorder %s207, %s221
      %p223 = scmp.eq.s32.totalorder %s27, 0
      %p224 = por %p222, %p223
      %s226 = sadd.s32 %s225, 1
      %p229 = scmp.eq.s32.totalorder %s21, 1
      %p230 = scmp.ne.s32.totalorder %s225, %s227
      %p231 = scmp.eq.s32.totalorder %s21, 0
      %p232 = por %p230, %p231
      %p233 = scmp.ne.s32.totalorder %s225, %s227
      %p234 = scmp.eq.s32.totalorder %s26, 1
      %p235 = por %p233, %p234
      %p236 = scmp.ne.s32.totalorder %s227, %s228
      %p237 = scmp.eq.s32.totalorder %s26, 0
      %p238 = por %p236, %p237
      %p239 = scmp.ne.s32.totalorder %s227, %s228
      %p240 = scmp.eq.s32.totalorder %s27, 1
      %p241 = por %p239, %p240
      %p243 = scmp.ne.s32.totalorder %s228, %s242
      %p244 = scmp.eq.s32.totalorder %s27, 0
      %p245 = por %p243, %p244
      %s247 = sadd.s32 %s246, 1
      %p250 = scmp.eq.s32.totalorder %s21, 1
      %p251 = scmp.ne.s32.totalorder %s246, %s248
      %p252 = scmp.eq.s32.totalorder %s21, 0
      %p253 = por %p251, %p252
      %p254 = scmp.ne.s32.totalorder %s246, %s248
      %p255 = scmp.eq.s32.totalorder %s26, 1
      %p256 = por %p254, %p255
      %p257 = scmp.ne.s32.totalorder %s248, %s249
      %p258 = scmp.eq.s32.totalorder %s26, 0
      %p259 = por %p257, %p258
      %p260 = scmp.ne.s32.totalorder %s248, %s249
      %p261 = scmp.eq.s32.totalorder %s27, 1
      %p262 = por %p260, %p261
      %p264 = scmp.ne.s32.totalorder %s249, %s263
      %p265 = scmp.eq.s32.totalorder %s27, 0
      %p266 = por %p264, %p265
      %s268 = sadd.s32 %s267, 1
      %p271 = scmp.eq.s32.totalorder %s21, 1
      %p272 = scmp.ne.s32.totalorder %s267, %s269
      %p273 = scmp.eq.s32.totalorder %s21, 0
      %p274 = por %p272, %p273
      %p275 = scmp.ne.s32.totalorder %s267, %s269
      %p276 = scmp.eq.s32.totalorder %s26, 1
      %p277 = por %p275, %p276
      %p278 = scmp.ne.s32.totalorder %s269, %s270
      %p279 = scmp.eq.s32.totalorder %s26, 0
      %p280 = por %p278, %p279
      %p281 = scmp.ne.s32.totalorder %s269, %s270
      %p282 = scmp.eq.s32.totalorder %s27, 1
      %p283 = por %p281, %p282
      %p285 = scmp.ne.s32.totalorder %s270, %s284
      %p286 = scmp.eq.s32.totalorder %s27, 0
      %p287 = por %p285, %p286
      %s289 = sadd.s32 %s288, 1
      %p292 = scmp.eq.s32.totalorder %s21, 1
      %p293 = scmp.ne.s32.totalorder %s288, %s290
      %p294 = scmp.eq.s32.totalorder %s21, 0
      %p295 = por %p293, %p294
      %p296 = scmp.ne.s32.totalorder %s288, %s290
      %p297 = scmp.eq.s32.totalorder %s26, 1
      %p298 = por %p296, %p297
      %p299 = scmp.ne.s32.totalorder %s290, %s291
      %p300 = scmp.eq.s32.totalorder %s26, 0
      %p301 = por %p299, %p300
      %p302 = scmp.ne.s32.totalorder %s290, %s291
      %p303 = scmp.eq.s32.totalorder %s27, 1
      %p304 = por %p302, %p303
      %p306 = scmp.ne.s32.totalorder %s291, %s305
      %p307 = scmp.eq.s32.totalorder %s27, 0
      %p308 = por %p306, %p307
      %s310 = sadd.s32 %s309, 1
      %p313 = scmp.eq.s32.totalorder %s21, 1
      %p314 = scmp.ne.s32.totalorder %s309, %s311
      %p315 = scmp.eq.s32.totalorder %s21, 0
      %p316 = por %p314, %p315
      %p317 = scmp.ne.s32.totalorder %s309, %s311
      %p318 = scmp.eq.s32.totalorder %s26, 1
      %p319 = por %p317, %p318
      %p320 = scmp.ne.s32.totalorder %s311, %s312
      %p321 = scmp.eq.s32.totalorder %s26, 0
      %p322 = por %p320, %p321
      %p323 = scmp.ne.s32.totalorder %s311, %s312
      %p324 = scmp.eq.s32.totalorder %s27, 1
      %p325 = por %p323, %p324
      %p327 = scmp.ne.s32.totalorder %s312, %s326
      %p328 = scmp.eq.s32.totalorder %s27, 0
      %p329 = por %p327, %p328
      %s330 = ssub.s32 %s28, %s40
      %s331 = ssub.s32 %s29, %s36
      %s332 = sor.u32 %s330, %s331
      %p333 = scmp.eq.s32.totalorder %s332, 0
      %s335 = sadd.s32 %s334, 1
      %s336 = scalar_select %p333, %s334, %s335
      %p339 = pneg %p333
      %p340 = scmp.eq.s32.totalorder %s21, 1
      %p341 = por %p339, %p340
      %p342 = scmp.ne.s32.totalorder %s334, %s337
      %p343 = scmp.eq.s32.totalorder %s21, 0
      %p344 = por %p342, %p343
      %p345 = scmp.ne.s32.totalorder %s334, %s337
      %p346 = scmp.eq.s32.totalorder %s26, 1
      %p347 = por %p345, %p346
      %p348 = scmp.ne.s32.totalorder %s337, %s338
      %p349 = scmp.eq.s32.totalorder %s26, 0
      %p350 = por %p348, %p349
      %p351 = scmp.ne.s32.totalorder %s337, %s338
      %p352 = scmp.eq.s32.totalorder %s27, 1
      %p353 = por %p351, %p352
      %p355 = scmp.ne.s32.totalorder %s338, %s354
      %p356 = scmp.eq.s32.totalorder %s27, 0
      %p357 = por %p355, %p356
      %p358 = scmp.le.s32.totalorder 1, %s21
      %p359 = scmp.lt.s32.totalorder %s21, 3
      %p360 = pnand %p358, %p359
      %p361 = pneg %p360
      // Predicated region
      $region9: #{block_forward.1} parent=5 // pred_check
        _
      $region10: #{block_forward.1} parent=5 // pred_check_branch
        %363 = sbr.rel (%p360) target = $region12
      $region11: #{block_forward.1} parent=5 // pred_region
        %s364 = ssub.s32 %s21, 1
        // Predicated region
        $region13: #{block_forward.1} parent=11 // pred_check
          %p365 = pneg %p154
        $region14: #{block_forward.1} parent=11 // pred_check_branch
          %367 = sbr.rel (%p365) target = $region16
        $region15: #{block_forward.1} parent=11 // pred_region
          _
        $region16: #{block_forward.1} parent=11 // pred_fallthru
          _
        // Predicated region
        $region17: #{block_forward.1} parent=11 // pred_check
          %p368 = pneg %p175
        $region18: #{block_forward.1} parent=11 // pred_check_branch
          %370 = sbr.rel (%p368) target = $region20
        $region19: #{block_forward.1} parent=11 // pred_region
          _
        $region20: #{block_forward.1} parent=11 // pred_fallthru
          _
        // Predicated region
        $region21: #{block_forward.1} parent=11 // pred_check
          %p371 = pneg %p196
        $region22: #{block_forward.1} parent=11 // pred_check_branch
          %373 = sbr.rel (%p371) target = $region24
        $region23: #{block_forward.1} parent=11 // pred_region
          _
        $region24: #{block_forward.1} parent=11 // pred_fallthru
          _
        // Predicated region
        $region25: #{block_forward.1} parent=11 // pred_check
          %p374 = pneg %p217
        $region26: #{block_forward.1} parent=11 // pred_check_branch
          %376 = sbr.rel (%p374) target = $region28
        $region27: #{block_forward.1} parent=11 // pred_region
          _
        $region28: #{block_forward.1} parent=11 // pred_fallthru
          _
        // Predicated region
        $region29: #{block_forward.1} parent=11 // pred_check
          %p377 = pneg %p238
        $region30: #{block_forward.1} parent=11 // pred_check_branch
          %379 = sbr.rel (%p377) target = $region32
        $region31: #{block_forward.1} parent=11 // pred_region
          _
        $region32: #{block_forward.1} parent=11 // pred_fallthru
          _
        // Predicated region
        $region33: #{block_forward.1} parent=11 // pred_check
          %p380 = pneg %p259
        $region34: #{block_forward.1} parent=11 // pred_check_branch
          %382 = sbr.rel (%p380) target = $region36
        $region35: #{block_forward.1} parent=11 // pred_region
          _
        $region36: #{block_forward.1} parent=11 // pred_fallthru
          _
        // Predicated region
        $region37: #{block_forward.1} parent=11 // pred_check
          %p383 = pneg %p280
        $region38: #{block_forward.1} parent=11 // pred_check_branch
          %385 = sbr.rel (%p383) target = $region40
        $region39: #{block_forward.1} parent=11 // pred_region
          _
        $region40: #{block_forward.1} parent=11 // pred_fallthru
          _
        // Predicated region
        $region41: #{block_forward.1} parent=11 // pred_check
          %p386 = pneg %p301
        $region42: #{block_forward.1} parent=11 // pred_check_branch
          %388 = sbr.rel (%p386) target = $region44
        $region43: #{block_forward.1} parent=11 // pred_region
          _
        $region44: #{block_forward.1} parent=11 // pred_fallthru
          _
        // Predicated region
        $region45: #{block_forward.1} parent=11 // pred_check
          %p389 = pneg %p322
        $region46: #{block_forward.1} parent=11 // pred_check_branch
          %391 = sbr.rel (%p389) target = $region48
        $region47: #{block_forward.1} parent=11 // pred_region
          _
        $region48: #{block_forward.1} parent=11 // pred_fallthru
          _
      $region12: #{block_forward.1} parent=5 // pred_fallthru
        _
      %p392 = scmp.lt.s32.totalorder %s21, 2
      // Predicated region
      $region49: #{block_forward.1} parent=5 // pred_check
        %p393 = pneg %p392
      $region50: #{block_forward.1} parent=5 // pred_check_branch
        %395 = sbr.rel (%p393) target = $region52
      $region51: #{block_forward.1} parent=5 // pred_region
        // Predicated region
        $region53: #{block_forward.1} parent=51 // pred_check
          %p396 = pneg %p55
        $region54: #{block_forward.1} parent=51 // pred_check_branch
          %398 = sbr.rel (%p396) target = $region56
        $region55: #{block_forward.1} parent=51 // pred_region
          %s399 = smul.u32 16, %s29
          %p400 = scmp.lt.s32.totalorder %s28, 1
          %s401 = scalar_select %p400, %s28, 1
          %p402 = scmp.lt.s32.totalorder %s399, 15
          %s403 = scalar_select %p402, %s399, 15
          %s404 = smul.addr %s403, 2
          %s405 = smul.addr %s401, 32
          %s406 = sadd.s32 %s404, %s405
          %s407 = smul.addr %s406, 8
          %s408 = scalar_lea.vmem %s0, %s407
          %s409 = smul.u32 16, %s29
        $region56: #{block_forward.1} parent=51 // pred_fallthru
          _
        // Predicated region
        $region57: #{block_forward.1} parent=51 // pred_check
          %p410 = pneg %p91
        $region58: #{block_forward.1} parent=51 // pred_check_branch
          %412 = sbr.rel (%p410) target = $region60
        $region59: #{block_forward.1} parent=51 // pred_region
          %s413 = smul.u32 %s29, 16
          %s414 = ssub.s32 %s413, 1
          %p415 = scmp.gt.s32.totalorder %s414, 0
          %s416 = scalar_select %p415, %s414, 0
          %p417 = scmp.lt.s32.totalorder %s28, 1
          %s418 = scalar_select %p417, %s28, 1
          %p419 = scmp.lt.s32.totalorder %s416, 15
          %s420 = scalar_select %p419, %s416, 15
          %s421 = smul.addr %s420, 2
          %s422 = smul.addr %s418, 32
          %s423 = sadd.s32 %s421, %s422
          %s424 = smul.addr %s423, 8
          %s425 = scalar_lea.vmem %s1, %s424
          %s426 = smul.u32 %s29, 16
          %s427 = ssub.s32 %s426, 1
          %p428 = scmp.gt.s32.totalorder %s427, 0
          %s429 = scalar_select %p428, %s427, 0
        $region60: #{block_forward.1} parent=51 // pred_fallthru
          _
        // Predicated region
        $region61: #{block_forward.1} parent=51 // pred_check
          %p430 = pneg %p127
        $region62: #{block_forward.1} parent=51 // pred_check_branch
          %432 = sbr.rel (%p430) target = $region64
        $region63: #{block_forward.1} parent=51 // pred_region
          %s433 = sadd.s32 %s29, 1
          %s434 = smul.u32 %s433, 16
          %p435 = scmp.lt.s32.totalorder %s434, 15
          %s436 = scalar_select %p435, %s434, 15
          %p437 = scmp.lt.s32.totalorder %s28, 1
          %s438 = scalar_select %p437, %s28, 1
          %p439 = scmp.lt.s32.totalorder %s436, 15
          %s440 = scalar_select %p439, %s436, 15
          %s441 = smul.addr %s440, 2
          %s442 = smul.addr %s438, 32
          %s443 = sadd.s32 %s441, %s442
          %s444 = smul.addr %s443, 8
          %s445 = scalar_lea.vmem %s2, %s444
          %s446 = sadd.s32 %s29, 1
          %s447 = smul.u32 %s446, 16
          %p448 = scmp.lt.s32.totalorder %s447, 15
          %s449 = scalar_select %p448, %s447, 15
        $region64: #{block_forward.1} parent=51 // pred_fallthru
          _
      $region52: #{block_forward.1} parent=5 // pred_fallthru
        _
      %p450 = scmp.le.s32.totalorder 1, %s21
      %p451 = scmp.lt.s32.totalorder %s21, 3
      %p452 = pnand %p450, %p451
      %p453 = pneg %p452
      // Predicated region
      $region65: #{block_forward.1} parent=5 // pred_check
        _
      $region66: #{block_forward.1} parent=5 // pred_check_branch
        %455 = sbr.rel (%p452) target = $region68
      $region67: #{block_forward.1} parent=5 // pred_region
        %s456 = ssub.s32 %s21, 1
        %s457 = smul.u32 16, %s31
        %p458 = scmp.lt.s32.totalorder %s30, 1
        %s459 = scalar_select %p458, %s30, 1
        %p460 = scmp.lt.s32.totalorder %s457, 15
        %s461 = scalar_select %p460, %s457, 15
        %s462 = smul.addr %s461, 2
        %s463 = smul.addr %s459, 32
        %s464 = sadd.s32 %s462, %s463
        %s465 = smul.addr %s464, 8
        %s466 = scalar_lea.vmem %s0, %s465
        %p467 = pneg %p61
        %p468 = pneg %p58
        %s469 = smul.u32 %s31, 16
        %s470 = ssub.s32 %s469, 1
        %p471 = scmp.gt.s32.totalorder %s470, 0
        %s472 = scalar_select %p471, %s470, 0
        %p473 = scmp.lt.s32.totalorder %s30, 1
        %s474 = scalar_select %p473, %s30, 1
        %p475 = scmp.lt.s32.totalorder %s472, 15
        %s476 = scalar_select %p475, %s472, 15
        %s477 = smul.addr %s476, 2
        %s478 = smul.addr %s474, 32
        %s479 = sadd.s32 %s477, %s478
        %s480 = smul.addr %s479, 8
        %s481 = scalar_lea.vmem %s1, %s480
        %p482 = pneg %p97
        %p483 = pneg %p94
        %s484 = sadd.s32 %s31, 1
        %s485 = smul.u32 %s484, 16
        %p486 = scmp.lt.s32.totalorder %s485, 15
        %s487 = scalar_select %p486, %s485, 15
        %p488 = scmp.lt.s32.totalorder %s30, 1
        %s489 = scalar_select %p488, %s30, 1
        %p490 = scmp.lt.s32.totalorder %s487, 15
        %s491 = scalar_select %p490, %s487, 15
        %s492 = smul.addr %s491, 2
        %s493 = smul.addr %s489, 32
        %s494 = sadd.s32 %s492, %s493
        %s495 = smul.addr %s494, 8
        %s496 = scalar_lea.vmem %s2, %s495
        %p497 = pneg %p133
        %p498 = pneg %p130
        %p499 = pneg %p154
        %p500 = pneg %p151
        %p501 = pneg %p175
        %p502 = pneg %p172
        %p503 = pneg %p196
        %p504 = pneg %p193
        %p505 = pneg %p217
        %p506 = pneg %p214
        %p507 = pneg %p238
        %p508 = pneg %p235
        %p509 = pneg %p259
        %p510 = pneg %p256
        %p511 = pneg %p280
        %p512 = pneg %p277
        %p513 = pneg %p301
        %p514 = pneg %p298
        %p515 = pneg %p322
        %p516 = pneg %p319
        %p517 = pneg %p350
        %p518 = pneg %p347
        %s519 = sand.u32 %s337, 1
        %s520 = scalar_lea.sflag [#allocation4], %s519
        %s521 = sand.u32 %s337, 1
        %s522 = smul.addr %s521, 256
        %s523 = scalar_lea.vmem [#allocation3], %s522
        %s524 = smul.u32 16, %s31
        %p525 = scmp.lt.s32.totalorder %s30, 1
        %s526 = scalar_select %p525, %s30, 1
        %p527 = scmp.lt.s32.totalorder %s524, 15
        %s528 = scalar_select %p527, %s524, 15
        %s529 = smul.addr %s528, 2
        %s530 = smul.addr %s526, 32
        %s531 = sadd.s32 %s529, %s530
        %s532 = smul.addr %s531, 8
        %s533 = scalar_lea.vmem %s0, %s532
        %s534 = smul.u32 16, %s31
        %s535 = smul.u32 %s31, 16
        %s536 = ssub.s32 %s535, 1
        %p537 = scmp.gt.s32.totalorder %s536, 0
        %s538 = scalar_select %p537, %s536, 0
        %p539 = scmp.lt.s32.totalorder %s30, 1
        %s540 = scalar_select %p539, %s30, 1
        %p541 = scmp.lt.s32.totalorder %s538, 15
        %s542 = scalar_select %p541, %s538, 15
        %s543 = smul.addr %s542, 2
        %s544 = smul.addr %s540, 32
        %s545 = sadd.s32 %s543, %s544
        %s546 = smul.addr %s545, 8
        %s547 = scalar_lea.vmem %s1, %s546
        %s548 = smul.u32 %s31, 16
        %s549 = ssub.s32 %s548, 1
        %p550 = scmp.gt.s32.totalorder %s549, 0
        %s551 = scalar_select %p550, %s549, 0
        %s552 = sadd.s32 %s31, 1
        %s553 = smul.u32 %s552, 16
        %p554 = scmp.lt.s32.totalorder %s553, 15
        %s555 = scalar_select %p554, %s553, 15
        %p556 = scmp.lt.s32.totalorder %s30, 1
        %s557 = scalar_select %p556, %s30, 1
        %p558 = scmp.lt.s32.totalorder %s555, 15
        %s559 = scalar_select %p558, %s555, 15
        %s560 = smul.addr %s559, 2
        %s561 = smul.addr %s557, 32
        %s562 = sadd.s32 %s560, %s561
        %s563 = smul.addr %s562, 8
        %s564 = scalar_lea.vmem %s2, %s563
        %s565 = sadd.s32 %s31, 1
        %s566 = smul.u32 %s565, 16
        %p567 = scmp.lt.s32.totalorder %s566, 15
        %s568 = scalar_select %p567, %s566, 15
        %s569 = smul.u32 16, %s31
        %571 = vst [vmem:[#allocation2] sm:$0x1] 0.0
        %572 = vst [vmem:[#allocation2 + $0x18] sm:$0x1] 0.0
        %573 = vst [vmem:[#allocation2 + $0x30] sm:$0x1] 0.0
        %574 = vst [vmem:[#allocation2 + $0x48] sm:$0x1] 0.0
        %575 = vst [vmem:[#allocation2 + $0x60] sm:$0x1] 0.0
        %576 = vst [vmem:[#allocation2 + $0x78] sm:$0x1] 0.0
        %577 = vst [vmem:[#allocation2 + $0x90] sm:$0x1] 0.0
        %578 = vst [vmem:[#allocation2 + $0xa8] sm:$0x1] 0.0
        %579 = vst [vmem:[#allocation2 + $0xc0] sm:$0x1] 0.0
        %580 = vst [vmem:[#allocation2 + $0xd8] sm:$0x1] 0.0
        %581 = vst [vmem:[#allocation2 + $0xf0] sm:$0x1] 0.0
        %582 = vst [vmem:[#allocation2 + $0x108] sm:$0x1] 0.0
        %583 = vst [vmem:[#allocation2 + $0x120] sm:$0x1] 0.0
        %584 = vst [vmem:[#allocation2 + $0x138] sm:$0x1] 0.0
        %585 = vst [vmem:[#allocation2 + $0x150] sm:$0x1] 0.0
        %586 = vst [vmem:[#allocation2 + $0x168] sm:$0x1] 0.0
        %587 = vst [vmem:[#allocation2 + $0x180] sm:$0x1] 0.0
        %588 = vst [vmem:[#allocation2 + $0x198] sm:$0x1] 0.0
        %589 = vst [vmem:[#allocation2 + $0x11] sm:$0x1] 0.0
        %590 = vst [vmem:[#allocation2 + $0x29] sm:$0x1] 0.0
        %591 = vst [vmem:[#allocation2 + $0x41] sm:$0x1] 0.0
        %592 = vst [vmem:[#allocation2 + $0x59] sm:$0x1] 0.0
        %593 = vst [vmem:[#allocation2 + $0x71] sm:$0x1] 0.0
        %594 = vst [vmem:[#allocation2 + $0x89] sm:$0x1] 0.0
        %595 = vst [vmem:[#allocation2 + $0xa1] sm:$0x1] 0.0
        %596 = vst [vmem:[#allocation2 + $0xb9] sm:$0x1] 0.0
        %597 = vst [vmem:[#allocation2 + $0xd1] sm:$0x1] 0.0
        %598 = vst [vmem:[#allocation2 + $0xe9] sm:$0x1] 0.0
        %599 = vst [vmem:[#allocation2 + $0x101] sm:$0x1] 0.0
        %600 = vst [vmem:[#allocation2 + $0x119] sm:$0x1] 0.0
        %601 = vst [vmem:[#allocation2 + $0x131] sm:$0x1] 0.0
        %602 = vst [vmem:[#allocation2 + $0x149] sm:$0x1] 0.0
        %603 = vst [vmem:[#allocation2 + $0x161] sm:$0x1] 0.0
        %604 = vst [vmem:[#allocation2 + $0x179] sm:$0x1] 0.0
        %605 = vst [vmem:[#allocation2 + $0x191] sm:$0x1] 0.0
        %606 = vst [vmem:[#allocation2 + $0x1a9] sm:$0x1] 0.0
        %v607 = vld [vmem:[%s533] sm:$0xff]
        %v608 = vld [vmem:[%s533 + $0x8] sm:$0xff]
        %v609 = vld [vmem:[%s533 + $0x10] sm:$0xff]
        %v610 = vld [vmem:[%s533 + $0x18] sm:$0xff]
        %v611 = vld [vmem:[%s533 + $0x20] sm:$0xff]
        %v612 = vld [vmem:[%s533 + $0x28] sm:$0xff]
        %v613 = vld [vmem:[%s533 + $0x30] sm:$0xff]
        %v614 = vld [vmem:[%s533 + $0x38] sm:$0xff]
        %v615 = vld [vmem:[%s533 + $0x40] sm:$0xff]
        %v616 = vld [vmem:[%s533 + $0x48] sm:$0xff]
        %v617 = vld [vmem:[%s533 + $0x50] sm:$0xff]
        %v618 = vld [vmem:[%s533 + $0x58] sm:$0xff]
        %v619 = vld [vmem:[%s533 + $0x60] sm:$0xff]
        %v620 = vld [vmem:[%s533 + $0x68] sm:$0xff]
        %v621 = vld [vmem:[%s533 + $0x70] sm:$0xff]
        %v622 = vld [vmem:[%s533 + $0x78] sm:$0xff]
        %v623 = vld [vmem:[%s533 + $0x80] sm:$0xff]
        %v624 = vld [vmem:[%s533 + $0x88] sm:$0xff]
        %v625 = vld [vmem:[%s533 + $0x90] sm:$0xff]
        %v626 = vld [vmem:[%s533 + $0x98] sm:$0xff]
        %v627 = vld [vmem:[%s533 + $0xa0] sm:$0xff]
        %v628 = vld [vmem:[%s533 + $0xa8] sm:$0xff]
        %v629 = vld [vmem:[%s533 + $0xb0] sm:$0xff]
        %v630 = vld [vmem:[%s533 + $0xb8] sm:$0xff]
        %v631 = vld [vmem:[%s533 + $0xc0] sm:$0xff]
        %v632 = vld [vmem:[%s533 + $0xc8] sm:$0xff]
        %v633 = vld [vmem:[%s533 + $0xd0] sm:$0xff]
        %v634 = vld [vmem:[%s533 + $0xd8] sm:$0xff]
        %v635 = vld [vmem:[%s533 + $0xe0] sm:$0xff]
        %v636 = vld [vmem:[%s533 + $0xe8] sm:$0xff]
        %v637 = vld [vmem:[%s533 + $0xf0] sm:$0xff]
        %v638 = vld [vmem:[%s533 + $0xf8] sm:$0xff]
        %v639 = vpack.c.bf16 %v608, %v607
        %v640 = vpack.c.bf16 %v610, %v609
        %v641 = vpack.c.bf16 %v612, %v611
        %v642 = vpack.c.bf16 %v614, %v613
        %v643 = vpack.c.bf16 %v616, %v615
        %v644 = vpack.c.bf16 %v618, %v617
        %v645 = vpack.c.bf16 %v620, %v619
        %v646 = vpack.c.bf16 %v622, %v621
        %v647 = vpack.c.bf16 %v624, %v623
        %v648 = vpack.c.bf16 %v626, %v625
        %v649 = vpack.c.bf16 %v628, %v627
        %v650 = vpack.c.bf16 %v630, %v629
        %v651 = vpack.c.bf16 %v632, %v631
        %v652 = vpack.c.bf16 %v634, %v633
        %v653 = vpack.c.bf16 %v636, %v635
        %v654 = vpack.c.bf16 %v638, %v637
        %v655 = vld [vmem:[%s3] sm:$0xf]
        %v656 = vld [vmem:[%s3 + $0x4] sm:$0xf]
        %v657 = vld [vmem:[%s3 + $0x8] sm:$0xf]
        %v658 = vld [vmem:[%s3 + $0xc] sm:$0xf]
        %v659 = vld [vmem:[%s3 + $0x10] sm:$0xf]
        %v660 = vld [vmem:[%s3 + $0x14] sm:$0xf]
        %v661 = vld [vmem:[%s3 + $0x18] sm:$0xf]
        %v662 = vld [vmem:[%s3 + $0x1c] sm:$0xf]
        %v663 = vld [vmem:[%s3 + $0x20] sm:$0xf]
        %v664 = vld [vmem:[%s3 + $0x24] sm:$0xf]
        %v665 = vld [vmem:[%s3 + $0x28] sm:$0xf]
        %v666 = vld [vmem:[%s3 + $0x2c] sm:$0xf]
        %v667 = vld [vmem:[%s3 + $0x30] sm:$0xf]
        %v668 = vld [vmem:[%s3 + $0x34] sm:$0xf]
        %v669 = vld [vmem:[%s3 + $0x38] sm:$0xf]
        %v670 = vld [vmem:[%s3 + $0x3c] sm:$0xf]
        %v687 = vunpack.c.l.b16 %v655
        %v688 = vunpack.c.l.b16 %v656
        %v689 = vunpack.c.l.b16 %v657
        %v690 = vunpack.c.l.b16 %v658
        %v691 = vunpack.c.l.b16 %v659
        %v692 = vunpack.c.l.b16 %v660
        %v693 = vunpack.c.l.b16 %v661
        %v694 = vunpack.c.l.b16 %v662
        %v695 = vunpack.c.l.b16 %v663
        %v696 = vunpack.c.l.b16 %v664
        %v697 = vunpack.c.l.b16 %v665
        %v698 = vunpack.c.l.b16 %v666
        %v699 = vunpack.c.l.b16 %v667
        %v700 = vunpack.c.l.b16 %v668
        %v701 = vunpack.c.l.b16 %v669
        %v702 = vunpack.c.l.b16 %v670
        %v703 = vpack.c.b16 %v688, %v687
        %v704 = vpack.c.b16 %v690, %v689
        %v705 = vpack.c.b16 %v692, %v691
        %v706 = vpack.c.b16 %v694, %v693
        %v707 = vpack.c.b16 %v696, %v695
        %v708 = vpack.c.b16 %v698, %v697
        %v709 = vpack.c.b16 %v700, %v699
        %v710 = vpack.c.b16 %v702, %v701
        %719 = vmatprep.subr.bf16.mxu0 0
        %720 = vmatpush1.bf16.msra.mxu0 %v703
        %721 = vmatprep.subr.bf16.mxu0 0
        %722 = vmatpush1.bf16.msra.mxu0 %v704
        %723 = vmatprep.subr.bf16.mxu0 0
        %724 = vmatpush1.bf16.msra.mxu0 %v705
        %725 = vmatprep.subr.bf16.mxu0 0
        %726 = vmatpush1.bf16.msra.mxu0 %v706
        %727 = vmatprep.subr.bf16.mxu0 0
        %728 = vmatpush1.bf16.msra.mxu0 %v707
        %729 = vmatprep.subr.bf16.mxu0 0
        %730 = vmatpush1.bf16.msra.mxu0 %v708
        %731 = vmatprep.subr.bf16.mxu0 0
        %732 = vmatpush1.bf16.msra.mxu0 %v709
        %733 = vmatprep.subr.bf16.mxu0 0
        %734 = vmatpush1.bf16.msra.mxu0 %v710
        %735 = vmatprep.subr.bf16.mxu0 0
        %736 = vmatpush1.bf16.msra.mxu0 0
        %737 = vmatprep.subr.bf16.mxu0 0
        %738 = vmatpush1.bf16.msra.mxu0 0
        %739 = vmatprep.subr.bf16.mxu0 0
        %740 = vmatpush1.bf16.msra.mxu0 0
        %741 = vmatprep.subr.bf16.mxu0 0
        %742 = vmatpush1.bf16.msra.mxu0 0
        %743 = vmatprep.subr.bf16.mxu0 0
        %744 = vmatpush1.bf16.msra.mxu0 0
        %745 = vmatprep.subr.bf16.mxu0 0
        %746 = vmatpush1.bf16.msra.mxu0 0
        %747 = vmatprep.subr.bf16.mxu0 0
        %748 = vmatpush1.bf16.msra.mxu0 0
        %749 = vmatprep.subr.bf16.mxu0 0
        %750 = vmatpush1.bf16.msra.mxu0 0
        %751 = vmatprep.mubr.bf16.mxu0 0
        %752 = vmatmul.mubr.bf16.gmra.mrb[0].mxu0 %v639
        %v753 = vpop.f32.mrb[0].mxu0
        %v754 = vadd.f32 0.0, %v753
        %v755 = vpop.f32.mrb[0].mxu0
        %v756 = vpop.f32.mrb[0].mxu0
        %v757 = vadd.f32 0.0, %v756
        %v758 = vpop.f32.mrb[0].mxu0
        %759 = vmatprep.mubr.bf16.mxu0 0
        %760 = vmatmul.mubr.bf16.gmra.mrb[0].mxu0 %v640
        %v761 = vpop.f32.mrb[0].mxu0
        %v762 = vadd.f32 0.0, %v761
        %v763 = vpop.f32.mrb[0].mxu0
        %v764 = vpop.f32.mrb[0].mxu0
        %v765 = vadd.f32 0.0, %v764
        %v766 = vpop.f32.mrb[0].mxu0
        %767 = vmatprep.mubr.bf16.mxu0 0
        %768 = vmatmul.mubr.bf16.gmra.mrb[0].mxu0 %v641
        %v769 = vpop.f32.mrb[0].mxu0
        %v770 = vadd.f32 0.0, %v769
        %v771 = vpop.f32.mrb[0].mxu0
        %v772 = vpop.f32.mrb[0].mxu0
        %v773 = vadd.f32 0.0, %v772
        %v774 = vpop.f32.mrb[0].mxu0
        %775 = vmatprep.mubr.bf16.mxu0 0
        %776 = vmatmul.mubr.bf16.gmra.mrb[0].mxu0 %v642
        %v777 = vpop.f32.mrb[0].mxu0
        %v778 = vadd.f32 0.0, %v777
        %v779 = vpop.f32.mrb[0].mxu0
        %v780 = vpop.f32.mrb[0].mxu0
        %v781 = vadd.f32 0.0, %v780
        %v782 = vpop.f32.mrb[0].mxu0
        %783 = vmatprep.mubr.bf16.mxu0 0
        %784 = vmatmul.mubr.bf16.gmra.mrb[0].mxu0 %v643
        %v785 = vpop.f32.mrb[0].mxu0
        %v786 = vadd.f32 0.0, %v785
        %v787 = vpop.f32.mrb[0].mxu0
        %v788 = vpop.f32.mrb[0].mxu0
        %v789 = vadd.f32 0.0, %v788
        %v790 = vpop.f32.mrb[0].mxu0
        %791 = vmatprep.mubr.bf16.mxu0 0
        %792 = vmatmul.mubr.bf16.gmra.mrb[0].mxu0 %v644
        %v793 = vpop.f32.mrb[0].mxu0
        %v794 = vadd.f32 0.0, %v793
        %v795 = vpop.f32.mrb[0].mxu0
        %v796 = vpop.f32.mrb[0].mxu0
        %v797 = vadd.f32 0.0, %v796
        %v798 = vpop.f32.mrb[0].mxu0
        %799 = vmatprep.mubr.bf16.mxu0 0
        %800 = vmatmul.mubr.bf16.gmra.mrb[0].mxu0 %v645
        %v801 = vpop.f32.mrb[0].mxu0
        %v802 = vadd.f32 0.0, %v801
        %v803 = vpop.f32.mrb[0].mxu0
        %v804 = vpop.f32.mrb[0].mxu0
        %v805 = vadd.f32 0.0, %v804
        %v806 = vpop.f32.mrb[0].mxu0
        %807 = vmatprep.mubr.bf16.mxu0 0
        %808 = vmatmul.mubr.bf16.gmra.mrb[0].mxu0 %v646
        %v809 = vpop.f32.mrb[0].mxu0
        %v810 = vadd.f32 0.0, %v809
        %v811 = vpop.f32.mrb[0].mxu0
        %v812 = vpop.f32.mrb[0].mxu0
        %v813 = vadd.f32 0.0, %v812
        %v814 = vpop.f32.mrb[0].mxu0
        %815 = vmatprep.mubr.bf16.mxu0 0
        %816 = vmatmul.mubr.bf16.gmra.mrb[0].mxu0 %v647
        %v817 = vpop.f32.mrb[0].mxu0
        %v818 = vadd.f32 0.0, %v817
        %v819 = vpop.f32.mrb[0].mxu0
        %v820 = vpop.f32.mrb[0].mxu0
        %v821 = vadd.f32 0.0, %v820
        %v822 = vpop.f32.mrb[0].mxu0
        %823 = vmatprep.mubr.bf16.mxu0 0
        %824 = vmatmul.mubr.bf16.gmra.mrb[0].mxu0 %v648
        %v825 = vpop.f32.mrb[0].mxu0
        %v826 = vadd.f32 0.0, %v825
        %v827 = vpop.f32.mrb[0].mxu0
        %v828 = vpop.f32.mrb[0].mxu0
        %v829 = vadd.f32 0.0, %v828
        %v830 = vpop.f32.mrb[0].mxu0
        %831 = vmatprep.mubr.bf16.mxu0 0
        %832 = vmatmul.mubr.bf16.gmra.mrb[0].mxu0 %v649
        %v833 = vpop.f32.mrb[0].mxu0
        %v834 = vadd.f32 0.0, %v833
        %v835 = vpop.f32.mrb[0].mxu0
        %v836 = vpop.f32.mrb[0].mxu0
        %v837 = vadd.f32 0.0, %v836
        %v838 = vpop.f32.mrb[0].mxu0
        %839 = vmatprep.mubr.bf16.mxu0 0
        %840 = vmatmul.mubr.bf16.gmra.mrb[0].mxu0 %v650
        %v841 = vpop.f32.mrb[0].mxu0
        %v842 = vadd.f32 0.0, %v841
        %v843 = vpop.f32.mrb[0].mxu0
        %v844 = vpop.f32.mrb[0].mxu0
        %v845 = vadd.f32 0.0, %v844
        %v846 = vpop.f32.mrb[0].mxu0
        %847 = vmatprep.mubr.bf16.mxu0 0
        %848 = vmatmul.mubr.bf16.gmra.mrb[0].mxu0 %v651
        %v849 = vpop.f32.mrb[0].mxu0
        %v850 = vadd.f32 0.0, %v849
        %v851 = vpop.f32.mrb[0].mxu0
        %v852 = vpop.f32.mrb[0].mxu0
        %v853 = vadd.f32 0.0, %v852
        %v854 = vpop.f32.mrb[0].mxu0
        %855 = vmatprep.mubr.bf16.mxu0 0
        %856 = vmatmul.mubr.bf16.gmra.mrb[0].mxu0 %v652
        %v857 = vpop.f32.mrb[0].mxu0
        %v858 = vadd.f32 0.0, %v857
        %v859 = vpop.f32.mrb[0].mxu0
        %v860 = vpop.f32.mrb[0].mxu0
        %v861 = vadd.f32 0.0, %v860
        %v862 = vpop.f32.mrb[0].mxu0
        %863 = vmatprep.mubr.bf16.mxu0 0
        %864 = vmatmul.mubr.bf16.gmra.mrb[0].mxu0 %v653
        %v865 = vpop.f32.mrb[0].mxu0
        %v866 = vadd.f32 0.0, %v865
        %v867 = vpop.f32.mrb[0].mxu0
        %v868 = vpop.f32.mrb[0].mxu0
        %v869 = vadd.f32 0.0, %v868
        %v870 = vpop.f32.mrb[0].mxu0
        %871 = vmatprep.mubr.bf16.mxu0 0
        %872 = vmatmul.mubr.bf16.gmra.mrb[0].mxu0 %v654
        %v873 = vpop.f32.mrb[0].mxu0
        %v874 = vadd.f32 0.0, %v873
        %v875 = vpop.f32.mrb[0].mxu0
        %v876 = vpop.f32.mrb[0].mxu0
        %v877 = vadd.f32 0.0, %v876
        %v878 = vpop.f32.mrb[0].mxu0
        %879 = vdwg.mxu0
        %v880 = vld [vmem:[%s4] sm:$0x1]
        %v882 = vlaneseq
        %v883 = vshrl.u32 %v882, 7
        %v884 = vsub.s32 0, %v883
        %v885 = vrot.slane %v880, %v884
        %v887 = vmul.f32 %v754, %v885
        %v888 = vmul.f32 %v757, %v885
        %v889 = vmul.f32 %v762, %v885
        %v890 = vmul.f32 %v765, %v885
        %v891 = vmul.f32 %v770, %v885
        %v892 = vmul.f32 %v773, %v885
        %v893 = vmul.f32 %v778, %v885
        %v894 = vmul.f32 %v781, %v885
        %v895 = vmul.f32 %v786, %v885
        %v896 = vmul.f32 %v789, %v885
        %v897 = vmul.f32 %v794, %v885
        %v898 = vmul.f32 %v797, %v885
        %v899 = vmul.f32 %v802, %v885
        %v900 = vmul.f32 %v805, %v885
        %v901 = vmul.f32 %v810, %v885
        %v902 = vmul.f32 %v813, %v885
        %v903 = vmul.f32 %v818, %v885
        %v904 = vmul.f32 %v821, %v885
        %v905 = vmul.f32 %v826, %v885
        %v906 = vmul.f32 %v829, %v885
        %v907 = vmul.f32 %v834, %v885
        %v908 = vmul.f32 %v837, %v885
        %v909 = vmul.f32 %v842, %v885
        %v910 = vmul.f32 %v845, %v885
        %v911 = vmul.f32 %v850, %v885
        %v912 = vmul.f32 %v853, %v885
        %v913 = vmul.f32 %v858, %v885
        %v914 = vmul.f32 %v861, %v885
        %v915 = vmul.f32 %v866, %v885
        %v916 = vmul.f32 %v869, %v885
        %v917 = vmul.f32 %v874, %v885
        %v918 = vmul.f32 %v877, %v885
        %v919 = vld [vmem:[%s5] sm:$0x1]
        %v921 = vlaneseq
        %v922 = vshrl.u32 %v921, 7
        %v923 = vsub.s32 0, %v922
        %v924 = vrot.slane %v919, %v923
        %v926 = vadd.f32 %v887, %v924
        %v927 = vadd.f32 %v888, %v924
        %v928 = vadd.f32 %v889, %v924
        %v929 = vadd.f32 %v890, %v924
        %v930 = vadd.f32 %v891, %v924
        %v931 = vadd.f32 %v892, %v924
        %v932 = vadd.f32 %v893, %v924
        %v933 = vadd.f32 %v894, %v924
        %v934 = vadd.f32 %v895, %v924
        %v935 = vadd.f32 %v896, %v924
        %v936 = vadd.f32 %v897, %v924
        %v937 = vadd.f32 %v898, %v924
        %v938 = vadd.f32 %v899, %v924
        %v939 = vadd.f32 %v900, %v924
        %v940 = vadd.f32 %v901, %v924
        %v941 = vadd.f32 %v902, %v924
        %v942 = vadd.f32 %v903, %v924
        %v943 = vadd.f32 %v904, %v924
        %v944 = vadd.f32 %v905, %v924
        %v945 = vadd.f32 %v906, %v924
        %v946 = vadd.f32 %v907, %v924
        %v947 = vadd.f32 %v908, %v924
        %v948 = vadd.f32 %v909, %v924
        %v949 = vadd.f32 %v910, %v924
        %v950 = vadd.f32 %v911, %v924
        %v951 = vadd.f32 %v912, %v924
        %v952 = vadd.f32 %v913, %v924
        %v953 = vadd.f32 %v914, %v924
        %v954 = vadd.f32 %v915, %v924
        %v955 = vadd.f32 %v916, %v924
        %v956 = vadd.f32 %v917, %v924
        %v957 = vadd.f32 %v918, %v924
        %v958 = vmax.f32 %v926, 0.0
        %v959 = vmax.f32 %v927, 0.0
        %v960 = vmax.f32 %v928, 0.0
        %v961 = vmax.f32 %v929, 0.0
        %v962 = vmax.f32 %v930, 0.0
        %v963 = vmax.f32 %v931, 0.0
        %v964 = vmax.f32 %v932, 0.0
        %v965 = vmax.f32 %v933, 0.0
        %v966 = vmax.f32 %v934, 0.0
        %v967 = vmax.f32 %v935, 0.0
        %v968 = vmax.f32 %v936, 0.0
        %v969 = vmax.f32 %v937, 0.0
        %v970 = vmax.f32 %v938, 0.0
        %v971 = vmax.f32 %v939, 0.0
        %v972 = vmax.f32 %v940, 0.0
        %v973 = vmax.f32 %v941, 0.0
        %v974 = vmax.f32 %v942, 0.0
        %v975 = vmax.f32 %v943, 0.0
        %v976 = vmax.f32 %v944, 0.0
        %v977 = vmax.f32 %v945, 0.0
        %v978 = vmax.f32 %v946, 0.0
        %v979 = vmax.f32 %v947, 0.0
        %v980 = vmax.f32 %v948, 0.0
        %v981 = vmax.f32 %v949, 0.0
        %v982 = vmax.f32 %v950, 0.0
        %v983 = vmax.f32 %v951, 0.0
        %v984 = vmax.f32 %v952, 0.0
        %v985 = vmax.f32 %v953, 0.0
        %v986 = vmax.f32 %v954, 0.0
        %v987 = vmax.f32 %v955, 0.0
        %v988 = vmax.f32 %v956, 0.0
        %v989 = vmax.f32 %v957, 0.0
        %s990 = scalar_lea.vmem [#allocation2], 24
        %991 = vst [vmem:[%s990 + $0x1] sm:$0xff] %v958
        %992 = vst [vmem:[%s990 + $0x9] sm:$0xff] %v959
        %993 = vst [vmem:[%s990 + $0x19] sm:$0xff] %v960
        %994 = vst [vmem:[%s990 + $0x21] sm:$0xff] %v961
        %995 = vst [vmem:[%s990 + $0x31] sm:$0xff] %v962
        %996 = vst [vmem:[%s990 + $0x39] sm:$0xff] %v963
        %997 = vst [vmem:[%s990 + $0x49] sm:$0xff] %v964
        %998 = vst [vmem:[%s990 + $0x51] sm:$0xff] %v965
        %999 = vst [vmem:[%s990 + $0x61] sm:$0xff] %v966
        %1000 = vst [vmem:[%s990 + $0x69] sm:$0xff] %v967
        %1001 = vst [vmem:[%s990 + $0x79] sm:$0xff] %v968
        %1002 = vst [vmem:[%s990 + $0x81] sm:$0xff] %v969
        %1003 = vst [vmem:[%s990 + $0x91] sm:$0xff] %v970
        %1004 = vst [vmem:[%s990 + $0x99] sm:$0xff] %v971
        %1005 = vst [vmem:[%s990 + $0xa9] sm:$0xff] %v972
        %1006 = vst [vmem:[%s990 + $0xb1] sm:$0xff] %v973
        %1007 = vst [vmem:[%s990 + $0xc1] sm:$0xff] %v974
        %1008 = vst [vmem:[%s990 + $0xc9] sm:$0xff] %v975
        %1009 = vst [vmem:[%s990 + $0xd9] sm:$0xff] %v976
        %1010 = vst [vmem:[%s990 + $0xe1] sm:$0xff] %v977
        %1011 = vst [vmem:[%s990 + $0xf1] sm:$0xff] %v978
        %1012 = vst [vmem:[%s990 + $0xf9] sm:$0xff] %v979
        %1013 = vst [vmem:[%s990 + $0x109] sm:$0xff] %v980
        %1014 = vst [vmem:[%s990 + $0x111] sm:$0xff] %v981
        %1015 = vst [vmem:[%s990 + $0x121] sm:$0xff] %v982
        %1016 = vst [vmem:[%s990 + $0x129] sm:$0xff] %v983
        %1017 = vst [vmem:[%s990 + $0x139] sm:$0xff] %v984
        %1018 = vst [vmem:[%s990 + $0x141] sm:$0xff] %v985
        %1019 = vst [vmem:[%s990 + $0x151] sm:$0xff] %v986
        %1020 = vst [vmem:[%s990 + $0x159] sm:$0xff] %v987
        %1021 = vst [vmem:[%s990 + $0x169] sm:$0xff] %v988
        %1022 = vst [vmem:[%s990 + $0x171] sm:$0xff] %v989
        %p1023 = scmp.gt.s32.totalorder %s31, 0
        %s1024 = scalar_select %p1023, 1, 0
        %s1025 = scvt.s32.f32 %s1024
        %p1026 = scmp.lt.s32.totalorder %s31, 0
        %s1027 = scalar_select %p1026, 1, 0
        %s1028 = scvt.s32.f32 %s1027
        %v1029 = vld [vmem:[%s547] sm:$0xff]
        %v1030 = vld [vmem:[%s547 + $0x8] sm:$0xff]
        %v1031 = vpack.c.bf16 %v1030, %v1029
        %v1032 = vld [vmem:[%s3] sm:$0xf]
        %v1033 = vld [vmem:[%s3 + $0x4] sm:$0xf]
        %v1034 = vld [vmem:[%s3 + $0x8] sm:$0xf]
        %v1035 = vld [vmem:[%s3 + $0xc] sm:$0xf]
        %v1036 = vld [vmem:[%s3 + $0x10] sm:$0xf]
        %v1037 = vld [vmem:[%s3 + $0x14] sm:$0xf]
        %v1038 = vld [vmem:[%s3 + $0x18] sm:$0xf]
        %v1039 = vld [vmem:[%s3 + $0x1c] sm:$0xf]
        %v1040 = vld [vmem:[%s3 + $0x20] sm:$0xf]
        %v1041 = vld [vmem:[%s3 + $0x24] sm:$0xf]
        %v1042 = vld [vmem:[%s3 + $0x28] sm:$0xf]
        %v1043 = vld [vmem:[%s3 + $0x2c] sm:$0xf]
        %v1044 = vld [vmem:[%s3 + $0x30] sm:$0xf]
        %v1045 = vld [vmem:[%s3 + $0x34] sm:$0xf]
        %v1046 = vld [vmem:[%s3 + $0x38] sm:$0xf]
        %v1047 = vld [vmem:[%s3 + $0x3c] sm:$0xf]
        %v1064 = vunpack.c.l.b16 %v1032
        %v1065 = vunpack.c.l.b16 %v1033
        %v1066 = vunpack.c.l.b16 %v1034
        %v1067 = vunpack.c.l.b16 %v1035
        %v1068 = vunpack.c.l.b16 %v1036
        %v1069 = vunpack.c.l.b16 %v1037
        %v1070 = vunpack.c.l.b16 %v1038
        %v1071 = vunpack.c.l.b16 %v1039
        %v1072 = vunpack.c.l.b16 %v1040
        %v1073 = vunpack.c.l.b16 %v1041
        %v1074 = vunpack.c.l.b16 %v1042
        %v1075 = vunpack.c.l.b16 %v1043
        %v1076 = vunpack.c.l.b16 %v1044
        %v1077 = vunpack.c.l.b16 %v1045
        %v1078 = vunpack.c.l.b16 %v1046
        %v1079 = vunpack.c.l.b16 %v1047
        %v1080 = vpack.c.b16 %v1065, %v1064
        %v1081 = vpack.c.b16 %v1067, %v1066
        %v1082 = vpack.c.b16 %v1069, %v1068
        %v1083 = vpack.c.b16 %v1071, %v1070
        %v1084 = vpack.c.b16 %v1073, %v1072
        %v1085 = vpack.c.b16 %v1075, %v1074
        %v1086 = vpack.c.b16 %v1077, %v1076
        %v1087 = vpack.c.b16 %v1079, %v1078
        %1096 = vmatprep.subr.bf16.mxu0 0
        %1097 = vmatpush1.bf16.msra.mxu0 %v1080
        %1098 = vmatprep.subr.bf16.mxu0 0
        %1099 = vmatpush1.bf16.msra.mxu0 %v1081
        %1100 = vmatprep.subr.bf16.mxu0 0
        %1101 = vmatpush1.bf16.msra.mxu0 %v1082
        %1102 = vmatprep.subr.bf16.mxu0 0
        %1103 = vmatpush1.bf16.msra.mxu0 %v1083
        %1104 = vmatprep.subr.bf16.mxu0 0
        %1105 = vmatpush1.bf16.msra.mxu0 %v1084
        %1106 = vmatprep.subr.bf16.mxu0 0
        %1107 = vmatpush1.bf16.msra.mxu0 %v1085
        %1108 = vmatprep.subr.bf16.mxu0 0
        %1109 = vmatpush1.bf16.msra.mxu0 %v1086
        %1110 = vmatprep.subr.bf16.mxu0 0
        %1111 = vmatpush1.bf16.msra.mxu0 %v1087
        %1112 = vmatprep.subr.bf16.mxu0 0
        %1113 = vmatpush1.bf16.msra.mxu0 0
        %1114 = vmatprep.subr.bf16.mxu0 0
        %1115 = vmatpush1.bf16.msra.mxu0 0
        %1116 = vmatprep.subr.bf16.mxu0 0
        %1117 = vmatpush1.bf16.msra.mxu0 0
        %1118 = vmatprep.subr.bf16.mxu0 0
        %1119 = vmatpush1.bf16.msra.mxu0 0
        %1120 = vmatprep.subr.bf16.mxu0 0
        %1121 = vmatpush1.bf16.msra.mxu0 0
        %1122 = vmatprep.subr.bf16.mxu0 0
        %1123 = vmatpush1.bf16.msra.mxu0 0
        %1124 = vmatprep.subr.bf16.mxu0 0
        %1125 = vmatpush1.bf16.msra.mxu0 0
        %1126 = vmatprep.subr.bf16.mxu0 0
        %1127 = vmatpush1.bf16.msra.mxu0 0
        %1128 = vmatprep.mubr.bf16.mxu0 0
        %1129 = vmatmul.mubr.bf16.gmra.mrb[0].mxu0 %v1031
        %v1130 = vpop.f32.mrb[0].mxu0
        %v1131 = vadd.f32 0.0, %v1130
        %v1132 = vpop.f32.mrb[0].mxu0
        %v1133 = vpop.f32.mrb[0].mxu0
        %v1134 = vadd.f32 0.0, %v1133
        %v1135 = vpop.f32.mrb[0].mxu0
        %1136 = vdwg.mxu0
        %v1137 = vld [vmem:[%s4] sm:$0x1]
        %v1139 = vlaneseq
        %v1140 = vshrl.u32 %v1139, 7
        %v1141 = vsub.s32 0, %v1140
        %v1142 = vrot.slane %v1137, %v1141
        %v1144 = vmul.f32 %v1131, %v1142
        %v1145 = vmul.f32 %v1134, %v1142
        %v1146 = vld [vmem:[%s5] sm:$0x1]
        %v1148 = vlaneseq
        %v1149 = vshrl.u32 %v1148, 7
        %v1150 = vsub.s32 0, %v1149
        %v1151 = vrot.slane %v1146, %v1150
        %v1153 = vadd.f32 %v1144, %v1151
        %v1154 = vadd.f32 %v1145, %v1151
        %v1155 = vmax.f32 %v1153, 0.0
        %v1156 = vmax.f32 %v1154, 0.0
        %v1157 = vstv %s1025
        %v1158 = vmul.f32 %v1155, %v1157
        %v1159 = vmul.f32 %v1156, %v1157
        %1160 = vst [vmem:[#allocation2 + $0x1] sm:$0xff] %v1158
        %1161 = vst [vmem:[#allocation2 + $0x9] sm:$0xff] %v1159
        %v1162 = vld [vmem:[%s564] sm:$0xff]
        %v1163 = vld [vmem:[%s564 + $0x8] sm:$0xff]
        %v1164 = vpack.c.bf16 %v1163, %v1162
        %v1165 = vld [vmem:[%s3] sm:$0xf]
        %v1166 = vld [vmem:[%s3 + $0x4] sm:$0xf]
        %v1167 = vld [vmem:[%s3 + $0x8] sm:$0xf]
        %v1168 = vld [vmem:[%s3 + $0xc] sm:$0xf]
        %v1169 = vld [vmem:[%s3 + $0x10] sm:$0xf]
        %v1170 = vld [vmem:[%s3 + $0x14] sm:$0xf]
        %v1171 = vld [vmem:[%s3 + $0x18] sm:$0xf]
        %v1172 = vld [vmem:[%s3 + $0x1c] sm:$0xf]
        %v1173 = vld [vmem:[%s3 + $0x20] sm:$0xf]
        %v1174 = vld [vmem:[%s3 + $0x24] sm:$0xf]
        %v1175 = vld [vmem:[%s3 + $0x28] sm:$0xf]
        %v1176 = vld [vmem:[%s3 + $0x2c] sm:$0xf]
        %v1177 = vld [vmem:[%s3 + $0x30] sm:$0xf]
        %v1178 = vld [vmem:[%s3 + $0x34] sm:$0xf]
        %v1179 = vld [vmem:[%s3 + $0x38] sm:$0xf]
        %v1180 = vld [vmem:[%s3 + $0x3c] sm:$0xf]
        %v1197 = vunpack.c.l.b16 %v1165
        %v1198 = vunpack.c.l.b16 %v1166
        %v1199 = vunpack.c.l.b16 %v1167
        %v1200 = vunpack.c.l.b16 %v1168
        %v1201 = vunpack.c.l.b16 %v1169
        %v1202 = vunpack.c.l.b16 %v1170
        %v1203 = vunpack.c.l.b16 %v1171
        %v1204 = vunpack.c.l.b16 %v1172
        %v1205 = vunpack.c.l.b16 %v1173
        %v1206 = vunpack.c.l.b16 %v1174
        %v1207 = vunpack.c.l.b16 %v1175
        %v1208 = vunpack.c.l.b16 %v1176
        %v1209 = vunpack.c.l.b16 %v1177
        %v1210 = vunpack.c.l.b16 %v1178
        %v1211 = vunpack.c.l.b16 %v1179
        %v1212 = vunpack.c.l.b16 %v1180
        %v1213 = vpack.c.b16 %v1198, %v1197
        %v1214 = vpack.c.b16 %v1200, %v1199
        %v1215 = vpack.c.b16 %v1202, %v1201
        %v1216 = vpack.c.b16 %v1204, %v1203
        %v1217 = vpack.c.b16 %v1206, %v1205
        %v1218 = vpack.c.b16 %v1208, %v1207
        %v1219 = vpack.c.b16 %v1210, %v1209
        %v1220 = vpack.c.b16 %v1212, %v1211
        %1229 = vmatprep.subr.bf16.mxu0 0
        %1230 = vmatpush1.bf16.msra.mxu0 %v1213
        %1231 = vmatprep.subr.bf16.mxu0 0
        %1232 = vmatpush1.bf16.msra.mxu0 %v1214
        %1233 = vmatprep.subr.bf16.mxu0 0
        %1234 = vmatpush1.bf16.msra.mxu0 %v1215
        %1235 = vmatprep.subr.bf16.mxu0 0
        %1236 = vmatpush1.bf16.msra.mxu0 %v1216
        %1237 = vmatprep.subr.bf16.mxu0 0
        %1238 = vmatpush1.bf16.msra.mxu0 %v1217
        %1239 = vmatprep.subr.bf16.mxu0 0
        %1240 = vmatpush1.bf16.msra.mxu0 %v1218
        %1241 = vmatprep.subr.bf16.mxu0 0
        %1242 = vmatpush1.bf16.msra.mxu0 %v1219
        %1243 = vmatprep.subr.bf16.mxu0 0
        %1244 = vmatpush1.bf16.msra.mxu0 %v1220
        %1245 = vmatprep.subr.bf16.mxu0 0
        %1246 = vmatpush1.bf16.msra.mxu0 0
        %1247 = vmatprep.subr.bf16.mxu0 0
        %1248 = vmatpush1.bf16.msra.mxu0 0
        %1249 = vmatprep.subr.bf16.mxu0 0
        %1250 = vmatpush1.bf16.msra.mxu0 0
        %1251 = vmatprep.subr.bf16.mxu0 0
        %1252 = vmatpush1.bf16.msra.mxu0 0
        %1253 = vmatprep.subr.bf16.mxu0 0
        %1254 = vmatpush1.bf16.msra.mxu0 0
        %1255 = vmatprep.subr.bf16.mxu0 0
        %1256 = vmatpush1.bf16.msra.mxu0 0
        %1257 = vmatprep.subr.bf16.mxu0 0
        %1258 = vmatpush1.bf16.msra.mxu0 0
        %1259 = vmatprep.subr.bf16.mxu0 0
        %1260 = vmatpush1.bf16.msra.mxu0 0
        %1261 = vmatprep.mubr.bf16.mxu0 0
        %1262 = vmatmul.mubr.bf16.gmra.mrb[0].mxu0 %v1164
        %v1263 = vpop.f32.mrb[0].mxu0
        %v1264 = vadd.f32 0.0, %v1263
        %v1265 = vpop.f32.mrb[0].mxu0
        %v1266 = vpop.f32.mrb[0].mxu0
        %v1267 = vadd.f32 0.0, %v1266
        %v1268 = vpop.f32.mrb[0].mxu0
        %1269 = vdwg.mxu0
        %v1270 = vld [vmem:[%s4] sm:$0x1]
        %v1272 = vlaneseq
        %v1273 = vshrl.u32 %v1272, 7
        %v1274 = vsub.s32 0, %v1273
        %v1275 = vrot.slane %v1270, %v1274
        %v1277 = vmul.f32 %v1264, %v1275
        %v1278 = vmul.f32 %v1267, %v1275
        %v1279 = vld [vmem:[%s5] sm:$0x1]
        %v1281 = vlaneseq
        %v1282 = vshrl.u32 %v1281, 7
        %v1283 = vsub.s32 0, %v1282
        %v1284 = vrot.slane %v1279, %v1283
        %v1286 = vadd.f32 %v1277, %v1284
        %v1287 = vadd.f32 %v1278, %v1284
        %v1288 = vmax.f32 %v1286, 0.0
        %v1289 = vmax.f32 %v1287, 0.0
        %v1290 = vstv %s1028
        %v1291 = vmul.f32 %v1288, %v1290
        %v1292 = vmul.f32 %v1289, %v1290
        %s1293 = scalar_lea.vmem [#allocation2], 408
        %1294 = vst [vmem:[%s1293 + $0x1] sm:$0xff] %v1291
        %1295 = vst [vmem:[%s1293 + $0x9] sm:$0xff] %v1292
        %v1296 = vld [vmem:[#allocation2] sm:$0xff]
        %v1297 = vld [vmem:[#allocation2 + $0x8] sm:$0xff]
        %v1298 = vld [vmem:[#allocation2 + $0x18] sm:$0xff]
        %v1299 = vld [vmem:[#allocation2 + $0x20] sm:$0xff]
        %v1300 = vld [vmem:[#allocation2 + $0x30] sm:$0xff]
        %v1301 = vld [vmem:[#allocation2 + $0x38] sm:$0xff]
        %v1302 = vld [vmem:[#allocation2 + $0x48] sm:$0xff]
        %v1303 = vld [vmem:[#allocation2 + $0x50] sm:$0xff]
        %v1304 = vld [vmem:[#allocation2 + $0x60] sm:$0xff]
        %v1305 = vld [vmem:[#allocation2 + $0x68] sm:$0xff]
        %v1306 = vld [vmem:[#allocation2 + $0x78] sm:$0xff]
        %v1307 = vld [vmem:[#allocation2 + $0x80] sm:$0xff]
        %v1308 = vld [vmem:[#allocation2 + $0x90] sm:$0xff]
        %v1309 = vld [vmem:[#allocation2 + $0x98] sm:$0xff]
        %v1310 = vld [vmem:[#allocation2 + $0xa8] sm:$0xff]
        %v1311 = vld [vmem:[#allocation2 + $0xb0] sm:$0xff]
        %v1312 = vld [vmem:[#allocation2 + $0xc0] sm:$0xff]
        %v1313 = vld [vmem:[#allocation2 + $0xc8] sm:$0xff]
        %v1314 = vld [vmem:[#allocation2 + $0xd8] sm:$0xff]
        %v1315 = vld [vmem:[#allocation2 + $0xe0] sm:$0xff]
        %v1316 = vld [vmem:[#allocation2 + $0xf0] sm:$0xff]
        %v1317 = vld [vmem:[#allocation2 + $0xf8] sm:$0xff]
        %v1318 = vld [vmem:[#allocation2 + $0x108] sm:$0xff]
        %v1319 = vld [vmem:[#allocation2 + $0x110] sm:$0xff]
        %v1320 = vld [vmem:[#allocation2 + $0x120] sm:$0xff]
        %v1321 = vld [vmem:[#allocation2 + $0x128] sm:$0xff]
        %v1322 = vld [vmem:[#allocation2 + $0x138] sm:$0xff]
        %v1323 = vld [vmem:[#allocation2 + $0x140] sm:$0xff]
        %v1324 = vld [vmem:[#allocation2 + $0x150] sm:$0xff]
        %v1325 = vld [vmem:[#allocation2 + $0x158] sm:$0xff]
        %v1326 = vld [vmem:[#allocation2 + $0x168] sm:$0xff]
        %v1327 = vld [vmem:[#allocation2 + $0x170] sm:$0xff]
        %v1328 = vpack.c.bf16 %v1297, %v1296
        %v1329 = vpack.c.bf16 %v1299, %v1298
        %v1330 = vpack.c.bf16 %v1301, %v1300
        %v1331 = vpack.c.bf16 %v1303, %v1302
        %v1332 = vpack.c.bf16 %v1305, %v1304
        %v1333 = vpack.c.bf16 %v1307, %v1306
        %v1334 = vpack.c.bf16 %v1309, %v1308
        %v1335 = vpack.c.bf16 %v1311, %v1310
        %v1336 = vpack.c.bf16 %v1313, %v1312
        %v1337 = vpack.c.bf16 %v1315, %v1314
        %v1338 = vpack.c.bf16 %v1317, %v1316
        %v1339 = vpack.c.bf16 %v1319, %v1318
        %v1340 = vpack.c.bf16 %v1321, %v1320
        %v1341 = vpack.c.bf16 %v1323, %v1322
        %v1342 = vpack.c.bf16 %v1325, %v1324
        %v1343 = vpack.c.bf16 %v1327, %v1326
        %v1344 = vld [vmem:[%s6] sm:$0xf]
        %v1345 = vld [vmem:[%s6 + $0x4] sm:$0xf]
        %v1346 = vld [vmem:[%s6 + $0x8] sm:$0xf]
        %v1347 = vld [vmem:[%s6 + $0xc] sm:$0xf]
        %v1348 = vld [vmem:[%s6 + $0x10] sm:$0xf]
        %v1349 = vld [vmem:[%s6 + $0x14] sm:$0xf]
        %v1350 = vld [vmem:[%s6 + $0x18] sm:$0xf]
        %v1351 = vld [vmem:[%s6 + $0x1c] sm:$0xf]
        %v1352 = vld [vmem:[%s6 + $0x20] sm:$0xf]
        %v1353 = vld [vmem:[%s6 + $0x24] sm:$0xf]
        %v1354 = vld [vmem:[%s6 + $0x28] sm:$0xf]
        %v1355 = vld [vmem:[%s6 + $0x2c] sm:$0xf]
        %v1356 = vld [vmem:[%s6 + $0x30] sm:$0xf]
        %v1357 = vld [vmem:[%s6 + $0x34] sm:$0xf]
        %v1358 = vld [vmem:[%s6 + $0x38] sm:$0xf]
        %v1359 = vld [vmem:[%s6 + $0x3c] sm:$0xf]
        %v1360 = vld [vmem:[#allocation2 + $0x1] sm:$0xff]
        %v1361 = vld [vmem:[#allocation2 + $0x9] sm:$0xff]
        %v1362 = vld [vmem:[#allocation2 + $0x19] sm:$0xff]
        %v1363 = vld [vmem:[#allocation2 + $0x21] sm:$0xff]
        %v1364 = vld [vmem:[#allocation2 + $0x31] sm:$0xff]
        %v1365 = vld [vmem:[#allocation2 + $0x39] sm:$0xff]
        %v1366 = vld [vmem:[#allocation2 + $0x49] sm:$0xff]
        %v1367 = vld [vmem:[#allocation2 + $0x51] sm:$0xff]
        %v1368 = vld [vmem:[#allocation2 + $0x61] sm:$0xff]
        %v1369 = vld [vmem:[#allocation2 + $0x69] sm:$0xff]
        %v1370 = vld [vmem:[#allocation2 + $0x79] sm:$0xff]
        %v1371 = vld [vmem:[#allocation2 + $0x81] sm:$0xff]
        %v1372 = vld [vmem:[#allocation2 + $0x91] sm:$0xff]
        %v1373 = vld [vmem:[#allocation2 + $0x99] sm:$0xff]
        %v1374 = vld [vmem:[#allocation2 + $0xa9] sm:$0xff]
        %v1375 = vld [vmem:[#allocation2 + $0xb1] sm:$0xff]
        %v1376 = vld [vmem:[#allocation2 + $0xc1] sm:$0xff]
        %v1377 = vld [vmem:[#allocation2 + $0xc9] sm:$0xff]
        %v1378 = vld [vmem:[#allocation2 + $0xd9] sm:$0xff]
        %v1379 = vld [vmem:[#allocation2 + $0xe1] sm:$0xff]
        %v1380 = vld [vmem:[#allocation2 + $0xf1] sm:$0xff]
        %v1381 = vld [vmem:[#allocation2 + $0xf9] sm:$0xff]
        %v1382 = vld [vmem:[#allocation2 + $0x109] sm:$0xff]
        %v1383 = vld [vmem:[#allocation2 + $0x111] sm:$0xff]
        %v1384 = vld [vmem:[#allocation2 + $0x121] sm:$0xff]
        %v1385 = vld [vmem:[#allocation2 + $0x129] sm:$0xff]
        %v1386 = vld [vmem:[#allocation2 + $0x139] sm:$0xff]
        %v1387 = vld [vmem:[#allocation2 + $0x141] sm:$0xff]
        %v1388 = vld [vmem:[#allocation2 + $0x151] sm:$0xff]
        %v1389 = vld [vmem:[#allocation2 + $0x159] sm:$0xff]
        %v1390 = vld [vmem:[#allocation2 + $0x169] sm:$0xff]
        %v1391 = vld [vmem:[#allocation2 + $0x171] sm:$0xff]
        %v1392 = vpack.c.bf16 %v1361, %v1360
        %v1393 = vpack.c.bf16 %v1363, %v1362
        %v1394 = vpack.c.bf16 %v1365, %v1364
        %v1395 = vpack.c.bf16 %v1367, %v1366
        %v1396 = vpack.c.bf16 %v1369, %v1368
        %v1397 = vpack.c.bf16 %v1371, %v1370
        %v1398 = vpack.c.bf16 %v1373, %v1372
        %v1399 = vpack.c.bf16 %v1375, %v1374
        %v1400 = vpack.c.bf16 %v1377, %v1376
        %v1401 = vpack.c.bf16 %v1379, %v1378
        %v1402 = vpack.c.bf16 %v1381, %v1380
        %v1403 = vpack.c.bf16 %v1383, %v1382
        %v1404 = vpack.c.bf16 %v1385, %v1384
        %v1405 = vpack.c.bf16 %v1387, %v1386
        %v1406 = vpack.c.bf16 %v1389, %v1388
        %v1407 = vpack.c.bf16 %v1391, %v1390
        %s1408 = scalar_lea.vmem %s6, 64
        %v1409 = vld [vmem:[%s1408] sm:$0xf]
        %v1410 = vld [vmem:[%s1408 + $0x4] sm:$0xf]
        %v1411 = vld [vmem:[%s1408 + $0x8] sm:$0xf]
        %v1412 = vld [vmem:[%s1408 + $0xc] sm:$0xf]
        %v1413 = vld [vmem:[%s1408 + $0x10] sm:$0xf]
        %v1414 = vld [vmem:[%s1408 + $0x14] sm:$0xf]
        %v1415 = vld [vmem:[%s1408 + $0x18] sm:$0xf]
        %v1416 = vld [vmem:[%s1408 + $0x1c] sm:$0xf]
        %v1417 = vld [vmem:[%s1408 + $0x20] sm:$0xf]
        %v1418 = vld [vmem:[%s1408 + $0x24] sm:$0xf]
        %v1419 = vld [vmem:[%s1408 + $0x28] sm:$0xf]
        %v1420 = vld [vmem:[%s1408 + $0x2c] sm:$0xf]
        %v1421 = vld [vmem:[%s1408 + $0x30] sm:$0xf]
        %v1422 = vld [vmem:[%s1408 + $0x34] sm:$0xf]
        %v1423 = vld [vmem:[%s1408 + $0x38] sm:$0xf]
        %v1424 = vld [vmem:[%s1408 + $0x3c] sm:$0xf]
        %v1441 = vunpack.c.l.b16 %v1409
        %v1442 = vunpack.c.l.b16 %v1410
        %v1443 = vunpack.c.l.b16 %v1411
        %v1444 = vunpack.c.l.b16 %v1412
        %v1445 = vunpack.c.l.b16 %v1413
        %v1446 = vunpack.c.l.b16 %v1414
        %v1447 = vunpack.c.l.b16 %v1415
        %v1448 = vunpack.c.l.b16 %v1416
        %v1449 = vunpack.c.l.b16 %v1417
        %v1450 = vunpack.c.l.b16 %v1418
        %v1451 = vunpack.c.l.b16 %v1419
        %v1452 = vunpack.c.l.b16 %v1420
        %v1453 = vunpack.c.l.b16 %v1421
        %v1454 = vunpack.c.l.b16 %v1422
        %v1455 = vunpack.c.l.b16 %v1423
        %v1456 = vunpack.c.l.b16 %v1424
        %v1457 = vpack.c.b16 %v1442, %v1441
        %v1458 = vpack.c.b16 %v1444, %v1443
        %v1459 = vpack.c.b16 %v1446, %v1445
        %v1460 = vpack.c.b16 %v1448, %v1447
        %v1461 = vpack.c.b16 %v1450, %v1449
        %v1462 = vpack.c.b16 %v1452, %v1451
        %v1463 = vpack.c.b16 %v1454, %v1453
        %v1464 = vpack.c.b16 %v1456, %v1455
        %1473 = vmatprep.subr.bf16.mxu0 0
        %1474 = vmatpush1.bf16.msra.mxu0 %v1457
        %1475 = vmatprep.subr.bf16.mxu0 0
        %1476 = vmatpush1.bf16.msra.mxu0 %v1458
        %1477 = vmatprep.subr.bf16.mxu0 0
        %1478 = vmatpush1.bf16.msra.mxu0 %v1459
        %1479 = vmatprep.subr.bf16.mxu0 0
        %1480 = vmatpush1.bf16.msra.mxu0 %v1460
        %1481 = vmatprep.subr.bf16.mxu0 0
        %1482 = vmatpush1.bf16.msra.mxu0 %v1461
        %1483 = vmatprep.subr.bf16.mxu0 0
        %1484 = vmatpush1.bf16.msra.mxu0 %v1462
        %1485 = vmatprep.subr.bf16.mxu0 0
        %1486 = vmatpush1.bf16.msra.mxu0 %v1463
        %1487 = vmatprep.subr.bf16.mxu0 0
        %1488 = vmatpush1.bf16.msra.mxu0 %v1464
        %1489 = vmatprep.subr.bf16.mxu0 0
        %1490 = vmatpush1.bf16.msra.mxu0 0
        %1491 = vmatprep.subr.bf16.mxu0 0
        %1492 = vmatpush1.bf16.msra.mxu0 0
        %1493 = vmatprep.subr.bf16.mxu0 0
        %1494 = vmatpush1.bf16.msra.mxu0 0
        %1495 = vmatprep.subr.bf16.mxu0 0
        %1496 = vmatpush1.bf16.msra.mxu0 0
        %1497 = vmatprep.subr.bf16.mxu0 0
        %1498 = vmatpush1.bf16.msra.mxu0 0
        %1499 = vmatprep.subr.bf16.mxu0 0
        %1500 = vmatpush1.bf16.msra.mxu0 0
        %1501 = vmatprep.subr.bf16.mxu0 0
        %1502 = vmatpush1.bf16.msra.mxu0 0
        %1503 = vmatprep.subr.bf16.mxu0 0
        %1504 = vmatpush1.bf16.msra.mxu0 0
        %1505 = vmatprep.mubr.bf16.mxu0 0
        %1506 = vmatmul.mubr.bf16.gmra.mrb[0].mxu0 %v1392
        %v1507 = vpop.f32.mrb[0].mxu0
        %v1508 = vadd.f32 0.0, %v1507
        %v1509 = vpop.f32.mrb[0].mxu0
        %v1510 = vpop.f32.mrb[0].mxu0
        %v1511 = vadd.f32 0.0, %v1510
        %v1512 = vpop.f32.mrb[0].mxu0
        %1513 = vmatprep.mubr.bf16.mxu0 0
        %1514 = vmatmul.mubr.bf16.gmra.mrb[0].mxu0 %v1393
        %v1515 = vpop.f32.mrb[0].mxu0
        %v1516 = vadd.f32 0.0, %v1515
        %v1517 = vpop.f32.mrb[0].mxu0
        %v1518 = vpop.f32.mrb[0].mxu0
        %v1519 = vadd.f32 0.0, %v1518
        %v1520 = vpop.f32.mrb[0].mxu0
        %1521 = vmatprep.mubr.bf16.mxu0 0
        %1522 = vmatmul.mubr.bf16.gmra.mrb[0].mxu0 %v1394
        %v1523 = vpop.f32.mrb[0].mxu0
        %v1524 = vadd.f32 0.0, %v1523
        %v1525 = vpop.f32.mrb[0].mxu0
        %v1526 = vpop.f32.mrb[0].mxu0
        %v1527 = vadd.f32 0.0, %v1526
        %v1528 = vpop.f32.mrb[0].mxu0
        %1529 = vmatprep.mubr.bf16.mxu0 0
        %1530 = vmatmul.mubr.bf16.gmra.mrb[0].mxu0 %v1395
        %v1531 = vpop.f32.mrb[0].mxu0
        %v1532 = vadd.f32 0.0, %v1531
        %v1533 = vpop.f32.mrb[0].mxu0
        %v1534 = vpop.f32.mrb[0].mxu0
        %v1535 = vadd.f32 0.0, %v1534
        %v1536 = vpop.f32.mrb[0].mxu0
        %1537 = vmatprep.mubr.bf16.mxu0 0
        %1538 = vmatmul.mubr.bf16.gmra.mrb[0].mxu0 %v1396
        %v1539 = vpop.f32.mrb[0].mxu0
        %v1540 = vadd.f32 0.0, %v1539
        %v1541 = vpop.f32.mrb[0].mxu0
        %v1542 = vpop.f32.mrb[0].mxu0
        %v1543 = vadd.f32 0.0, %v1542
        %v1544 = vpop.f32.mrb[0].mxu0
        %1545 = vmatprep.mubr.bf16.mxu0 0
        %1546 = vmatmul.mubr.bf16.gmra.mrb[0].mxu0 %v1397
        %v1547 = vpop.f32.mrb[0].mxu0
        %v1548 = vadd.f32 0.0, %v1547
        %v1549 = vpop.f32.mrb[0].mxu0
        %v1550 = vpop.f32.mrb[0].mxu0
        %v1551 = vadd.f32 0.0, %v1550
        %v1552 = vpop.f32.mrb[0].mxu0
        %1553 = vmatprep.mubr.bf16.mxu0 0
        %1554 = vmatmul.mubr.bf16.gmra.mrb[0].mxu0 %v1398
        %v1555 = vpop.f32.mrb[0].mxu0
        %v1556 = vadd.f32 0.0, %v1555
        %v1557 = vpop.f32.mrb[0].mxu0
        %v1558 = vpop.f32.mrb[0].mxu0
        %v1559 = vadd.f32 0.0, %v1558
        %v1560 = vpop.f32.mrb[0].mxu0
        %1561 = vmatprep.mubr.bf16.mxu0 0
        %1562 = vmatmul.mubr.bf16.gmra.mrb[0].mxu0 %v1399
        %v1563 = vpop.f32.mrb[0].mxu0
        %v1564 = vadd.f32 0.0, %v1563
        %v1565 = vpop.f32.mrb[0].mxu0
        %v1566 = vpop.f32.mrb[0].mxu0
        %v1567 = vadd.f32 0.0, %v1566
        %v1568 = vpop.f32.mrb[0].mxu0
        %1569 = vmatprep.mubr.bf16.mxu0 0
        %1570 = vmatmul.mubr.bf16.gmra.mrb[0].mxu0 %v1400
        %v1571 = vpop.f32.mrb[0].mxu0
        %v1572 = vadd.f32 0.0, %v1571
        %v1573 = vpop.f32.mrb[0].mxu0
        %v1574 = vpop.f32.mrb[0].mxu0
        %v1575 = vadd.f32 0.0, %v1574
        %v1576 = vpop.f32.mrb[0].mxu0
        %1577 = vmatprep.mubr.bf16.mxu0 0
        %1578 = vmatmul.mubr.bf16.gmra.mrb[0].mxu0 %v1401
        %v1579 = vpop.f32.mrb[0].mxu0
        %v1580 = vadd.f32 0.0, %v1579
        %v1581 = vpop.f32.mrb[0].mxu0
        %v1582 = vpop.f32.mrb[0].mxu0
        %v1583 = vadd.f32 0.0, %v1582
        %v1584 = vpop.f32.mrb[0].mxu0
        %1585 = vmatprep.mubr.bf16.mxu0 0
        %1586 = vmatmul.mubr.bf16.gmra.mrb[0].mxu0 %v1402
        %v1587 = vpop.f32.mrb[0].mxu0
        %v1588 = vadd.f32 0.0, %v1587
        %v1589 = vpop.f32.mrb[0].mxu0
        %v1590 = vpop.f32.mrb[0].mxu0
        %v1591 = vadd.f32 0.0, %v1590
        %v1592 = vpop.f32.mrb[0].mxu0
        %1593 = vmatprep.mubr.bf16.mxu0 0
        %1594 = vmatmul.mubr.bf16.gmra.mrb[0].mxu0 %v1403
        %v1595 = vpop.f32.mrb[0].mxu0
        %v1596 = vadd.f32 0.0, %v1595
        %v1597 = vpop.f32.mrb[0].mxu0
        %v1598 = vpop.f32.mrb[0].mxu0
        %v1599 = vadd.f32 0.0, %v1598
        %v1600 = vpop.f32.mrb[0].mxu0
        %1601 = vmatprep.mubr.bf16.mxu0 0
        %1602 = vmatmul.mubr.bf16.gmra.mrb[0].mxu0 %v1404
        %v1603 = vpop.f32.mrb[0].mxu0
        %v1604 = vadd.f32 0.0, %v1603
        %v1605 = vpop.f32.mrb[0].mxu0
        %v1606 = vpop.f32.mrb[0].mxu0
        %v1607 = vadd.f32 0.0, %v1606
        %v1608 = vpop.f32.mrb[0].mxu0
        %1609 = vmatprep.mubr.bf16.mxu0 0
        %1610 = vmatmul.mubr.bf16.gmra.mrb[0].mxu0 %v1405
        %v1611 = vpop.f32.mrb[0].mxu0
        %v1612 = vadd.f32 0.0, %v1611
        %v1613 = vpop.f32.mrb[0].mxu0
        %v1614 = vpop.f32.mrb[0].mxu0
        %v1615 = vadd.f32 0.0, %v1614
        %v1616 = vpop.f32.mrb[0].mxu0
        %1617 = vmatprep.mubr.bf16.mxu0 0
        %1618 = vmatmul.mubr.bf16.gmra.mrb[0].mxu0 %v1406
        %v1619 = vpop.f32.mrb[0].mxu0
        %v1620 = vadd.f32 0.0, %v1619
        %v1621 = vpop.f32.mrb[0].mxu0
        %v1622 = vpop.f32.mrb[0].mxu0
        %v1623 = vadd.f32 0.0, %v1622
        %v1624 = vpop.f32.mrb[0].mxu0
        %1625 = vmatprep.mubr.bf16.mxu0 0
        %1626 = vmatmul.mubr.bf16.gmra.mrb[0].mxu0 %v1407
        %v1627 = vpop.f32.mrb[0].mxu0
        %v1628 = vadd.f32 0.0, %v1627
        %v1629 = vpop.f32.mrb[0].mxu0
        %v1630 = vpop.f32.mrb[0].mxu0
        %v1631 = vadd.f32 0.0, %v1630
        %v1632 = vpop.f32.mrb[0].mxu0
        %1633 = vdwg.mxu0
        %v1650 = vunpack.c.l.b16 %v1344
        %v1651 = vunpack.c.l.b16 %v1345
        %v1652 = vunpack.c.l.b16 %v1346
        %v1653 = vunpack.c.l.b16 %v1347
        %v1654 = vunpack.c.l.b16 %v1348
        %v1655 = vunpack.c.l.b16 %v1349
        %v1656 = vunpack.c.l.b16 %v1350
        %v1657 = vunpack.c.l.b16 %v1351
        %v1658 = vunpack.c.l.b16 %v1352
        %v1659 = vunpack.c.l.b16 %v1353
        %v1660 = vunpack.c.l.b16 %v1354
        %v1661 = vunpack.c.l.b16 %v1355
        %v1662 = vunpack.c.l.b16 %v1356
        %v1663 = vunpack.c.l.b16 %v1357
        %v1664 = vunpack.c.l.b16 %v1358
        %v1665 = vunpack.c.l.b16 %v1359
        %v1666 = vpack.c.b16 %v1651, %v1650
        %v1667 = vpack.c.b16 %v1653, %v1652
        %v1668 = vpack.c.b16 %v1655, %v1654
        %v1669 = vpack.c.b16 %v1657, %v1656
        %v1670 = vpack.c.b16 %v1659, %v1658
        %v1671 = vpack.c.b16 %v1661, %v1660
        %v1672 = vpack.c.b16 %v1663, %v1662
        %v1673 = vpack.c.b16 %v1665, %v1664
        %1682 = vmatprep.subr.bf16.mxu0 0
        %1683 = vmatpush1.bf16.msra.mxu0 %v1666
        %1684 = vmatprep.subr.bf16.mxu0 0
        %1685 = vmatpush1.bf16.msra.mxu0 %v1667
        %1686 = vmatprep.subr.bf16.mxu0 0
        %1687 = vmatpush1.bf16.msra.mxu0 %v1668
        %1688 = vmatprep.subr.bf16.mxu0 0
        %1689 = vmatpush1.bf16.msra.mxu0 %v1669
        %1690 = vmatprep.subr.bf16.mxu0 0
        %1691 = vmatpush1.bf16.msra.mxu0 %v1670
        %1692 = vmatprep.subr.bf16.mxu0 0
        %1693 = vmatpush1.bf16.msra.mxu0 %v1671
        %1694 = vmatprep.subr.bf16.mxu0 0
        %1695 = vmatpush1.bf16.msra.mxu0 %v1672
        %1696 = vmatprep.subr.bf16.mxu0 0
        %1697 = vmatpush1.bf16.msra.mxu0 %v1673
        %1698 = vmatprep.subr.bf16.mxu0 0
        %1699 = vmatpush1.bf16.msra.mxu0 0
        %1700 = vmatprep.subr.bf16.mxu0 0
        %1701 = vmatpush1.bf16.msra.mxu0 0
        %1702 = vmatprep.subr.bf16.mxu0 0
        %1703 = vmatpush1.bf16.msra.mxu0 0
        %1704 = vmatprep.subr.bf16.mxu0 0
        %1705 = vmatpush1.bf16.msra.mxu0 0
        %1706 = vmatprep.subr.bf16.mxu0 0
        %1707 = vmatpush1.bf16.msra.mxu0 0
        %1708 = vmatprep.subr.bf16.mxu0 0
        %1709 = vmatpush1.bf16.msra.mxu0 0
        %1710 = vmatprep.subr.bf16.mxu0 0
        %1711 = vmatpush1.bf16.msra.mxu0 0
        %1712 = vmatprep.subr.bf16.mxu0 0
        %1713 = vmatpush1.bf16.msra.mxu0 0
        %1714 = vmatprep.mubr.bf16.mxu0 0
        %1715 = vmatmul.mubr.bf16.gmra.mrb[0].mxu0 %v1328
        %v1716 = vpop.f32.mrb[0].mxu0
        %v1717 = vadd.f32 %v1508, %v1716
        %v1718 = vpop.f32.mrb[0].mxu0
        %v1719 = vpop.f32.mrb[0].mxu0
        %v1720 = vadd.f32 %v1511, %v1719
        %v1721 = vpop.f32.mrb[0].mxu0
        %1722 = vmatprep.mubr.bf16.mxu0 0
        %1723 = vmatmul.mubr.bf16.gmra.mrb[0].mxu0 %v1329
        %v1724 = vpop.f32.mrb[0].mxu0
        %v1725 = vadd.f32 %v1516, %v1724
        %v1726 = vpop.f32.mrb[0].mxu0
        %v1727 = vpop.f32.mrb[0].mxu0
        %v1728 = vadd.f32 %v1519, %v1727
        %v1729 = vpop.f32.mrb[0].mxu0
        %1730 = vmatprep.mubr.bf16.mxu0 0
        %1731 = vmatmul.mubr.bf16.gmra.mrb[0].mxu0 %v1330
        %v1732 = vpop.f32.mrb[0].mxu0
        %v1733 = vadd.f32 %v1524, %v1732
        %v1734 = vpop.f32.mrb[0].mxu0
        %v1735 = vpop.f32.mrb[0].mxu0
        %v1736 = vadd.f32 %v1527, %v1735
        %v1737 = vpop.f32.mrb[0].mxu0
        %1738 = vmatprep.mubr.bf16.mxu0 0
        %1739 = vmatmul.mubr.bf16.gmra.mrb[0].mxu0 %v1331
        %v1740 = vpop.f32.mrb[0].mxu0
        %v1741 = vadd.f32 %v1532, %v1740
        %v1742 = vpop.f32.mrb[0].mxu0
        %v1743 = vpop.f32.mrb[0].mxu0
        %v1744 = vadd.f32 %v1535, %v1743
        %v1745 = vpop.f32.mrb[0].mxu0
        %1746 = vmatprep.mubr.bf16.mxu0 0
        %1747 = vmatmul.mubr.bf16.gmra.mrb[0].mxu0 %v1332
        %v1748 = vpop.f32.mrb[0].mxu0
        %v1749 = vadd.f32 %v1540, %v1748
        %v1750 = vpop.f32.mrb[0].mxu0
        %v1751 = vpop.f32.mrb[0].mxu0
        %v1752 = vadd.f32 %v1543, %v1751
        %v1753 = vpop.f32.mrb[0].mxu0
        %1754 = vmatprep.mubr.bf16.mxu0 0
        %1755 = vmatmul.mubr.bf16.gmra.mrb[0].mxu0 %v1333
        %v1756 = vpop.f32.mrb[0].mxu0
        %v1757 = vadd.f32 %v1548, %v1756
        %v1758 = vpop.f32.mrb[0].mxu0
        %v1759 = vpop.f32.mrb[0].mxu0
        %v1760 = vadd.f32 %v1551, %v1759
        %v1761 = vpop.f32.mrb[0].mxu0
        %1762 = vmatprep.mubr.bf16.mxu0 0
        %1763 = vmatmul.mubr.bf16.gmra.mrb[0].mxu0 %v1334
        %v1764 = vpop.f32.mrb[0].mxu0
        %v1765 = vadd.f32 %v1556, %v1764
        %v1766 = vpop.f32.mrb[0].mxu0
        %v1767 = vpop.f32.mrb[0].mxu0
        %v1768 = vadd.f32 %v1559, %v1767
        %v1769 = vpop.f32.mrb[0].mxu0
        %1770 = vmatprep.mubr.bf16.mxu0 0
        %1771 = vmatmul.mubr.bf16.gmra.mrb[0].mxu0 %v1335
        %v1772 = vpop.f32.mrb[0].mxu0
        %v1773 = vadd.f32 %v1564, %v1772
        %v1774 = vpop.f32.mrb[0].mxu0
        %v1775 = vpop.f32.mrb[0].mxu0
        %v1776 = vadd.f32 %v1567, %v1775
        %v1777 = vpop.f32.mrb[0].mxu0
        %1778 = vmatprep.mubr.bf16.mxu0 0
        %1779 = vmatmul.mubr.bf16.gmra.mrb[0].mxu0 %v1336
        %v1780 = vpop.f32.mrb[0].mxu0
        %v1781 = vadd.f32 %v1572, %v1780
        %v1782 = vpop.f32.mrb[0].mxu0
        %v1783 = vpop.f32.mrb[0].mxu0
        %v1784 = vadd.f32 %v1575, %v1783
        %v1785 = vpop.f32.mrb[0].mxu0
        %1786 = vmatprep.mubr.bf16.mxu0 0
        %1787 = vmatmul.mubr.bf16.gmra.mrb[0].mxu0 %v1337
        %v1788 = vpop.f32.mrb[0].mxu0
        %v1789 = vadd.f32 %v1580, %v1788
        %v1790 = vpop.f32.mrb[0].mxu0
        %v1791 = vpop.f32.mrb[0].mxu0
        %v1792 = vadd.f32 %v1583, %v1791
        %v1793 = vpop.f32.mrb[0].mxu0
        %1794 = vmatprep.mubr.bf16.mxu0 0
        %1795 = vmatmul.mubr.bf16.gmra.mrb[0].mxu0 %v1338
        %v1796 = vpop.f32.mrb[0].mxu0
        %v1797 = vadd.f32 %v1588, %v1796
        %v1798 = vpop.f32.mrb[0].mxu0
        %v1799 = vpop.f32.mrb[0].mxu0
        %v1800 = vadd.f32 %v1591, %v1799
        %v1801 = vpop.f32.mrb[0].mxu0
        %1802 = vmatprep.mubr.bf16.mxu0 0
        %1803 = vmatmul.mubr.bf16.gmra.mrb[0].mxu0 %v1339
        %v1804 = vpop.f32.mrb[0].mxu0
        %v1805 = vadd.f32 %v1596, %v1804
        %v1806 = vpop.f32.mrb[0].mxu0
        %v1807 = vpop.f32.mrb[0].mxu0
        %v1808 = vadd.f32 %v1599, %v1807
        %v1809 = vpop.f32.mrb[0].mxu0
        %1810 = vmatprep.mubr.bf16.mxu0 0
        %1811 = vmatmul.mubr.bf16.gmra.mrb[0].mxu0 %v1340
        %v1812 = vpop.f32.mrb[0].mxu0
        %v1813 = vadd.f32 %v1604, %v1812
        %v1814 = vpop.f32.mrb[0].mxu0
        %v1815 = vpop.f32.mrb[0].mxu0
        %v1816 = vadd.f32 %v1607, %v1815
        %v1817 = vpop.f32.mrb[0].mxu0
        %1818 = vmatprep.mubr.bf16.mxu0 0
        %1819 = vmatmul.mubr.bf16.gmra.mrb[0].mxu0 %v1341
        %v1820 = vpop.f32.mrb[0].mxu0
        %v1821 = vadd.f32 %v1612, %v1820
        %v1822 = vpop.f32.mrb[0].mxu0
        %v1823 = vpop.f32.mrb[0].mxu0
        %v1824 = vadd.f32 %v1615, %v1823
        %v1825 = vpop.f32.mrb[0].mxu0
        %1826 = vmatprep.mubr.bf16.mxu0 0
        %1827 = vmatmul.mubr.bf16.gmra.mrb[0].mxu0 %v1342
        %v1828 = vpop.f32.mrb[0].mxu0
        %v1829 = vadd.f32 %v1620, %v1828
        %v1830 = vpop.f32.mrb[0].mxu0
        %v1831 = vpop.f32.mrb[0].mxu0
        %v1832 = vadd.f32 %v1623, %v1831
        %v1833 = vpop.f32.mrb[0].mxu0
        %1834 = vmatprep.mubr.bf16.mxu0 0
        %1835 = vmatmul.mubr.bf16.gmra.mrb[0].mxu0 %v1343
        %v1836 = vpop.f32.mrb[0].mxu0
        %v1837 = vadd.f32 %v1628, %v1836
        %v1838 = vpop.f32.mrb[0].mxu0
        %v1839 = vpop.f32.mrb[0].mxu0
        %v1840 = vadd.f32 %v1631, %v1839
        %v1841 = vpop.f32.mrb[0].mxu0
        %1842 = vdwg.mxu0
        %v1843 = vld [vmem:[#allocation2 + $0x2] sm:$0xff]
        %v1844 = vld [vmem:[#allocation2 + $0xa] sm:$0xff]
        %v1845 = vld [vmem:[#allocation2 + $0x1a] sm:$0xff]
        %v1846 = vld [vmem:[#allocation2 + $0x22] sm:$0xff]
        %v1847 = vld [vmem:[#allocation2 + $0x32] sm:$0xff]
        %v1848 = vld [vmem:[#allocation2 + $0x3a] sm:$0xff]
        %v1849 = vld [vmem:[#allocation2 + $0x4a] sm:$0xff]
        %v1850 = vld [vmem:[#allocation2 + $0x52] sm:$0xff]
        %v1851 = vld [vmem:[#allocation2 + $0x62] sm:$0xff]
        %v1852 = vld [vmem:[#allocation2 + $0x6a] sm:$0xff]
        %v1853 = vld [vmem:[#allocation2 + $0x7a] sm:$0xff]
        %v1854 = vld [vmem:[#allocation2 + $0x82] sm:$0xff]
        %v1855 = vld [vmem:[#allocation2 + $0x92] sm:$0xff]
        %v1856 = vld [vmem:[#allocation2 + $0x9a] sm:$0xff]
        %v1857 = vld [vmem:[#allocation2 + $0xaa] sm:$0xff]
        %v1858 = vld [vmem:[#allocation2 + $0xb2] sm:$0xff]
        %v1859 = vld [vmem:[#allocation2 + $0xc2] sm:$0xff]
        %v1860 = vld [vmem:[#allocation2 + $0xca] sm:$0xff]
        %v1861 = vld [vmem:[#allocation2 + $0xda] sm:$0xff]
        %v1862 = vld [vmem:[#allocation2 + $0xe2] sm:$0xff]
        %v1863 = vld [vmem:[#allocation2 + $0xf2] sm:$0xff]
        %v1864 = vld [vmem:[#allocation2 + $0xfa] sm:$0xff]
        %v1865 = vld [vmem:[#allocation2 + $0x10a] sm:$0xff]
        %v1866 = vld [vmem:[#allocation2 + $0x112] sm:$0xff]
        %v1867 = vld [vmem:[#allocation2 + $0x122] sm:$0xff]
        %v1868 = vld [vmem:[#allocation2 + $0x12a] sm:$0xff]
        %v1869 = vld [vmem:[#allocation2 + $0x13a] sm:$0xff]
        %v1870 = vld [vmem:[#allocation2 + $0x142] sm:$0xff]
        %v1871 = vld [vmem:[#allocation2 + $0x152] sm:$0xff]
        %v1872 = vld [vmem:[#allocation2 + $0x15a] sm:$0xff]
        %v1873 = vld [vmem:[#allocation2 + $0x16a] sm:$0xff]
        %v1874 = vld [vmem:[#allocation2 + $0x172] sm:$0xff]
        %v1875 = vpack.c.bf16 %v1844, %v1843
        %v1876 = vpack.c.bf16 %v1846, %v1845
        %v1877 = vpack.c.bf16 %v1848, %v1847
        %v1878 = vpack.c.bf16 %v1850, %v1849
        %v1879 = vpack.c.bf16 %v1852, %v1851
        %v1880 = vpack.c.bf16 %v1854, %v1853
        %v1881 = vpack.c.bf16 %v1856, %v1855
        %v1882 = vpack.c.bf16 %v1858, %v1857
        %v1883 = vpack.c.bf16 %v1860, %v1859
        %v1884 = vpack.c.bf16 %v1862, %v1861
        %v1885 = vpack.c.bf16 %v1864, %v1863
        %v1886 = vpack.c.bf16 %v1866, %v1865
        %v1887 = vpack.c.bf16 %v1868, %v1867
        %v1888 = vpack.c.bf16 %v1870, %v1869
        %v1889 = vpack.c.bf16 %v1872, %v1871
        %v1890 = vpack.c.bf16 %v1874, %v1873
        %s1891 = scalar_lea.vmem %s6, 128
        %v1892 = vld [vmem:[%s1891] sm:$0xf]
        %v1893 = vld [vmem:[%s1891 + $0x4] sm:$0xf]
        %v1894 = vld [vmem:[%s1891 + $0x8] sm:$0xf]
        %v1895 = vld [vmem:[%s1891 + $0xc] sm:$0xf]
        %v1896 = vld [vmem:[%s1891 + $0x10] sm:$0xf]
        %v1897 = vld [vmem:[%s1891 + $0x14] sm:$0xf]
        %v1898 = vld [vmem:[%s1891 + $0x18] sm:$0xf]
        %v1899 = vld [vmem:[%s1891 + $0x1c] sm:$0xf]
        %v1900 = vld [vmem:[%s1891 + $0x20] sm:$0xf]
        %v1901 = vld [vmem:[%s1891 + $0x24] sm:$0xf]
        %v1902 = vld [vmem:[%s1891 + $0x28] sm:$0xf]
        %v1903 = vld [vmem:[%s1891 + $0x2c] sm:$0xf]
        %v1904 = vld [vmem:[%s1891 + $0x30] sm:$0xf]
        %v1905 = vld [vmem:[%s1891 + $0x34] sm:$0xf]
        %v1906 = vld [vmem:[%s1891 + $0x38] sm:$0xf]
        %v1907 = vld [vmem:[%s1891 + $0x3c] sm:$0xf]
        %v1924 = vunpack.c.l.b16 %v1892
        %v1925 = vunpack.c.l.b16 %v1893
        %v1926 = vunpack.c.l.b16 %v1894
        %v1927 = vunpack.c.l.b16 %v1895
        %v1928 = vunpack.c.l.b16 %v1896
        %v1929 = vunpack.c.l.b16 %v1897
        %v1930 = vunpack.c.l.b16 %v1898
        %v1931 = vunpack.c.l.b16 %v1899
        %v1932 = vunpack.c.l.b16 %v1900
        %v1933 = vunpack.c.l.b16 %v1901
        %v1934 = vunpack.c.l.b16 %v1902
        %v1935 = vunpack.c.l.b16 %v1903
        %v1936 = vunpack.c.l.b16 %v1904
        %v1937 = vunpack.c.l.b16 %v1905
        %v1938 = vunpack.c.l.b16 %v1906
        %v1939 = vunpack.c.l.b16 %v1907
        %v1940 = vpack.c.b16 %v1925, %v1924
        %v1941 = vpack.c.b16 %v1927, %v1926
        %v1942 = vpack.c.b16 %v1929, %v1928
        %v1943 = vpack.c.b16 %v1931, %v1930
        %v1944 = vpack.c.b16 %v1933, %v1932
        %v1945 = vpack.c.b16 %v1935, %v1934
        %v1946 = vpack.c.b16 %v1937, %v1936
        %v1947 = vpack.c.b16 %v1939, %v1938
        %1956 = vmatprep.subr.bf16.mxu0 0
        %1957 = vmatpush1.bf16.msra.mxu0 %v1940
        %1958 = vmatprep.subr.bf16.mxu0 0
        %1959 = vmatpush1.bf16.msra.mxu0 %v1941
        %1960 = vmatprep.subr.bf16.mxu0 0
        %1961 = vmatpush1.bf16.msra.mxu0 %v1942
        %1962 = vmatprep.subr.bf16.mxu0 0
        %1963 = vmatpush1.bf16.msra.mxu0 %v1943
        %1964 = vmatprep.subr.bf16.mxu0 0
        %1965 = vmatpush1.bf16.msra.mxu0 %v1944
        %1966 = vmatprep.subr.bf16.mxu0 0
        %1967 = vmatpush1.bf16.msra.mxu0 %v1945
        %1968 = vmatprep.subr.bf16.mxu0 0
        %1969 = vmatpush1.bf16.msra.mxu0 %v1946
        %1970 = vmatprep.subr.bf16.mxu0 0
        %1971 = vmatpush1.bf16.msra.mxu0 %v1947
        %1972 = vmatprep.subr.bf16.mxu0 0
        %1973 = vmatpush1.bf16.msra.mxu0 0
        %1974 = vmatprep.subr.bf16.mxu0 0
        %1975 = vmatpush1.bf16.msra.mxu0 0
        %1976 = vmatprep.subr.bf16.mxu0 0
        %1977 = vmatpush1.bf16.msra.mxu0 0
        %1978 = vmatprep.subr.bf16.mxu0 0
        %1979 = vmatpush1.bf16.msra.mxu0 0
        %1980 = vmatprep.subr.bf16.mxu0 0
        %1981 = vmatpush1.bf16.msra.mxu0 0
        %1982 = vmatprep.subr.bf16.mxu0 0
        %1983 = vmatpush1.bf16.msra.mxu0 0
        %1984 = vmatprep.subr.bf16.mxu0 0
        %1985 = vmatpush1.bf16.msra.mxu0 0
        %1986 = vmatprep.subr.bf16.mxu0 0
        %1987 = vmatpush1.bf16.msra.mxu0 0
        %1988 = vmatprep.mubr.bf16.mxu0 0
        %1989 = vmatmul.mubr.bf16.gmra.mrb[0].mxu0 %v1875
        %v1990 = vpop.f32.mrb[0].mxu0
        %v1991 = vadd.f32 0.0, %v1990
        %v1992 = vpop.f32.mrb[0].mxu0
        %v1993 = vpop.f32.mrb[0].mxu0
        %v1994 = vadd.f32 0.0, %v1993
        %v1995 = vpop.f32.mrb[0].mxu0
        %1996 = vmatprep.mubr.bf16.mxu0 0
        %1997 = vmatmul.mubr.bf16.gmra.mrb[0].mxu0 %v1876
        %v1998 = vpop.f32.mrb[0].mxu0
        %v1999 = vadd.f32 0.0, %v1998
        %v2000 = vpop.f32.mrb[0].mxu0
        %v2001 = vpop.f32.mrb[0].mxu0
        %v2002 = vadd.f32 0.0, %v2001
        %v2003 = vpop.f32.mrb[0].mxu0
        %2004 = vmatprep.mubr.bf16.mxu0 0
        %2005 = vmatmul.mubr.bf16.gmra.mrb[0].mxu0 %v1877
        %v2006 = vpop.f32.mrb[0].mxu0
        %v2007 = vadd.f32 0.0, %v2006
        %v2008 = vpop.f32.mrb[0].mxu0
        %v2009 = vpop.f32.mrb[0].mxu0
        %v2010 = vadd.f32 0.0, %v2009
        %v2011 = vpop.f32.mrb[0].mxu0
        %2012 = vmatprep.mubr.bf16.mxu0 0
        %2013 = vmatmul.mubr.bf16.gmra.mrb[0].mxu0 %v1878
        %v2014 = vpop.f32.mrb[0].mxu0
        %v2015 = vadd.f32 0.0, %v2014
        %v2016 = vpop.f32.mrb[0].mxu0
        %v2017 = vpop.f32.mrb[0].mxu0
        %v2018 = vadd.f32 0.0, %v2017
        %v2019 = vpop.f32.mrb[0].mxu0
        %2020 = vmatprep.mubr.bf16.mxu0 0
        %2021 = vmatmul.mubr.bf16.gmra.mrb[0].mxu0 %v1879
        %v2022 = vpop.f32.mrb[0].mxu0
        %v2023 = vadd.f32 0.0, %v2022
        %v2024 = vpop.f32.mrb[0].mxu0
        %v2025 = vpop.f32.mrb[0].mxu0
        %v2026 = vadd.f32 0.0, %v2025
        %v2027 = vpop.f32.mrb[0].mxu0
        %2028 = vmatprep.mubr.bf16.mxu0 0
        %2029 = vmatmul.mubr.bf16.gmra.mrb[0].mxu0 %v1880
        %v2030 = vpop.f32.mrb[0].mxu0
        %v2031 = vadd.f32 0.0, %v2030
        %v2032 = vpop.f32.mrb[0].mxu0
        %v2033 = vpop.f32.mrb[0].mxu0
        %v2034 = vadd.f32 0.0, %v2033
        %v2035 = vpop.f32.mrb[0].mxu0
        %2036 = vmatprep.mubr.bf16.mxu0 0
        %2037 = vmatmul.mubr.bf16.gmra.mrb[0].mxu0 %v1881
        %v2038 = vpop.f32.mrb[0].mxu0
        %v2039 = vadd.f32 0.0, %v2038
        %v2040 = vpop.f32.mrb[0].mxu0
        %v2041 = vpop.f32.mrb[0].mxu0
        %v2042 = vadd.f32 0.0, %v2041
        %v2043 = vpop.f32.mrb[0].mxu0
        %2044 = vmatprep.mubr.bf16.mxu0 0
        %2045 = vmatmul.mubr.bf16.gmra.mrb[0].mxu0 %v1882
        %v2046 = vpop.f32.mrb[0].mxu0
        %v2047 = vadd.f32 0.0, %v2046
        %v2048 = vpop.f32.mrb[0].mxu0
        %v2049 = vpop.f32.mrb[0].mxu0
        %v2050 = vadd.f32 0.0, %v2049
        %v2051 = vpop.f32.mrb[0].mxu0
        %2052 = vmatprep.mubr.bf16.mxu0 0
        %2053 = vmatmul.mubr.bf16.gmra.mrb[0].mxu0 %v1883
        %v2054 = vpop.f32.mrb[0].mxu0
        %v2055 = vadd.f32 0.0, %v2054
        %v2056 = vpop.f32.mrb[0].mxu0
        %v2057 = vpop.f32.mrb[0].mxu0
        %v2058 = vadd.f32 0.0, %v2057
        %v2059 = vpop.f32.mrb[0].mxu0
        %2060 = vmatprep.mubr.bf16.mxu0 0
        %2061 = vmatmul.mubr.bf16.gmra.mrb[0].mxu0 %v1884
        %v2062 = vpop.f32.mrb[0].mxu0
        %v2063 = vadd.f32 0.0, %v2062
        %v2064 = vpop.f32.mrb[0].mxu0
        %v2065 = vpop.f32.mrb[0].mxu0
        %v2066 = vadd.f32 0.0, %v2065
        %v2067 = vpop.f32.mrb[0].mxu0
        %2068 = vmatprep.mubr.bf16.mxu0 0
        %2069 = vmatmul.mubr.bf16.gmra.mrb[0].mxu0 %v1885
        %v2070 = vpop.f32.mrb[0].mxu0
        %v2071 = vadd.f32 0.0, %v2070
        %v2072 = vpop.f32.mrb[0].mxu0
        %v2073 = vpop.f32.mrb[0].mxu0
        %v2074 = vadd.f32 0.0, %v2073
        %v2075 = vpop.f32.mrb[0].mxu0
        %2076 = vmatprep.mubr.bf16.mxu0 0
        %2077 = vmatmul.mubr.bf16.gmra.mrb[0].mxu0 %v1886
        %v2078 = vpop.f32.mrb[0].mxu0
        %v2079 = vadd.f32 0.0, %v2078
        %v2080 = vpop.f32.mrb[0].mxu0
        %v2081 = vpop.f32.mrb[0].mxu0
        %v2082 = vadd.f32 0.0, %v2081
        %v2083 = vpop.f32.mrb[0].mxu0
        %2084 = vmatprep.mubr.bf16.mxu0 0
        %2085 = vmatmul.mubr.bf16.gmra.mrb[0].mxu0 %v1887
        %v2086 = vpop.f32.mrb[0].mxu0
        %v2087 = vadd.f32 0.0, %v2086
        %v2088 = vpop.f32.mrb[0].mxu0
        %v2089 = vpop.f32.mrb[0].mxu0
        %v2090 = vadd.f32 0.0, %v2089
        %v2091 = vpop.f32.mrb[0].mxu0
        %2092 = vmatprep.mubr.bf16.mxu0 0
        %2093 = vmatmul.mubr.bf16.gmra.mrb[0].mxu0 %v1888
        %v2094 = vpop.f32.mrb[0].mxu0
        %v2095 = vadd.f32 0.0, %v2094
        %v2096 = vpop.f32.mrb[0].mxu0
        %v2097 = vpop.f32.mrb[0].mxu0
        %v2098 = vadd.f32 0.0, %v2097
        %v2099 = vpop.f32.mrb[0].mxu0
        %2100 = vmatprep.mubr.bf16.mxu0 0
        %2101 = vmatmul.mubr.bf16.gmra.mrb[0].mxu0 %v1889
        %v2102 = vpop.f32.mrb[0].mxu0
        %v2103 = vadd.f32 0.0, %v2102
        %v2104 = vpop.f32.mrb[0].mxu0
        %v2105 = vpop.f32.mrb[0].mxu0
        %v2106 = vadd.f32 0.0, %v2105
        %v2107 = vpop.f32.mrb[0].mxu0
        %2108 = vmatprep.mubr.bf16.mxu0 0
        %2109 = vmatmul.mubr.bf16.gmra.mrb[0].mxu0 %v1890
        %v2110 = vpop.f32.mrb[0].mxu0
        %v2111 = vadd.f32 0.0, %v2110
        %v2112 = vpop.f32.mrb[0].mxu0
        %v2113 = vpop.f32.mrb[0].mxu0
        %v2114 = vadd.f32 0.0, %v2113
        %v2115 = vpop.f32.mrb[0].mxu0
        %2116 = vdwg.mxu0
        %v2117 = vadd.f32 %v1717, %v1991
        %v2118 = vadd.f32 %v1720, %v1994
        %v2119 = vadd.f32 %v1725, %v1999
        %v2120 = vadd.f32 %v1728, %v2002
        %v2121 = vadd.f32 %v1733, %v2007
        %v2122 = vadd.f32 %v1736, %v2010
        %v2123 = vadd.f32 %v1741, %v2015
        %v2124 = vadd.f32 %v1744, %v2018
        %v2125 = vadd.f32 %v1749, %v2023
        %v2126 = vadd.f32 %v1752, %v2026
        %v2127 = vadd.f32 %v1757, %v2031
        %v2128 = vadd.f32 %v1760, %v2034
        %v2129 = vadd.f32 %v1765, %v2039
        %v2130 = vadd.f32 %v1768, %v2042
        %v2131 = vadd.f32 %v1773, %v2047
        %v2132 = vadd.f32 %v1776, %v2050
        %v2133 = vadd.f32 %v1781, %v2055
        %v2134 = vadd.f32 %v1784, %v2058
        %v2135 = vadd.f32 %v1789, %v2063
        %v2136 = vadd.f32 %v1792, %v2066
        %v2137 = vadd.f32 %v1797, %v2071
        %v2138 = vadd.f32 %v1800, %v2074
        %v2139 = vadd.f32 %v1805, %v2079
        %v2140 = vadd.f32 %v1808, %v2082
        %v2141 = vadd.f32 %v1813, %v2087
        %v2142 = vadd.f32 %v1816, %v2090
        %v2143 = vadd.f32 %v1821, %v2095
        %v2144 = vadd.f32 %v1824, %v2098
        %v2145 = vadd.f32 %v1829, %v2103
        %v2146 = vadd.f32 %v1832, %v2106
        %v2147 = vadd.f32 %v1837, %v2111
        %v2148 = vadd.f32 %v1840, %v2114
        %v2149 = vld [vmem:[%s990] sm:$0xff]
        %v2150 = vld [vmem:[%s990 + $0x8] sm:$0xff]
        %v2151 = vld [vmem:[%s990 + $0x18] sm:$0xff]
        %v2152 = vld [vmem:[%s990 + $0x20] sm:$0xff]
        %v2153 = vld [vmem:[%s990 + $0x30] sm:$0xff]
        %v2154 = vld [vmem:[%s990 + $0x38] sm:$0xff]
        %v2155 = vld [vmem:[%s990 + $0x48] sm:$0xff]
        %v2156 = vld [vmem:[%s990 + $0x50] sm:$0xff]
        %v2157 = vld [vmem:[%s990 + $0x60] sm:$0xff]
        %v2158 = vld [vmem:[%s990 + $0x68] sm:$0xff]
        %v2159 = vld [vmem:[%s990 + $0x78] sm:$0xff]
        %v2160 = vld [vmem:[%s990 + $0x80] sm:$0xff]
        %v2161 = vld [vmem:[%s990 + $0x90] sm:$0xff]
        %v2162 = vld [vmem:[%s990 + $0x98] sm:$0xff]
        %v2163 = vld [vmem:[%s990 + $0xa8] sm:$0xff]
        %v2164 = vld [vmem:[%s990 + $0xb0] sm:$0xff]
        %v2165 = vld [vmem:[%s990 + $0xc0] sm:$0xff]
        %v2166 = vld [vmem:[%s990 + $0xc8] sm:$0xff]
        %v2167 = vld [vmem:[%s990 + $0xd8] sm:$0xff]
        %v2168 = vld [vmem:[%s990 + $0xe0] sm:$0xff]
        %v2169 = vld [vmem:[%s990 + $0xf0] sm:$0xff]
        %v2170 = vld [vmem:[%s990 + $0xf8] sm:$0xff]
        %v2171 = vld [vmem:[%s990 + $0x108] sm:$0xff]
        %v2172 = vld [vmem:[%s990 + $0x110] sm:$0xff]
        %v2173 = vld [vmem:[%s990 + $0x120] sm:$0xff]
        %v2174 = vld [vmem:[%s990 + $0x128] sm:$0xff]
        %v2175 = vld [vmem:[%s990 + $0x138] sm:$0xff]
        %v2176 = vld [vmem:[%s990 + $0x140] sm:$0xff]
        %v2177 = vld [vmem:[%s990 + $0x150] sm:$0xff]
        %v2178 = vld [vmem:[%s990 + $0x158] sm:$0xff]
        %v2179 = vld [vmem:[%s990 + $0x168] sm:$0xff]
        %v2180 = vld [vmem:[%s990 + $0x170] sm:$0xff]
        %v2181 = vpack.c.bf16 %v2150, %v2149
        %v2182 = vpack.c.bf16 %v2152, %v2151
        %v2183 = vpack.c.bf16 %v2154, %v2153
        %v2184 = vpack.c.bf16 %v2156, %v2155
        %v2185 = vpack.c.bf16 %v2158, %v2157
        %v2186 = vpack.c.bf16 %v2160, %v2159
        %v2187 = vpack.c.bf16 %v2162, %v2161
        %v2188 = vpack.c.bf16 %v2164, %v2163
        %v2189 = vpack.c.bf16 %v2166, %v2165
        %v2190 = vpack.c.bf16 %v2168, %v2167
        %v2191 = vpack.c.bf16 %v2170, %v2169
        %v2192 = vpack.c.bf16 %v2172, %v2171
        %v2193 = vpack.c.bf16 %v2174, %v2173
        %v2194 = vpack.c.bf16 %v2176, %v2175
        %v2195 = vpack.c.bf16 %v2178, %v2177
        %v2196 = vpack.c.bf16 %v2180, %v2179
        %s2197 = scalar_lea.vmem %s6, 192
        %v2198 = vld [vmem:[%s2197] sm:$0xf]
        %v2199 = vld [vmem:[%s2197 + $0x4] sm:$0xf]
        %v2200 = vld [vmem:[%s2197 + $0x8] sm:$0xf]
        %v2201 = vld [vmem:[%s2197 + $0xc] sm:$0xf]
        %v2202 = vld [vmem:[%s2197 + $0x10] sm:$0xf]
        %v2203 = vld [vmem:[%s2197 + $0x14] sm:$0xf]
        %v2204 = vld [vmem:[%s2197 + $0x18] sm:$0xf]
        %v2205 = vld [vmem:[%s2197 + $0x1c] sm:$0xf]
        %v2206 = vld [vmem:[%s2197 + $0x20] sm:$0xf]
        %v2207 = vld [vmem:[%s2197 + $0x24] sm:$0xf]
        %v2208 = vld [vmem:[%s2197 + $0x28] sm:$0xf]
        %v2209 = vld [vmem:[%s2197 + $0x2c] sm:$0xf]
        %v2210 = vld [vmem:[%s2197 + $0x30] sm:$0xf]
        %v2211 = vld [vmem:[%s2197 + $0x34] sm:$0xf]
        %v2212 = vld [vmem:[%s2197 + $0x38] sm:$0xf]
        %v2213 = vld [vmem:[%s2197 + $0x3c] sm:$0xf]
        %v2230 = vunpack.c.l.b16 %v2198
        %v2231 = vunpack.c.l.b16 %v2199
        %v2232 = vunpack.c.l.b16 %v2200
        %v2233 = vunpack.c.l.b16 %v2201
        %v2234 = vunpack.c.l.b16 %v2202
        %v2235 = vunpack.c.l.b16 %v2203
        %v2236 = vunpack.c.l.b16 %v2204
        %v2237 = vunpack.c.l.b16 %v2205
        %v2238 = vunpack.c.l.b16 %v2206
        %v2239 = vunpack.c.l.b16 %v2207
        %v2240 = vunpack.c.l.b16 %v2208
        %v2241 = vunpack.c.l.b16 %v2209
        %v2242 = vunpack.c.l.b16 %v2210
        %v2243 = vunpack.c.l.b16 %v2211
        %v2244 = vunpack.c.l.b16 %v2212
        %v2245 = vunpack.c.l.b16 %v2213
        %v2246 = vpack.c.b16 %v2231, %v2230
        %v2247 = vpack.c.b16 %v2233, %v2232
        %v2248 = vpack.c.b16 %v2235, %v2234
        %v2249 = vpack.c.b16 %v2237, %v2236
        %v2250 = vpack.c.b16 %v2239, %v2238
        %v2251 = vpack.c.b16 %v2241, %v2240
        %v2252 = vpack.c.b16 %v2243, %v2242
        %v2253 = vpack.c.b16 %v2245, %v2244
        %2262 = vmatprep.subr.bf16.mxu0 0
        %2263 = vmatpush1.bf16.msra.mxu0 %v2246
        %2264 = vmatprep.subr.bf16.mxu0 0
        %2265 = vmatpush1.bf16.msra.mxu0 %v2247
        %2266 = vmatprep.subr.bf16.mxu0 0
        %2267 = vmatpush1.bf16.msra.mxu0 %v2248
        %2268 = vmatprep.subr.bf16.mxu0 0
        %2269 = vmatpush1.bf16.msra.mxu0 %v2249
        %2270 = vmatprep.subr.bf16.mxu0 0
        %2271 = vmatpush1.bf16.msra.mxu0 %v2250
        %2272 = vmatprep.subr.bf16.mxu0 0
        %2273 = vmatpush1.bf16.msra.mxu0 %v2251
        %2274 = vmatprep.subr.bf16.mxu0 0
        %2275 = vmatpush1.bf16.msra.mxu0 %v2252
        %2276 = vmatprep.subr.bf16.mxu0 0
        %2277 = vmatpush1.bf16.msra.mxu0 %v2253
        %2278 = vmatprep.subr.bf16.mxu0 0
        %2279 = vmatpush1.bf16.msra.mxu0 0
        %2280 = vmatprep.subr.bf16.mxu0 0
        %2281 = vmatpush1.bf16.msra.mxu0 0
        %2282 = vmatprep.subr.bf16.mxu0 0
        %2283 = vmatpush1.bf16.msra.mxu0 0
        %2284 = vmatprep.subr.bf16.mxu0 0
        %2285 = vmatpush1.bf16.msra.mxu0 0
        %2286 = vmatprep.subr.bf16.mxu0 0
        %2287 = vmatpush1.bf16.msra.mxu0 0
        %2288 = vmatprep.subr.bf16.mxu0 0
        %2289 = vmatpush1.bf16.msra.mxu0 0
        %2290 = vmatprep.subr.bf16.mxu0 0
        %2291 = vmatpush1.bf16.msra.mxu0 0
        %2292 = vmatprep.subr.bf16.mxu0 0
        %2293 = vmatpush1.bf16.msra.mxu0 0
        %2294 = vmatprep.mubr.bf16.mxu0 0
        %2295 = vmatmul.mubr.bf16.gmra.mrb[0].mxu0 %v2181
        %v2296 = vpop.f32.mrb[0].mxu0
        %v2297 = vadd.f32 0.0, %v2296
        %v2298 = vpop.f32.mrb[0].mxu0
        %v2299 = vpop.f32.mrb[0].mxu0
        %v2300 = vadd.f32 0.0, %v2299
        %v2301 = vpop.f32.mrb[0].mxu0
        %2302 = vmatprep.mubr.bf16.mxu0 0
        %2303 = vmatmul.mubr.bf16.gmra.mrb[0].mxu0 %v2182
        %v2304 = vpop.f32.mrb[0].mxu0
        %v2305 = vadd.f32 0.0, %v2304
        %v2306 = vpop.f32.mrb[0].mxu0
        %v2307 = vpop.f32.mrb[0].mxu0
        %v2308 = vadd.f32 0.0, %v2307
        %v2309 = vpop.f32.mrb[0].mxu0
        %2310 = vmatprep.mubr.bf16.mxu0 0
        %2311 = vmatmul.mubr.bf16.gmra.mrb[0].mxu0 %v2183
        %v2312 = vpop.f32.mrb[0].mxu0
        %v2313 = vadd.f32 0.0, %v2312
        %v2314 = vpop.f32.mrb[0].mxu0
        %v2315 = vpop.f32.mrb[0].mxu0
        %v2316 = vadd.f32 0.0, %v2315
        %v2317 = vpop.f32.mrb[0].mxu0
        %2318 = vmatprep.mubr.bf16.mxu0 0
        %2319 = vmatmul.mubr.bf16.gmra.mrb[0].mxu0 %v2184
        %v2320 = vpop.f32.mrb[0].mxu0
        %v2321 = vadd.f32 0.0, %v2320
        %v2322 = vpop.f32.mrb[0].mxu0
        %v2323 = vpop.f32.mrb[0].mxu0
        %v2324 = vadd.f32 0.0, %v2323
        %v2325 = vpop.f32.mrb[0].mxu0
        %2326 = vmatprep.mubr.bf16.mxu0 0
        %2327 = vmatmul.mubr.bf16.gmra.mrb[0].mxu0 %v2185
        %v2328 = vpop.f32.mrb[0].mxu0
        %v2329 = vadd.f32 0.0, %v2328
        %v2330 = vpop.f32.mrb[0].mxu0
        %v2331 = vpop.f32.mrb[0].mxu0
        %v2332 = vadd.f32 0.0, %v2331
        %v2333 = vpop.f32.mrb[0].mxu0
        %2334 = vmatprep.mubr.bf16.mxu0 0
        %2335 = vmatmul.mubr.bf16.gmra.mrb[0].mxu0 %v2186
        %v2336 = vpop.f32.mrb[0].mxu0
        %v2337 = vadd.f32 0.0, %v2336
        %v2338 = vpop.f32.mrb[0].mxu0
        %v2339 = vpop.f32.mrb[0].mxu0
        %v2340 = vadd.f32 0.0, %v2339
        %v2341 = vpop.f32.mrb[0].mxu0
        %2342 = vmatprep.mubr.bf16.mxu0 0
        %2343 = vmatmul.mubr.bf16.gmra.mrb[0].mxu0 %v2187
        %v2344 = vpop.f32.mrb[0].mxu0
        %v2345 = vadd.f32 0.0, %v2344
        %v2346 = vpop.f32.mrb[0].mxu0
        %v2347 = vpop.f32.mrb[0].mxu0
        %v2348 = vadd.f32 0.0, %v2347
        %v2349 = vpop.f32.mrb[0].mxu0
        %2350 = vmatprep.mubr.bf16.mxu0 0
        %2351 = vmatmul.mubr.bf16.gmra.mrb[0].mxu0 %v2188
        %v2352 = vpop.f32.mrb[0].mxu0
        %v2353 = vadd.f32 0.0, %v2352
        %v2354 = vpop.f32.mrb[0].mxu0
        %v2355 = vpop.f32.mrb[0].mxu0
        %v2356 = vadd.f32 0.0, %v2355
        %v2357 = vpop.f32.mrb[0].mxu0
        %2358 = vmatprep.mubr.bf16.mxu0 0
        %2359 = vmatmul.mubr.bf16.gmra.mrb[0].mxu0 %v2189
        %v2360 = vpop.f32.mrb[0].mxu0
        %v2361 = vadd.f32 0.0, %v2360
        %v2362 = vpop.f32.mrb[0].mxu0
        %v2363 = vpop.f32.mrb[0].mxu0
        %v2364 = vadd.f32 0.0, %v2363
        %v2365 = vpop.f32.mrb[0].mxu0
        %2366 = vmatprep.mubr.bf16.mxu0 0
        %2367 = vmatmul.mubr.bf16.gmra.mrb[0].mxu0 %v2190
        %v2368 = vpop.f32.mrb[0].mxu0
        %v2369 = vadd.f32 0.0, %v2368
        %v2370 = vpop.f32.mrb[0].mxu0
        %v2371 = vpop.f32.mrb[0].mxu0
        %v2372 = vadd.f32 0.0, %v2371
        %v2373 = vpop.f32.mrb[0].mxu0
        %2374 = vmatprep.mubr.bf16.mxu0 0
        %2375 = vmatmul.mubr.bf16.gmra.mrb[0].mxu0 %v2191
        %v2376 = vpop.f32.mrb[0].mxu0
        %v2377 = vadd.f32 0.0, %v2376
        %v2378 = vpop.f32.mrb[0].mxu0
        %v2379 = vpop.f32.mrb[0].mxu0
        %v2380 = vadd.f32 0.0, %v2379
        %v2381 = vpop.f32.mrb[0].mxu0
        %2382 = vmatprep.mubr.bf16.mxu0 0
        %2383 = vmatmul.mubr.bf16.gmra.mrb[0].mxu0 %v2192
        %v2384 = vpop.f32.mrb[0].mxu0
        %v2385 = vadd.f32 0.0, %v2384
        %v2386 = vpop.f32.mrb[0].mxu0
        %v2387 = vpop.f32.mrb[0].mxu0
        %v2388 = vadd.f32 0.0, %v2387
        %v2389 = vpop.f32.mrb[0].mxu0
        %2390 = vmatprep.mubr.bf16.mxu0 0
        %2391 = vmatmul.mubr.bf16.gmra.mrb[0].mxu0 %v2193
        %v2392 = vpop.f32.mrb[0].mxu0
        %v2393 = vadd.f32 0.0, %v2392
        %v2394 = vpop.f32.mrb[0].mxu0
        %v2395 = vpop.f32.mrb[0].mxu0
        %v2396 = vadd.f32 0.0, %v2395
        %v2397 = vpop.f32.mrb[0].mxu0
        %2398 = vmatprep.mubr.bf16.mxu0 0
        %2399 = vmatmul.mubr.bf16.gmra.mrb[0].mxu0 %v2194
        %v2400 = vpop.f32.mrb[0].mxu0
        %v2401 = vadd.f32 0.0, %v2400
        %v2402 = vpop.f32.mrb[0].mxu0
        %v2403 = vpop.f32.mrb[0].mxu0
        %v2404 = vadd.f32 0.0, %v2403
        %v2405 = vpop.f32.mrb[0].mxu0
        %2406 = vmatprep.mubr.bf16.mxu0 0
        %2407 = vmatmul.mubr.bf16.gmra.mrb[0].mxu0 %v2195
        %v2408 = vpop.f32.mrb[0].mxu0
        %v2409 = vadd.f32 0.0, %v2408
        %v2410 = vpop.f32.mrb[0].mxu0
        %v2411 = vpop.f32.mrb[0].mxu0
        %v2412 = vadd.f32 0.0, %v2411
        %v2413 = vpop.f32.mrb[0].mxu0
        %2414 = vmatprep.mubr.bf16.mxu0 0
        %2415 = vmatmul.mubr.bf16.gmra.mrb[0].mxu0 %v2196
        %v2416 = vpop.f32.mrb[0].mxu0
        %v2417 = vadd.f32 0.0, %v2416
        %v2418 = vpop.f32.mrb[0].mxu0
        %v2419 = vpop.f32.mrb[0].mxu0
        %v2420 = vadd.f32 0.0, %v2419
        %v2421 = vpop.f32.mrb[0].mxu0
        %2422 = vdwg.mxu0
        %v2423 = vadd.f32 %v2117, %v2297
        %v2424 = vadd.f32 %v2118, %v2300
        %v2425 = vadd.f32 %v2119, %v2305
        %v2426 = vadd.f32 %v2120, %v2308
        %v2427 = vadd.f32 %v2121, %v2313
        %v2428 = vadd.f32 %v2122, %v2316
        %v2429 = vadd.f32 %v2123, %v2321
        %v2430 = vadd.f32 %v2124, %v2324
        %v2431 = vadd.f32 %v2125, %v2329
        %v2432 = vadd.f32 %v2126, %v2332
        %v2433 = vadd.f32 %v2127, %v2337
        %v2434 = vadd.f32 %v2128, %v2340
        %v2435 = vadd.f32 %v2129, %v2345
        %v2436 = vadd.f32 %v2130, %v2348
        %v2437 = vadd.f32 %v2131, %v2353
        %v2438 = vadd.f32 %v2132, %v2356
        %v2439 = vadd.f32 %v2133, %v2361
        %v2440 = vadd.f32 %v2134, %v2364
        %v2441 = vadd.f32 %v2135, %v2369
        %v2442 = vadd.f32 %v2136, %v2372
        %v2443 = vadd.f32 %v2137, %v2377
        %v2444 = vadd.f32 %v2138, %v2380
        %v2445 = vadd.f32 %v2139, %v2385
        %v2446 = vadd.f32 %v2140, %v2388
        %v2447 = vadd.f32 %v2141, %v2393
        %v2448 = vadd.f32 %v2142, %v2396
        %v2449 = vadd.f32 %v2143, %v2401
        %v2450 = vadd.f32 %v2144, %v2404
        %v2451 = vadd.f32 %v2145, %v2409
        %v2452 = vadd.f32 %v2146, %v2412
        %v2453 = vadd.f32 %v2147, %v2417
        %v2454 = vadd.f32 %v2148, %v2420
        %v2455 = vld [vmem:[%s990 + $0x1] sm:$0xff]
        %v2456 = vld [vmem:[%s990 + $0x9] sm:$0xff]
        %v2457 = vld [vmem:[%s990 + $0x19] sm:$0xff]
        %v2458 = vld [vmem:[%s990 + $0x21] sm:$0xff]
        %v2459 = vld [vmem:[%s990 + $0x31] sm:$0xff]
        %v2460 = vld [vmem:[%s990 + $0x39] sm:$0xff]
        %v2461 = vld [vmem:[%s990 + $0x49] sm:$0xff]
        %v2462 = vld [vmem:[%s990 + $0x51] sm:$0xff]
        %v2463 = vld [vmem:[%s990 + $0x61] sm:$0xff]
        %v2464 = vld [vmem:[%s990 + $0x69] sm:$0xff]
        %v2465 = vld [vmem:[%s990 + $0x79] sm:$0xff]
        %v2466 = vld [vmem:[%s990 + $0x81] sm:$0xff]
        %v2467 = vld [vmem:[%s990 + $0x91] sm:$0xff]
        %v2468 = vld [vmem:[%s990 + $0x99] sm:$0xff]
        %v2469 = vld [vmem:[%s990 + $0xa9] sm:$0xff]
        %v2470 = vld [vmem:[%s990 + $0xb1] sm:$0xff]
        %v2471 = vld [vmem:[%s990 + $0xc1] sm:$0xff]
        %v2472 = vld [vmem:[%s990 + $0xc9] sm:$0xff]
        %v2473 = vld [vmem:[%s990 + $0xd9] sm:$0xff]
        %v2474 = vld [vmem:[%s990 + $0xe1] sm:$0xff]
        %v2475 = vld [vmem:[%s990 + $0xf1] sm:$0xff]
        %v2476 = vld [vmem:[%s990 + $0xf9] sm:$0xff]
        %v2477 = vld [vmem:[%s990 + $0x109] sm:$0xff]
        %v2478 = vld [vmem:[%s990 + $0x111] sm:$0xff]
        %v2479 = vld [vmem:[%s990 + $0x121] sm:$0xff]
        %v2480 = vld [vmem:[%s990 + $0x129] sm:$0xff]
        %v2481 = vld [vmem:[%s990 + $0x139] sm:$0xff]
        %v2482 = vld [vmem:[%s990 + $0x141] sm:$0xff]
        %v2483 = vld [vmem:[%s990 + $0x151] sm:$0xff]
        %v2484 = vld [vmem:[%s990 + $0x159] sm:$0xff]
        %v2485 = vld [vmem:[%s990 + $0x169] sm:$0xff]
        %v2486 = vld [vmem:[%s990 + $0x171] sm:$0xff]
        %v2487 = vpack.c.bf16 %v2456, %v2455
        %v2488 = vpack.c.bf16 %v2458, %v2457
        %v2489 = vpack.c.bf16 %v2460, %v2459
        %v2490 = vpack.c.bf16 %v2462, %v2461
        %v2491 = vpack.c.bf16 %v2464, %v2463
        %v2492 = vpack.c.bf16 %v2466, %v2465
        %v2493 = vpack.c.bf16 %v2468, %v2467
        %v2494 = vpack.c.bf16 %v2470, %v2469
        %v2495 = vpack.c.bf16 %v2472, %v2471
        %v2496 = vpack.c.bf16 %v2474, %v2473
        %v2497 = vpack.c.bf16 %v2476, %v2475
        %v2498 = vpack.c.bf16 %v2478, %v2477
        %v2499 = vpack.c.bf16 %v2480, %v2479
        %v2500 = vpack.c.bf16 %v2482, %v2481
        %v2501 = vpack.c.bf16 %v2484, %v2483
        %v2502 = vpack.c.bf16 %v2486, %v2485
        %s2503 = scalar_lea.vmem %s6, 256
        %v2504 = vld [vmem:[%s2503] sm:$0xf]
        %v2505 = vld [vmem:[%s2503 + $0x4] sm:$0xf]
        %v2506 = vld [vmem:[%s2503 + $0x8] sm:$0xf]
        %v2507 = vld [vmem:[%s2503 + $0xc] sm:$0xf]
        %v2508 = vld [vmem:[%s2503 + $0x10] sm:$0xf]
        %v2509 = vld [vmem:[%s2503 + $0x14] sm:$0xf]
        %v2510 = vld [vmem:[%s2503 + $0x18] sm:$0xf]
        %v2511 = vld [vmem:[%s2503 + $0x1c] sm:$0xf]
        %v2512 = vld [vmem:[%s2503 + $0x20] sm:$0xf]
        %v2513 = vld [vmem:[%s2503 + $0x24] sm:$0xf]
        %v2514 = vld [vmem:[%s2503 + $0x28] sm:$0xf]
        %v2515 = vld [vmem:[%s2503 + $0x2c] sm:$0xf]
        %v2516 = vld [vmem:[%s2503 + $0x30] sm:$0xf]
        %v2517 = vld [vmem:[%s2503 + $0x34] sm:$0xf]
        %v2518 = vld [vmem:[%s2503 + $0x38] sm:$0xf]
        %v2519 = vld [vmem:[%s2503 + $0x3c] sm:$0xf]
        %v2536 = vunpack.c.l.b16 %v2504
        %v2537 = vunpack.c.l.b16 %v2505
        %v2538 = vunpack.c.l.b16 %v2506
        %v2539 = vunpack.c.l.b16 %v2507
        %v2540 = vunpack.c.l.b16 %v2508
        %v2541 = vunpack.c.l.b16 %v2509
        %v2542 = vunpack.c.l.b16 %v2510
        %v2543 = vunpack.c.l.b16 %v2511
        %v2544 = vunpack.c.l.b16 %v2512
        %v2545 = vunpack.c.l.b16 %v2513
        %v2546 = vunpack.c.l.b16 %v2514
        %v2547 = vunpack.c.l.b16 %v2515
        %v2548 = vunpack.c.l.b16 %v2516
        %v2549 = vunpack.c.l.b16 %v2517
        %v2550 = vunpack.c.l.b16 %v2518
        %v2551 = vunpack.c.l.b16 %v2519
        %v2552 = vpack.c.b16 %v2537, %v2536
        %v2553 = vpack.c.b16 %v2539, %v2538
        %v2554 = vpack.c.b16 %v2541, %v2540
        %v2555 = vpack.c.b16 %v2543, %v2542
        %v2556 = vpack.c.b16 %v2545, %v2544
        %v2557 = vpack.c.b16 %v2547, %v2546
        %v2558 = vpack.c.b16 %v2549, %v2548
        %v2559 = vpack.c.b16 %v2551, %v2550
        %2568 = vmatprep.subr.bf16.mxu0 0
        %2569 = vmatpush1.bf16.msra.mxu0 %v2552
        %2570 = vmatprep.subr.bf16.mxu0 0
        %2571 = vmatpush1.bf16.msra.mxu0 %v2553
        %2572 = vmatprep.subr.bf16.mxu0 0
        %2573 = vmatpush1.bf16.msra.mxu0 %v2554
        %2574 = vmatprep.subr.bf16.mxu0 0
        %2575 = vmatpush1.bf16.msra.mxu0 %v2555
        %2576 = vmatprep.subr.bf16.mxu0 0
        %2577 = vmatpush1.bf16.msra.mxu0 %v2556
        %2578 = vmatprep.subr.bf16.mxu0 0
        %2579 = vmatpush1.bf16.msra.mxu0 %v2557
        %2580 = vmatprep.subr.bf16.mxu0 0
        %2581 = vmatpush1.bf16.msra.mxu0 %v2558
        %2582 = vmatprep.subr.bf16.mxu0 0
        %2583 = vmatpush1.bf16.msra.mxu0 %v2559
        %2584 = vmatprep.subr.bf16.mxu0 0
        %2585 = vmatpush1.bf16.msra.mxu0 0
        %2586 = vmatprep.subr.bf16.mxu0 0
        %2587 = vmatpush1.bf16.msra.mxu0 0
        %2588 = vmatprep.subr.bf16.mxu0 0
        %2589 = vmatpush1.bf16.msra.mxu0 0
        %2590 = vmatprep.subr.bf16.mxu0 0
        %2591 = vmatpush1.bf16.msra.mxu0 0
        %2592 = vmatprep.subr.bf16.mxu0 0
        %2593 = vmatpush1.bf16.msra.mxu0 0
        %2594 = vmatprep.subr.bf16.mxu0 0
        %2595 = vmatpush1.bf16.msra.mxu0 0
        %2596 = vmatprep.subr.bf16.mxu0 0
        %2597 = vmatpush1.bf16.msra.mxu0 0
        %2598 = vmatprep.subr.bf16.mxu0 0
        %2599 = vmatpush1.bf16.msra.mxu0 0
        %2600 = vmatprep.mubr.bf16.mxu0 0
        %2601 = vmatmul.mubr.bf16.gmra.mrb[0].mxu0 %v2487
        %v2602 = vpop.f32.mrb[0].mxu0
        %v2603 = vadd.f32 0.0, %v2602
        %v2604 = vpop.f32.mrb[0].mxu0
        %v2605 = vpop.f32.mrb[0].mxu0
        %v2606 = vadd.f32 0.0, %v2605
        %v2607 = vpop.f32.mrb[0].mxu0
        %2608 = vmatprep.mubr.bf16.mxu0 0
        %2609 = vmatmul.mubr.bf16.gmra.mrb[0].mxu0 %v2488
        %v2610 = vpop.f32.mrb[0].mxu0
        %v2611 = vadd.f32 0.0, %v2610
        %v2612 = vpop.f32.mrb[0].mxu0
        %v2613 = vpop.f32.mrb[0].mxu0
        %v2614 = vadd.f32 0.0, %v2613
        %v2615 = vpop.f32.mrb[0].mxu0
        %2616 = vmatprep.mubr.bf16.mxu0 0
        %2617 = vmatmul.mubr.bf16.gmra.mrb[0].mxu0 %v2489
        %v2618 = vpop.f32.mrb[0].mxu0
        %v2619 = vadd.f32 0.0, %v2618
        %v2620 = vpop.f32.mrb[0].mxu0
        %v2621 = vpop.f32.mrb[0].mxu0
        %v2622 = vadd.f32 0.0, %v2621
        %v2623 = vpop.f32.mrb[0].mxu0
        %2624 = vmatprep.mubr.bf16.mxu0 0
        %2625 = vmatmul.mubr.bf16.gmra.mrb[0].mxu0 %v2490
        %v2626 = vpop.f32.mrb[0].mxu0
        %v2627 = vadd.f32 0.0, %v2626
        %v2628 = vpop.f32.mrb[0].mxu0
        %v2629 = vpop.f32.mrb[0].mxu0
        %v2630 = vadd.f32 0.0, %v2629
        %v2631 = vpop.f32.mrb[0].mxu0
        %2632 = vmatprep.mubr.bf16.mxu0 0
        %2633 = vmatmul.mubr.bf16.gmra.mrb[0].mxu0 %v2491
        %v2634 = vpop.f32.mrb[0].mxu0
        %v2635 = vadd.f32 0.0, %v2634
        %v2636 = vpop.f32.mrb[0].mxu0
        %v2637 = vpop.f32.mrb[0].mxu0
        %v2638 = vadd.f32 0.0, %v2637
        %v2639 = vpop.f32.mrb[0].mxu0
        %2640 = vmatprep.mubr.bf16.mxu0 0
        %2641 = vmatmul.mubr.bf16.gmra.mrb[0].mxu0 %v2492
        %v2642 = vpop.f32.mrb[0].mxu0
        %v2643 = vadd.f32 0.0, %v2642
        %v2644 = vpop.f32.mrb[0].mxu0
        %v2645 = vpop.f32.mrb[0].mxu0
        %v2646 = vadd.f32 0.0, %v2645
        %v2647 = vpop.f32.mrb[0].mxu0
        %2648 = vmatprep.mubr.bf16.mxu0 0
        %2649 = vmatmul.mubr.bf16.gmra.mrb[0].mxu0 %v2493
        %v2650 = vpop.f32.mrb[0].mxu0
        %v2651 = vadd.f32 0.0, %v2650
        %v2652 = vpop.f32.mrb[0].mxu0
        %v2653 = vpop.f32.mrb[0].mxu0
        %v2654 = vadd.f32 0.0, %v2653
        %v2655 = vpop.f32.mrb[0].mxu0
        %2656 = vmatprep.mubr.bf16.mxu0 0
        %2657 = vmatmul.mubr.bf16.gmra.mrb[0].mxu0 %v2494
        %v2658 = vpop.f32.mrb[0].mxu0
        %v2659 = vadd.f32 0.0, %v2658
        %v2660 = vpop.f32.mrb[0].mxu0
        %v2661 = vpop.f32.mrb[0].mxu0
        %v2662 = vadd.f32 0.0, %v2661
        %v2663 = vpop.f32.mrb[0].mxu0
        %2664 = vmatprep.mubr.bf16.mxu0 0
        %2665 = vmatmul.mubr.bf16.gmra.mrb[0].mxu0 %v2495
        %v2666 = vpop.f32.mrb[0].mxu0
        %v2667 = vadd.f32 0.0, %v2666
        %v2668 = vpop.f32.mrb[0].mxu0
        %v2669 = vpop.f32.mrb[0].mxu0
        %v2670 = vadd.f32 0.0, %v2669
        %v2671 = vpop.f32.mrb[0].mxu0
        %2672 = vmatprep.mubr.bf16.mxu0 0
        %2673 = vmatmul.mubr.bf16.gmra.mrb[0].mxu0 %v2496
        %v2674 = vpop.f32.mrb[0].mxu0
        %v2675 = vadd.f32 0.0, %v2674
        %v2676 = vpop.f32.mrb[0].mxu0
        %v2677 = vpop.f32.mrb[0].mxu0
        %v2678 = vadd.f32 0.0, %v2677
        %v2679 = vpop.f32.mrb[0].mxu0
        %2680 = vmatprep.mubr.bf16.mxu0 0
        %2681 = vmatmul.mubr.bf16.gmra.mrb[0].mxu0 %v2497
        %v2682 = vpop.f32.mrb[0].mxu0
        %v2683 = vadd.f32 0.0, %v2682
        %v2684 = vpop.f32.mrb[0].mxu0
        %v2685 = vpop.f32.mrb[0].mxu0
        %v2686 = vadd.f32 0.0, %v2685
        %v2687 = vpop.f32.mrb[0].mxu0
        %2688 = vmatprep.mubr.bf16.mxu0 0
        %2689 = vmatmul.mubr.bf16.gmra.mrb[0].mxu0 %v2498
        %v2690 = vpop.f32.mrb[0].mxu0
        %v2691 = vadd.f32 0.0, %v2690
        %v2692 = vpop.f32.mrb[0].mxu0
        %v2693 = vpop.f32.mrb[0].mxu0
        %v2694 = vadd.f32 0.0, %v2693
        %v2695 = vpop.f32.mrb[0].mxu0
        %2696 = vmatprep.mubr.bf16.mxu0 0
        %2697 = vmatmul.mubr.bf16.gmra.mrb[0].mxu0 %v2499
        %v2698 = vpop.f32.mrb[0].mxu0
        %v2699 = vadd.f32 0.0, %v2698
        %v2700 = vpop.f32.mrb[0].mxu0
        %v2701 = vpop.f32.mrb[0].mxu0
        %v2702 = vadd.f32 0.0, %v2701
        %v2703 = vpop.f32.mrb[0].mxu0
        %2704 = vmatprep.mubr.bf16.mxu0 0
        %2705 = vmatmul.mubr.bf16.gmra.mrb[0].mxu0 %v2500
        %v2706 = vpop.f32.mrb[0].mxu0
        %v2707 = vadd.f32 0.0, %v2706
        %v2708 = vpop.f32.mrb[0].mxu0
        %v2709 = vpop.f32.mrb[0].mxu0
        %v2710 = vadd.f32 0.0, %v2709
        %v2711 = vpop.f32.mrb[0].mxu0
        %2712 = vmatprep.mubr.bf16.mxu0 0
        %2713 = vmatmul.mubr.bf16.gmra.mrb[0].mxu0 %v2501
        %v2714 = vpop.f32.mrb[0].mxu0
        %v2715 = vadd.f32 0.0, %v2714
        %v2716 = vpop.f32.mrb[0].mxu0
        %v2717 = vpop.f32.mrb[0].mxu0
        %v2718 = vadd.f32 0.0, %v2717
        %v2719 = vpop.f32.mrb[0].mxu0
        %2720 = vmatprep.mubr.bf16.mxu0 0
        %2721 = vmatmul.mubr.bf16.gmra.mrb[0].mxu0 %v2502
        %v2722 = vpop.f32.mrb[0].mxu0
        %v2723 = vadd.f32 0.0, %v2722
        %v2724 = vpop.f32.mrb[0].mxu0
        %v2725 = vpop.f32.mrb[0].mxu0
        %v2726 = vadd.f32 0.0, %v2725
        %v2727 = vpop.f32.mrb[0].mxu0
        %2728 = vdwg.mxu0
        %v2729 = vadd.f32 %v2423, %v2603
        %v2730 = vadd.f32 %v2424, %v2606
        %v2731 = vadd.f32 %v2425, %v2611
        %v2732 = vadd.f32 %v2426, %v2614
        %v2733 = vadd.f32 %v2427, %v2619
        %v2734 = vadd.f32 %v2428, %v2622
        %v2735 = vadd.f32 %v2429, %v2627
        %v2736 = vadd.f32 %v2430, %v2630
        %v2737 = vadd.f32 %v2431, %v2635
        %v2738 = vadd.f32 %v2432, %v2638
        %v2739 = vadd.f32 %v2433, %v2643
        %v2740 = vadd.f32 %v2434, %v2646
        %v2741 = vadd.f32 %v2435, %v2651
        %v2742 = vadd.f32 %v2436, %v2654
        %v2743 = vadd.f32 %v2437, %v2659
        %v2744 = vadd.f32 %v2438, %v2662
        %v2745 = vadd.f32 %v2439, %v2667
        %v2746 = vadd.f32 %v2440, %v2670
        %v2747 = vadd.f32 %v2441, %v2675
        %v2748 = vadd.f32 %v2442, %v2678
        %v2749 = vadd.f32 %v2443, %v2683
        %v2750 = vadd.f32 %v2444, %v2686
        %v2751 = vadd.f32 %v2445, %v2691
        %v2752 = vadd.f32 %v2446, %v2694
        %v2753 = vadd.f32 %v2447, %v2699
        %v2754 = vadd.f32 %v2448, %v2702
        %v2755 = vadd.f32 %v2449, %v2707
        %v2756 = vadd.f32 %v2450, %v2710
        %v2757 = vadd.f32 %v2451, %v2715
        %v2758 = vadd.f32 %v2452, %v2718
        %v2759 = vadd.f32 %v2453, %v2723
        %v2760 = vadd.f32 %v2454, %v2726
        %v2761 = vld [vmem:[%s990 + $0x2] sm:$0xff]
        %v2762 = vld [vmem:[%s990 + $0xa] sm:$0xff]
        %v2763 = vld [vmem:[%s990 + $0x1a] sm:$0xff]
        %v2764 = vld [vmem:[%s990 + $0x22] sm:$0xff]
        %v2765 = vld [vmem:[%s990 + $0x32] sm:$0xff]
        %v2766 = vld [vmem:[%s990 + $0x3a] sm:$0xff]
        %v2767 = vld [vmem:[%s990 + $0x4a] sm:$0xff]
        %v2768 = vld [vmem:[%s990 + $0x52] sm:$0xff]
        %v2769 = vld [vmem:[%s990 + $0x62] sm:$0xff]
        %v2770 = vld [vmem:[%s990 + $0x6a] sm:$0xff]
        %v2771 = vld [vmem:[%s990 + $0x7a] sm:$0xff]
        %v2772 = vld [vmem:[%s990 + $0x82] sm:$0xff]
        %v2773 = vld [vmem:[%s990 + $0x92] sm:$0xff]
        %v2774 = vld [vmem:[%s990 + $0x9a] sm:$0xff]
        %v2775 = vld [vmem:[%s990 + $0xaa] sm:$0xff]
        %v2776 = vld [vmem:[%s990 + $0xb2] sm:$0xff]
        %v2777 = vld [vmem:[%s990 + $0xc2] sm:$0xff]
        %v2778 = vld [vmem:[%s990 + $0xca] sm:$0xff]
        %v2779 = vld [vmem:[%s990 + $0xda] sm:$0xff]
        %v2780 = vld [vmem:[%s990 + $0xe2] sm:$0xff]
        %v2781 = vld [vmem:[%s990 + $0xf2] sm:$0xff]
        %v2782 = vld [vmem:[%s990 + $0xfa] sm:$0xff]
        %v2783 = vld [vmem:[%s990 + $0x10a] sm:$0xff]
        %v2784 = vld [vmem:[%s990 + $0x112] sm:$0xff]
        %v2785 = vld [vmem:[%s990 + $0x122] sm:$0xff]
        %v2786 = vld [vmem:[%s990 + $0x12a] sm:$0xff]
        %v2787 = vld [vmem:[%s990 + $0x13a] sm:$0xff]
        %v2788 = vld [vmem:[%s990 + $0x142] sm:$0xff]
        %v2789 = vld [vmem:[%s990 + $0x152] sm:$0xff]
        %v2790 = vld [vmem:[%s990 + $0x15a] sm:$0xff]
        %v2791 = vld [vmem:[%s990 + $0x16a] sm:$0xff]
        %v2792 = vld [vmem:[%s990 + $0x172] sm:$0xff]
        %v2793 = vpack.c.bf16 %v2762, %v2761
        %v2794 = vpack.c.bf16 %v2764, %v2763
        %v2795 = vpack.c.bf16 %v2766, %v2765
        %v2796 = vpack.c.bf16 %v2768, %v2767
        %v2797 = vpack.c.bf16 %v2770, %v2769
        %v2798 = vpack.c.bf16 %v2772, %v2771
        %v2799 = vpack.c.bf16 %v2774, %v2773
        %v2800 = vpack.c.bf16 %v2776, %v2775
        %v2801 = vpack.c.bf16 %v2778, %v2777
        %v2802 = vpack.c.bf16 %v2780, %v2779
        %v2803 = vpack.c.bf16 %v2782, %v2781
        %v2804 = vpack.c.bf16 %v2784, %v2783
        %v2805 = vpack.c.bf16 %v2786, %v2785
        %v2806 = vpack.c.bf16 %v2788, %v2787
        %v2807 = vpack.c.bf16 %v2790, %v2789
        %v2808 = vpack.c.bf16 %v2792, %v2791
        %s2809 = scalar_lea.vmem %s6, 320
        %v2810 = vld [vmem:[%s2809] sm:$0xf]
        %v2811 = vld [vmem:[%s2809 + $0x4] sm:$0xf]
        %v2812 = vld [vmem:[%s2809 + $0x8] sm:$0xf]
        %v2813 = vld [vmem:[%s2809 + $0xc] sm:$0xf]
        %v2814 = vld [vmem:[%s2809 + $0x10] sm:$0xf]
        %v2815 = vld [vmem:[%s2809 + $0x14] sm:$0xf]
        %v2816 = vld [vmem:[%s2809 + $0x18] sm:$0xf]
        %v2817 = vld [vmem:[%s2809 + $0x1c] sm:$0xf]
        %v2818 = vld [vmem:[%s2809 + $0x20] sm:$0xf]
        %v2819 = vld [vmem:[%s2809 + $0x24] sm:$0xf]
        %v2820 = vld [vmem:[%s2809 + $0x28] sm:$0xf]
        %v2821 = vld [vmem:[%s2809 + $0x2c] sm:$0xf]
        %v2822 = vld [vmem:[%s2809 + $0x30] sm:$0xf]
        %v2823 = vld [vmem:[%s2809 + $0x34] sm:$0xf]
        %v2824 = vld [vmem:[%s2809 + $0x38] sm:$0xf]
        %v2825 = vld [vmem:[%s2809 + $0x3c] sm:$0xf]
        %v2842 = vunpack.c.l.b16 %v2810
        %v2843 = vunpack.c.l.b16 %v2811
        %v2844 = vunpack.c.l.b16 %v2812
        %v2845 = vunpack.c.l.b16 %v2813
        %v2846 = vunpack.c.l.b16 %v2814
        %v2847 = vunpack.c.l.b16 %v2815
        %v2848 = vunpack.c.l.b16 %v2816
        %v2849 = vunpack.c.l.b16 %v2817
        %v2850 = vunpack.c.l.b16 %v2818
        %v2851 = vunpack.c.l.b16 %v2819
        %v2852 = vunpack.c.l.b16 %v2820
        %v2853 = vunpack.c.l.b16 %v2821
        %v2854 = vunpack.c.l.b16 %v2822
        %v2855 = vunpack.c.l.b16 %v2823
        %v2856 = vunpack.c.l.b16 %v2824
        %v2857 = vunpack.c.l.b16 %v2825
        %v2858 = vpack.c.b16 %v2843, %v2842
        %v2859 = vpack.c.b16 %v2845, %v2844
        %v2860 = vpack.c.b16 %v2847, %v2846
        %v2861 = vpack.c.b16 %v2849, %v2848
        %v2862 = vpack.c.b16 %v2851, %v2850
        %v2863 = vpack.c.b16 %v2853, %v2852
        %v2864 = vpack.c.b16 %v2855, %v2854
        %v2865 = vpack.c.b16 %v2857, %v2856
        %2874 = vmatprep.subr.bf16.mxu0 0
        %2875 = vmatpush1.bf16.msra.mxu0 %v2858
        %2876 = vmatprep.subr.bf16.mxu0 0
        %2877 = vmatpush1.bf16.msra.mxu0 %v2859
        %2878 = vmatprep.subr.bf16.mxu0 0
        %2879 = vmatpush1.bf16.msra.mxu0 %v2860
        %2880 = vmatprep.subr.bf16.mxu0 0
        %2881 = vmatpush1.bf16.msra.mxu0 %v2861
        %2882 = vmatprep.subr.bf16.mxu0 0
        %2883 = vmatpush1.bf16.msra.mxu0 %v2862
        %2884 = vmatprep.subr.bf16.mxu0 0
        %2885 = vmatpush1.bf16.msra.mxu0 %v2863
        %2886 = vmatprep.subr.bf16.mxu0 0
        %2887 = vmatpush1.bf16.msra.mxu0 %v2864
        %2888 = vmatprep.subr.bf16.mxu0 0
        %2889 = vmatpush1.bf16.msra.mxu0 %v2865
        %2890 = vmatprep.subr.bf16.mxu0 0
        %2891 = vmatpush1.bf16.msra.mxu0 0
        %2892 = vmatprep.subr.bf16.mxu0 0
        %2893 = vmatpush1.bf16.msra.mxu0 0
        %2894 = vmatprep.subr.bf16.mxu0 0
        %2895 = vmatpush1.bf16.msra.mxu0 0
        %2896 = vmatprep.subr.bf16.mxu0 0
        %2897 = vmatpush1.bf16.msra.mxu0 0
        %2898 = vmatprep.subr.bf16.mxu0 0
        %2899 = vmatpush1.bf16.msra.mxu0 0
        %2900 = vmatprep.subr.bf16.mxu0 0
        %2901 = vmatpush1.bf16.msra.mxu0 0
        %2902 = vmatprep.subr.bf16.mxu0 0
        %2903 = vmatpush1.bf16.msra.mxu0 0
        %2904 = vmatprep.subr.bf16.mxu0 0
        %2905 = vmatpush1.bf16.msra.mxu0 0
        %2906 = vmatprep.mubr.bf16.mxu0 0
        %2907 = vmatmul.mubr.bf16.gmra.mrb[0].mxu0 %v2793
        %v2908 = vpop.f32.mrb[0].mxu0
        %v2909 = vadd.f32 0.0, %v2908
        %v2910 = vpop.f32.mrb[0].mxu0
        %v2911 = vpop.f32.mrb[0].mxu0
        %v2912 = vadd.f32 0.0, %v2911
        %v2913 = vpop.f32.mrb[0].mxu0
        %2914 = vmatprep.mubr.bf16.mxu0 0
        %2915 = vmatmul.mubr.bf16.gmra.mrb[0].mxu0 %v2794
        %v2916 = vpop.f32.mrb[0].mxu0
        %v2917 = vadd.f32 0.0, %v2916
        %v2918 = vpop.f32.mrb[0].mxu0
        %v2919 = vpop.f32.mrb[0].mxu0
        %v2920 = vadd.f32 0.0, %v2919
        %v2921 = vpop.f32.mrb[0].mxu0
        %2922 = vmatprep.mubr.bf16.mxu0 0
        %2923 = vmatmul.mubr.bf16.gmra.mrb[0].mxu0 %v2795
        %v2924 = vpop.f32.mrb[0].mxu0
        %v2925 = vadd.f32 0.0, %v2924
        %v2926 = vpop.f32.mrb[0].mxu0
        %v2927 = vpop.f32.mrb[0].mxu0
        %v2928 = vadd.f32 0.0, %v2927
        %v2929 = vpop.f32.mrb[0].mxu0
        %2930 = vmatprep.mubr.bf16.mxu0 0
        %2931 = vmatmul.mubr.bf16.gmra.mrb[0].mxu0 %v2796
        %v2932 = vpop.f32.mrb[0].mxu0
        %v2933 = vadd.f32 0.0, %v2932
        %v2934 = vpop.f32.mrb[0].mxu0
        %v2935 = vpop.f32.mrb[0].mxu0
        %v2936 = vadd.f32 0.0, %v2935
        %v2937 = vpop.f32.mrb[0].mxu0
        %2938 = vmatprep.mubr.bf16.mxu0 0
        %2939 = vmatmul.mubr.bf16.gmra.mrb[0].mxu0 %v2797
        %v2940 = vpop.f32.mrb[0].mxu0
        %v2941 = vadd.f32 0.0, %v2940
        %v2942 = vpop.f32.mrb[0].mxu0
        %v2943 = vpop.f32.mrb[0].mxu0
        %v2944 = vadd.f32 0.0, %v2943
        %v2945 = vpop.f32.mrb[0].mxu0
        %2946 = vmatprep.mubr.bf16.mxu0 0
        %2947 = vmatmul.mubr.bf16.gmra.mrb[0].mxu0 %v2798
        %v2948 = vpop.f32.mrb[0].mxu0
        %v2949 = vadd.f32 0.0, %v2948
        %v2950 = vpop.f32.mrb[0].mxu0
        %v2951 = vpop.f32.mrb[0].mxu0
        %v2952 = vadd.f32 0.0, %v2951
        %v2953 = vpop.f32.mrb[0].mxu0
        %2954 = vmatprep.mubr.bf16.mxu0 0
        %2955 = vmatmul.mubr.bf16.gmra.mrb[0].mxu0 %v2799
        %v2956 = vpop.f32.mrb[0].mxu0
        %v2957 = vadd.f32 0.0, %v2956
        %v2958 = vpop.f32.mrb[0].mxu0
        %v2959 = vpop.f32.mrb[0].mxu0
        %v2960 = vadd.f32 0.0, %v2959
        %v2961 = vpop.f32.mrb[0].mxu0
        %2962 = vmatprep.mubr.bf16.mxu0 0
        %2963 = vmatmul.mubr.bf16.gmra.mrb[0].mxu0 %v2800
        %v2964 = vpop.f32.mrb[0].mxu0
        %v2965 = vadd.f32 0.0, %v2964
        %v2966 = vpop.f32.mrb[0].mxu0
        %v2967 = vpop.f32.mrb[0].mxu0
        %v2968 = vadd.f32 0.0, %v2967
        %v2969 = vpop.f32.mrb[0].mxu0
        %2970 = vmatprep.mubr.bf16.mxu0 0
        %2971 = vmatmul.mubr.bf16.gmra.mrb[0].mxu0 %v2801
        %v2972 = vpop.f32.mrb[0].mxu0
        %v2973 = vadd.f32 0.0, %v2972
        %v2974 = vpop.f32.mrb[0].mxu0
        %v2975 = vpop.f32.mrb[0].mxu0
        %v2976 = vadd.f32 0.0, %v2975
        %v2977 = vpop.f32.mrb[0].mxu0
        %2978 = vmatprep.mubr.bf16.mxu0 0
        %2979 = vmatmul.mubr.bf16.gmra.mrb[0].mxu0 %v2802
        %v2980 = vpop.f32.mrb[0].mxu0
        %v2981 = vadd.f32 0.0, %v2980
        %v2982 = vpop.f32.mrb[0].mxu0
        %v2983 = vpop.f32.mrb[0].mxu0
        %v2984 = vadd.f32 0.0, %v2983
        %v2985 = vpop.f32.mrb[0].mxu0
        %2986 = vmatprep.mubr.bf16.mxu0 0
        %2987 = vmatmul.mubr.bf16.gmra.mrb[0].mxu0 %v2803
        %v2988 = vpop.f32.mrb[0].mxu0
        %v2989 = vadd.f32 0.0, %v2988
        %v2990 = vpop.f32.mrb[0].mxu0
        %v2991 = vpop.f32.mrb[0].mxu0
        %v2992 = vadd.f32 0.0, %v2991
        %v2993 = vpop.f32.mrb[0].mxu0
        %2994 = vmatprep.mubr.bf16.mxu0 0
        %2995 = vmatmul.mubr.bf16.gmra.mrb[0].mxu0 %v2804
        %v2996 = vpop.f32.mrb[0].mxu0
        %v2997 = vadd.f32 0.0, %v2996
        %v2998 = vpop.f32.mrb[0].mxu0
        %v2999 = vpop.f32.mrb[0].mxu0
        %v3000 = vadd.f32 0.0, %v2999
        %v3001 = vpop.f32.mrb[0].mxu0
        %3002 = vmatprep.mubr.bf16.mxu0 0
        %3003 = vmatmul.mubr.bf16.gmra.mrb[0].mxu0 %v2805
        %v3004 = vpop.f32.mrb[0].mxu0
        %v3005 = vadd.f32 0.0, %v3004
        %v3006 = vpop.f32.mrb[0].mxu0
        %v3007 = vpop.f32.mrb[0].mxu0
        %v3008 = vadd.f32 0.0, %v3007
        %v3009 = vpop.f32.mrb[0].mxu0
        %3010 = vmatprep.mubr.bf16.mxu0 0
        %3011 = vmatmul.mubr.bf16.gmra.mrb[0].mxu0 %v2806
        %v3012 = vpop.f32.mrb[0].mxu0
        %v3013 = vadd.f32 0.0, %v3012
        %v3014 = vpop.f32.mrb[0].mxu0
        %v3015 = vpop.f32.mrb[0].mxu0
        %v3016 = vadd.f32 0.0, %v3015
        %v3017 = vpop.f32.mrb[0].mxu0
        %3018 = vmatprep.mubr.bf16.mxu0 0
        %3019 = vmatmul.mubr.bf16.gmra.mrb[0].mxu0 %v2807
        %v3020 = vpop.f32.mrb[0].mxu0
        %v3021 = vadd.f32 0.0, %v3020
        %v3022 = vpop.f32.mrb[0].mxu0
        %v3023 = vpop.f32.mrb[0].mxu0
        %v3024 = vadd.f32 0.0, %v3023
        %v3025 = vpop.f32.mrb[0].mxu0
        %3026 = vmatprep.mubr.bf16.mxu0 0
        %3027 = vmatmul.mubr.bf16.gmra.mrb[0].mxu0 %v2808
        %v3028 = vpop.f32.mrb[0].mxu0
        %v3029 = vadd.f32 0.0, %v3028
        %v3030 = vpop.f32.mrb[0].mxu0
        %v3031 = vpop.f32.mrb[0].mxu0
        %v3032 = vadd.f32 0.0, %v3031
        %v3033 = vpop.f32.mrb[0].mxu0
        %3034 = vdwg.mxu0
        %v3035 = vadd.f32 %v2729, %v2909
        %v3036 = vadd.f32 %v2730, %v2912
        %v3037 = vadd.f32 %v2731, %v2917
        %v3038 = vadd.f32 %v2732, %v2920
        %v3039 = vadd.f32 %v2733, %v2925
        %v3040 = vadd.f32 %v2734, %v2928
        %v3041 = vadd.f32 %v2735, %v2933
        %v3042 = vadd.f32 %v2736, %v2936
        %v3043 = vadd.f32 %v2737, %v2941
        %v3044 = vadd.f32 %v2738, %v2944
        %v3045 = vadd.f32 %v2739, %v2949
        %v3046 = vadd.f32 %v2740, %v2952
        %v3047 = vadd.f32 %v2741, %v2957
        %v3048 = vadd.f32 %v2742, %v2960
        %v3049 = vadd.f32 %v2743, %v2965
        %v3050 = vadd.f32 %v2744, %v2968
        %v3051 = vadd.f32 %v2745, %v2973
        %v3052 = vadd.f32 %v2746, %v2976
        %v3053 = vadd.f32 %v2747, %v2981
        %v3054 = vadd.f32 %v2748, %v2984
        %v3055 = vadd.f32 %v2749, %v2989
        %v3056 = vadd.f32 %v2750, %v2992
        %v3057 = vadd.f32 %v2751, %v2997
        %v3058 = vadd.f32 %v2752, %v3000
        %v3059 = vadd.f32 %v2753, %v3005
        %v3060 = vadd.f32 %v2754, %v3008
        %v3061 = vadd.f32 %v2755, %v3013
        %v3062 = vadd.f32 %v2756, %v3016
        %v3063 = vadd.f32 %v2757, %v3021
        %v3064 = vadd.f32 %v2758, %v3024
        %v3065 = vadd.f32 %v2759, %v3029
        %v3066 = vadd.f32 %v2760, %v3032
        %s3067 = scalar_lea.vmem [#allocation2], 48
        %v3068 = vld [vmem:[%s3067] sm:$0xff]
        %v3069 = vld [vmem:[%s3067 + $0x8] sm:$0xff]
        %v3070 = vld [vmem:[%s3067 + $0x18] sm:$0xff]
        %v3071 = vld [vmem:[%s3067 + $0x20] sm:$0xff]
        %v3072 = vld [vmem:[%s3067 + $0x30] sm:$0xff]
        %v3073 = vld [vmem:[%s3067 + $0x38] sm:$0xff]
        %v3074 = vld [vmem:[%s3067 + $0x48] sm:$0xff]
        %v3075 = vld [vmem:[%s3067 + $0x50] sm:$0xff]
        %v3076 = vld [vmem:[%s3067 + $0x60] sm:$0xff]
        %v3077 = vld [vmem:[%s3067 + $0x68] sm:$0xff]
        %v3078 = vld [vmem:[%s3067 + $0x78] sm:$0xff]
        %v3079 = vld [vmem:[%s3067 + $0x80] sm:$0xff]
        %v3080 = vld [vmem:[%s3067 + $0x90] sm:$0xff]
        %v3081 = vld [vmem:[%s3067 + $0x98] sm:$0xff]
        %v3082 = vld [vmem:[%s3067 + $0xa8] sm:$0xff]
        %v3083 = vld [vmem:[%s3067 + $0xb0] sm:$0xff]
        %v3084 = vld [vmem:[%s3067 + $0xc0] sm:$0xff]
        %v3085 = vld [vmem:[%s3067 + $0xc8] sm:$0xff]
        %v3086 = vld [vmem:[%s3067 + $0xd8] sm:$0xff]
        %v3087 = vld [vmem:[%s3067 + $0xe0] sm:$0xff]
        %v3088 = vld [vmem:[%s3067 + $0xf0] sm:$0xff]
        %v3089 = vld [vmem:[%s3067 + $0xf8] sm:$0xff]
        %v3090 = vld [vmem:[%s3067 + $0x108] sm:$0xff]
        %v3091 = vld [vmem:[%s3067 + $0x110] sm:$0xff]
        %v3092 = vld [vmem:[%s3067 + $0x120] sm:$0xff]
        %v3093 = vld [vmem:[%s3067 + $0x128] sm:$0xff]
        %v3094 = vld [vmem:[%s3067 + $0x138] sm:$0xff]
        %v3095 = vld [vmem:[%s3067 + $0x140] sm:$0xff]
        %v3096 = vld [vmem:[%s3067 + $0x150] sm:$0xff]
        %v3097 = vld [vmem:[%s3067 + $0x158] sm:$0xff]
        %v3098 = vld [vmem:[%s3067 + $0x168] sm:$0xff]
        %v3099 = vld [vmem:[%s3067 + $0x170] sm:$0xff]
        %v3100 = vpack.c.bf16 %v3069, %v3068
        %v3101 = vpack.c.bf16 %v3071, %v3070
        %v3102 = vpack.c.bf16 %v3073, %v3072
        %v3103 = vpack.c.bf16 %v3075, %v3074
        %v3104 = vpack.c.bf16 %v3077, %v3076
        %v3105 = vpack.c.bf16 %v3079, %v3078
        %v3106 = vpack.c.bf16 %v3081, %v3080
        %v3107 = vpack.c.bf16 %v3083, %v3082
        %v3108 = vpack.c.bf16 %v3085, %v3084
        %v3109 = vpack.c.bf16 %v3087, %v3086
        %v3110 = vpack.c.bf16 %v3089, %v3088
        %v3111 = vpack.c.bf16 %v3091, %v3090
        %v3112 = vpack.c.bf16 %v3093, %v3092
        %v3113 = vpack.c.bf16 %v3095, %v3094
        %v3114 = vpack.c.bf16 %v3097, %v3096
        %v3115 = vpack.c.bf16 %v3099, %v3098
        %s3116 = scalar_lea.vmem %s6, 384
        %v3117 = vld [vmem:[%s3116] sm:$0xf]
        %v3118 = vld [vmem:[%s3116 + $0x4] sm:$0xf]
        %v3119 = vld [vmem:[%s3116 + $0x8] sm:$0xf]
        %v3120 = vld [vmem:[%s3116 + $0xc] sm:$0xf]
        %v3121 = vld [vmem:[%s3116 + $0x10] sm:$0xf]
        %v3122 = vld [vmem:[%s3116 + $0x14] sm:$0xf]
        %v3123 = vld [vmem:[%s3116 + $0x18] sm:$0xf]
        %v3124 = vld [vmem:[%s3116 + $0x1c] sm:$0xf]
        %v3125 = vld [vmem:[%s3116 + $0x20] sm:$0xf]
        %v3126 = vld [vmem:[%s3116 + $0x24] sm:$0xf]
        %v3127 = vld [vmem:[%s3116 + $0x28] sm:$0xf]
        %v3128 = vld [vmem:[%s3116 + $0x2c] sm:$0xf]
        %v3129 = vld [vmem:[%s3116 + $0x30] sm:$0xf]
        %v3130 = vld [vmem:[%s3116 + $0x34] sm:$0xf]
        %v3131 = vld [vmem:[%s3116 + $0x38] sm:$0xf]
        %v3132 = vld [vmem:[%s3116 + $0x3c] sm:$0xf]
        %v3149 = vunpack.c.l.b16 %v3117
        %v3150 = vunpack.c.l.b16 %v3118
        %v3151 = vunpack.c.l.b16 %v3119
        %v3152 = vunpack.c.l.b16 %v3120
        %v3153 = vunpack.c.l.b16 %v3121
        %v3154 = vunpack.c.l.b16 %v3122
        %v3155 = vunpack.c.l.b16 %v3123
        %v3156 = vunpack.c.l.b16 %v3124
        %v3157 = vunpack.c.l.b16 %v3125
        %v3158 = vunpack.c.l.b16 %v3126
        %v3159 = vunpack.c.l.b16 %v3127
        %v3160 = vunpack.c.l.b16 %v3128
        %v3161 = vunpack.c.l.b16 %v3129
        %v3162 = vunpack.c.l.b16 %v3130
        %v3163 = vunpack.c.l.b16 %v3131
        %v3164 = vunpack.c.l.b16 %v3132
        %v3165 = vpack.c.b16 %v3150, %v3149
        %v3166 = vpack.c.b16 %v3152, %v3151
        %v3167 = vpack.c.b16 %v3154, %v3153
        %v3168 = vpack.c.b16 %v3156, %v3155
        %v3169 = vpack.c.b16 %v3158, %v3157
        %v3170 = vpack.c.b16 %v3160, %v3159
        %v3171 = vpack.c.b16 %v3162, %v3161
        %v3172 = vpack.c.b16 %v3164, %v3163
        %3181 = vmatprep.subr.bf16.mxu0 0
        %3182 = vmatpush1.bf16.msra.mxu0 %v3165
        %3183 = vmatprep.subr.bf16.mxu0 0
        %3184 = vmatpush1.bf16.msra.mxu0 %v3166
        %3185 = vmatprep.subr.bf16.mxu0 0
        %3186 = vmatpush1.bf16.msra.mxu0 %v3167
        %3187 = vmatprep.subr.bf16.mxu0 0
        %3188 = vmatpush1.bf16.msra.mxu0 %v3168
        %3189 = vmatprep.subr.bf16.mxu0 0
        %3190 = vmatpush1.bf16.msra.mxu0 %v3169
        %3191 = vmatprep.subr.bf16.mxu0 0
        %3192 = vmatpush1.bf16.msra.mxu0 %v3170
        %3193 = vmatprep.subr.bf16.mxu0 0
        %3194 = vmatpush1.bf16.msra.mxu0 %v3171
        %3195 = vmatprep.subr.bf16.mxu0 0
        %3196 = vmatpush1.bf16.msra.mxu0 %v3172
        %3197 = vmatprep.subr.bf16.mxu0 0
        %3198 = vmatpush1.bf16.msra.mxu0 0
        %3199 = vmatprep.subr.bf16.mxu0 0
        %3200 = vmatpush1.bf16.msra.mxu0 0
        %3201 = vmatprep.subr.bf16.mxu0 0
        %3202 = vmatpush1.bf16.msra.mxu0 0
        %3203 = vmatprep.subr.bf16.mxu0 0
        %3204 = vmatpush1.bf16.msra.mxu0 0
        %3205 = vmatprep.subr.bf16.mxu0 0
        %3206 = vmatpush1.bf16.msra.mxu0 0
        %3207 = vmatprep.subr.bf16.mxu0 0
        %3208 = vmatpush1.bf16.msra.mxu0 0
        %3209 = vmatprep.subr.bf16.mxu0 0
        %3210 = vmatpush1.bf16.msra.mxu0 0
        %3211 = vmatprep.subr.bf16.mxu0 0
        %3212 = vmatpush1.bf16.msra.mxu0 0
        %3213 = vmatprep.mubr.bf16.mxu0 0
        %3214 = vmatmul.mubr.bf16.gmra.mrb[0].mxu0 %v3100
        %v3215 = vpop.f32.mrb[0].mxu0
        %v3216 = vadd.f32 0.0, %v3215
        %v3217 = vpop.f32.mrb[0].mxu0
        %v3218 = vpop.f32.mrb[0].mxu0
        %v3219 = vadd.f32 0.0, %v3218
        %v3220 = vpop.f32.mrb[0].mxu0
        %3221 = vmatprep.mubr.bf16.mxu0 0
        %3222 = vmatmul.mubr.bf16.gmra.mrb[0].mxu0 %v3101
        %v3223 = vpop.f32.mrb[0].mxu0
        %v3224 = vadd.f32 0.0, %v3223
        %v3225 = vpop.f32.mrb[0].mxu0
        %v3226 = vpop.f32.mrb[0].mxu0
        %v3227 = vadd.f32 0.0, %v3226
        %v3228 = vpop.f32.mrb[0].mxu0
        %3229 = vmatprep.mubr.bf16.mxu0 0
        %3230 = vmatmul.mubr.bf16.gmra.mrb[0].mxu0 %v3102
        %v3231 = vpop.f32.mrb[0].mxu0
        %v3232 = vadd.f32 0.0, %v3231
        %v3233 = vpop.f32.mrb[0].mxu0
        %v3234 = vpop.f32.mrb[0].mxu0
        %v3235 = vadd.f32 0.0, %v3234
        %v3236 = vpop.f32.mrb[0].mxu0
        %3237 = vmatprep.mubr.bf16.mxu0 0
        %3238 = vmatmul.mubr.bf16.gmra.mrb[0].mxu0 %v3103
        %v3239 = vpop.f32.mrb[0].mxu0
        %v3240 = vadd.f32 0.0, %v3239
        %v3241 = vpop.f32.mrb[0].mxu0
        %v3242 = vpop.f32.mrb[0].mxu0
        %v3243 = vadd.f32 0.0, %v3242
        %v3244 = vpop.f32.mrb[0].mxu0
        %3245 = vmatprep.mubr.bf16.mxu0 0
        %3246 = vmatmul.mubr.bf16.gmra.mrb[0].mxu0 %v3104
        %v3247 = vpop.f32.mrb[0].mxu0
        %v3248 = vadd.f32 0.0, %v3247
        %v3249 = vpop.f32.mrb[0].mxu0
        %v3250 = vpop.f32.mrb[0].mxu0
        %v3251 = vadd.f32 0.0, %v3250
        %v3252 = vpop.f32.mrb[0].mxu0
        %3253 = vmatprep.mubr.bf16.mxu0 0
        %3254 = vmatmul.mubr.bf16.gmra.mrb[0].mxu0 %v3105
        %v3255 = vpop.f32.mrb[0].mxu0
        %v3256 = vadd.f32 0.0, %v3255
        %v3257 = vpop.f32.mrb[0].mxu0
        %v3258 = vpop.f32.mrb[0].mxu0
        %v3259 = vadd.f32 0.0, %v3258
        %v3260 = vpop.f32.mrb[0].mxu0
        %3261 = vmatprep.mubr.bf16.mxu0 0
        %3262 = vmatmul.mubr.bf16.gmra.mrb[0].mxu0 %v3106
        %v3263 = vpop.f32.mrb[0].mxu0
        %v3264 = vadd.f32 0.0, %v3263
        %v3265 = vpop.f32.mrb[0].mxu0
        %v3266 = vpop.f32.mrb[0].mxu0
        %v3267 = vadd.f32 0.0, %v3266
        %v3268 = vpop.f32.mrb[0].mxu0
        %3269 = vmatprep.mubr.bf16.mxu0 0
        %3270 = vmatmul.mubr.bf16.gmra.mrb[0].mxu0 %v3107
        %v3271 = vpop.f32.mrb[0].mxu0
        %v3272 = vadd.f32 0.0, %v3271
        %v3273 = vpop.f32.mrb[0].mxu0
        %v3274 = vpop.f32.mrb[0].mxu0
        %v3275 = vadd.f32 0.0, %v3274
        %v3276 = vpop.f32.mrb[0].mxu0
        %3277 = vmatprep.mubr.bf16.mxu0 0
        %3278 = vmatmul.mubr.bf16.gmra.mrb[0].mxu0 %v3108
        %v3279 = vpop.f32.mrb[0].mxu0
        %v3280 = vadd.f32 0.0, %v3279
        %v3281 = vpop.f32.mrb[0].mxu0
        %v3282 = vpop.f32.mrb[0].mxu0
        %v3283 = vadd.f32 0.0, %v3282
        %v3284 = vpop.f32.mrb[0].mxu0
        %3285 = vmatprep.mubr.bf16.mxu0 0
        %3286 = vmatmul.mubr.bf16.gmra.mrb[0].mxu0 %v3109
        %v3287 = vpop.f32.mrb[0].mxu0
        %v3288 = vadd.f32 0.0, %v3287
        %v3289 = vpop.f32.mrb[0].mxu0
        %v3290 = vpop.f32.mrb[0].mxu0
        %v3291 = vadd.f32 0.0, %v3290
        %v3292 = vpop.f32.mrb[0].mxu0
        %3293 = vmatprep.mubr.bf16.mxu0 0
        %3294 = vmatmul.mubr.bf16.gmra.mrb[0].mxu0 %v3110
        %v3295 = vpop.f32.mrb[0].mxu0
        %v3296 = vadd.f32 0.0, %v3295
        %v3297 = vpop.f32.mrb[0].mxu0
        %v3298 = vpop.f32.mrb[0].mxu0
        %v3299 = vadd.f32 0.0, %v3298
        %v3300 = vpop.f32.mrb[0].mxu0
        %3301 = vmatprep.mubr.bf16.mxu0 0
        %3302 = vmatmul.mubr.bf16.gmra.mrb[0].mxu0 %v3111
        %v3303 = vpop.f32.mrb[0].mxu0
        %v3304 = vadd.f32 0.0, %v3303
        %v3305 = vpop.f32.mrb[0].mxu0
        %v3306 = vpop.f32.mrb[0].mxu0
        %v3307 = vadd.f32 0.0, %v3306
        %v3308 = vpop.f32.mrb[0].mxu0
        %3309 = vmatprep.mubr.bf16.mxu0 0
        %3310 = vmatmul.mubr.bf16.gmra.mrb[0].mxu0 %v3112
        %v3311 = vpop.f32.mrb[0].mxu0
        %v3312 = vadd.f32 0.0, %v3311
        %v3313 = vpop.f32.mrb[0].mxu0
        %v3314 = vpop.f32.mrb[0].mxu0
        %v3315 = vadd.f32 0.0, %v3314
        %v3316 = vpop.f32.mrb[0].mxu0
        %3317 = vmatprep.mubr.bf16.mxu0 0
        %3318 = vmatmul.mubr.bf16.gmra.mrb[0].mxu0 %v3113
        %v3319 = vpop.f32.mrb[0].mxu0
        %v3320 = vadd.f32 0.0, %v3319
        %v3321 = vpop.f32.mrb[0].mxu0
        %v3322 = vpop.f32.mrb[0].mxu0
        %v3323 = vadd.f32 0.0, %v3322
        %v3324 = vpop.f32.mrb[0].mxu0
        %3325 = vmatprep.mubr.bf16.mxu0 0
        %3326 = vmatmul.mubr.bf16.gmra.mrb[0].mxu0 %v3114
        %v3327 = vpop.f32.mrb[0].mxu0
        %v3328 = vadd.f32 0.0, %v3327
        %v3329 = vpop.f32.mrb[0].mxu0
        %v3330 = vpop.f32.mrb[0].mxu0
        %v3331 = vadd.f32 0.0, %v3330
        %v3332 = vpop.f32.mrb[0].mxu0
        %3333 = vmatprep.mubr.bf16.mxu0 0
        %3334 = vmatmul.mubr.bf16.gmra.mrb[0].mxu0 %v3115
        %v3335 = vpop.f32.mrb[0].mxu0
        %v3336 = vadd.f32 0.0, %v3335
        %v3337 = vpop.f32.mrb[0].mxu0
        %v3338 = vpop.f32.mrb[0].mxu0
        %v3339 = vadd.f32 0.0, %v3338
        %v3340 = vpop.f32.mrb[0].mxu0
        %3341 = vdwg.mxu0
        %v3342 = vadd.f32 %v3035, %v3216
        %v3343 = vadd.f32 %v3036, %v3219
        %v3344 = vadd.f32 %v3037, %v3224
        %v3345 = vadd.f32 %v3038, %v3227
        %v3346 = vadd.f32 %v3039, %v3232
        %v3347 = vadd.f32 %v3040, %v3235
        %v3348 = vadd.f32 %v3041, %v3240
        %v3349 = vadd.f32 %v3042, %v3243
        %v3350 = vadd.f32 %v3043, %v3248
        %v3351 = vadd.f32 %v3044, %v3251
        %v3352 = vadd.f32 %v3045, %v3256
        %v3353 = vadd.f32 %v3046, %v3259
        %v3354 = vadd.f32 %v3047, %v3264
        %v3355 = vadd.f32 %v3048, %v3267
        %v3356 = vadd.f32 %v3049, %v3272
        %v3357 = vadd.f32 %v3050, %v3275
        %v3358 = vadd.f32 %v3051, %v3280
        %v3359 = vadd.f32 %v3052, %v3283
        %v3360 = vadd.f32 %v3053, %v3288
        %v3361 = vadd.f32 %v3054, %v3291
        %v3362 = vadd.f32 %v3055, %v3296
        %v3363 = vadd.f32 %v3056, %v3299
        %v3364 = vadd.f32 %v3057, %v3304
        %v3365 = vadd.f32 %v3058, %v3307
        %v3366 = vadd.f32 %v3059, %v3312
        %v3367 = vadd.f32 %v3060, %v3315
        %v3368 = vadd.f32 %v3061, %v3320
        %v3369 = vadd.f32 %v3062, %v3323
        %v3370 = vadd.f32 %v3063, %v3328
        %v3371 = vadd.f32 %v3064, %v3331
        %v3372 = vadd.f32 %v3065, %v3336
        %v3373 = vadd.f32 %v3066, %v3339
        %v3374 = vld [vmem:[%s3067 + $0x1] sm:$0xff]
        %v3375 = vld [vmem:[%s3067 + $0x9] sm:$0xff]
        %v3376 = vld [vmem:[%s3067 + $0x19] sm:$0xff]
        %v3377 = vld [vmem:[%s3067 + $0x21] sm:$0xff]
        %v3378 = vld [vmem:[%s3067 + $0x31] sm:$0xff]
        %v3379 = vld [vmem:[%s3067 + $0x39] sm:$0xff]
        %v3380 = vld [vmem:[%s3067 + $0x49] sm:$0xff]
        %v3381 = vld [vmem:[%s3067 + $0x51] sm:$0xff]
        %v3382 = vld [vmem:[%s3067 + $0x61] sm:$0xff]
        %v3383 = vld [vmem:[%s3067 + $0x69] sm:$0xff]
        %v3384 = vld [vmem:[%s3067 + $0x79] sm:$0xff]
        %v3385 = vld [vmem:[%s3067 + $0x81] sm:$0xff]
        %v3386 = vld [vmem:[%s3067 + $0x91] sm:$0xff]
        %v3387 = vld [vmem:[%s3067 + $0x99] sm:$0xff]
        %v3388 = vld [vmem:[%s3067 + $0xa9] sm:$0xff]
        %v3389 = vld [vmem:[%s3067 + $0xb1] sm:$0xff]
        %v3390 = vld [vmem:[%s3067 + $0xc1] sm:$0xff]
        %v3391 = vld [vmem:[%s3067 + $0xc9] sm:$0xff]
        %v3392 = vld [vmem:[%s3067 + $0xd9] sm:$0xff]
        %v3393 = vld [vmem:[%s3067 + $0xe1] sm:$0xff]
        %v3394 = vld [vmem:[%s3067 + $0xf1] sm:$0xff]
        %v3395 = vld [vmem:[%s3067 + $0xf9] sm:$0xff]
        %v3396 = vld [vmem:[%s3067 + $0x109] sm:$0xff]
        %v3397 = vld [vmem:[%s3067 + $0x111] sm:$0xff]
        %v3398 = vld [vmem:[%s3067 + $0x121] sm:$0xff]
        %v3399 = vld [vmem:[%s3067 + $0x129] sm:$0xff]
        %v3400 = vld [vmem:[%s3067 + $0x139] sm:$0xff]
        %v3401 = vld [vmem:[%s3067 + $0x141] sm:$0xff]
        %v3402 = vld [vmem:[%s3067 + $0x151] sm:$0xff]
        %v3403 = vld [vmem:[%s3067 + $0x159] sm:$0xff]
        %v3404 = vld [vmem:[%s3067 + $0x169] sm:$0xff]
        %v3405 = vld [vmem:[%s3067 + $0x171] sm:$0xff]
        %v3406 = vpack.c.bf16 %v3375, %v3374
        %v3407 = vpack.c.bf16 %v3377, %v3376
        %v3408 = vpack.c.bf16 %v3379, %v3378
        %v3409 = vpack.c.bf16 %v3381, %v3380
        %v3410 = vpack.c.bf16 %v3383, %v3382
        %v3411 = vpack.c.bf16 %v3385, %v3384
        %v3412 = vpack.c.bf16 %v3387, %v3386
        %v3413 = vpack.c.bf16 %v3389, %v3388
        %v3414 = vpack.c.bf16 %v3391, %v3390
        %v3415 = vpack.c.bf16 %v3393, %v3392
        %v3416 = vpack.c.bf16 %v3395, %v3394
        %v3417 = vpack.c.bf16 %v3397, %v3396
        %v3418 = vpack.c.bf16 %v3399, %v3398
        %v3419 = vpack.c.bf16 %v3401, %v3400
        %v3420 = vpack.c.bf16 %v3403, %v3402
        %v3421 = vpack.c.bf16 %v3405, %v3404
        %s3422 = scalar_lea.vmem %s6, 448
        %v3423 = vld [vmem:[%s3422] sm:$0xf]
        %v3424 = vld [vmem:[%s3422 + $0x4] sm:$0xf]
        %v3425 = vld [vmem:[%s3422 + $0x8] sm:$0xf]
        %v3426 = vld [vmem:[%s3422 + $0xc] sm:$0xf]
        %v3427 = vld [vmem:[%s3422 + $0x10] sm:$0xf]
        %v3428 = vld [vmem:[%s3422 + $0x14] sm:$0xf]
        %v3429 = vld [vmem:[%s3422 + $0x18] sm:$0xf]
        %v3430 = vld [vmem:[%s3422 + $0x1c] sm:$0xf]
        %v3431 = vld [vmem:[%s3422 + $0x20] sm:$0xf]
        %v3432 = vld [vmem:[%s3422 + $0x24] sm:$0xf]
        %v3433 = vld [vmem:[%s3422 + $0x28] sm:$0xf]
        %v3434 = vld [vmem:[%s3422 + $0x2c] sm:$0xf]
        %v3435 = vld [vmem:[%s3422 + $0x30] sm:$0xf]
        %v3436 = vld [vmem:[%s3422 + $0x34] sm:$0xf]
        %v3437 = vld [vmem:[%s3422 + $0x38] sm:$0xf]
        %v3438 = vld [vmem:[%s3422 + $0x3c] sm:$0xf]
        %v3455 = vunpack.c.l.b16 %v3423
        %v3456 = vunpack.c.l.b16 %v3424
        %v3457 = vunpack.c.l.b16 %v3425
        %v3458 = vunpack.c.l.b16 %v3426
        %v3459 = vunpack.c.l.b16 %v3427
        %v3460 = vunpack.c.l.b16 %v3428
        %v3461 = vunpack.c.l.b16 %v3429
        %v3462 = vunpack.c.l.b16 %v3430
        %v3463 = vunpack.c.l.b16 %v3431
        %v3464 = vunpack.c.l.b16 %v3432
        %v3465 = vunpack.c.l.b16 %v3433
        %v3466 = vunpack.c.l.b16 %v3434
        %v3467 = vunpack.c.l.b16 %v3435
        %v3468 = vunpack.c.l.b16 %v3436
        %v3469 = vunpack.c.l.b16 %v3437
        %v3470 = vunpack.c.l.b16 %v3438
        %v3471 = vpack.c.b16 %v3456, %v3455
        %v3472 = vpack.c.b16 %v3458, %v3457
        %v3473 = vpack.c.b16 %v3460, %v3459
        %v3474 = vpack.c.b16 %v3462, %v3461
        %v3475 = vpack.c.b16 %v3464, %v3463
        %v3476 = vpack.c.b16 %v3466, %v3465
        %v3477 = vpack.c.b16 %v3468, %v3467
        %v3478 = vpack.c.b16 %v3470, %v3469
        %3487 = vmatprep.subr.bf16.mxu0 0
        %3488 = vmatpush1.bf16.msra.mxu0 %v3471
        %3489 = vmatprep.subr.bf16.mxu0 0
        %3490 = vmatpush1.bf16.msra.mxu0 %v3472
        %3491 = vmatprep.subr.bf16.mxu0 0
        %3492 = vmatpush1.bf16.msra.mxu0 %v3473
        %3493 = vmatprep.subr.bf16.mxu0 0
        %3494 = vmatpush1.bf16.msra.mxu0 %v3474
        %3495 = vmatprep.subr.bf16.mxu0 0
        %3496 = vmatpush1.bf16.msra.mxu0 %v3475
        %3497 = vmatprep.subr.bf16.mxu0 0
        %3498 = vmatpush1.bf16.msra.mxu0 %v3476
        %3499 = vmatprep.subr.bf16.mxu0 0
        %3500 = vmatpush1.bf16.msra.mxu0 %v3477
        %3501 = vmatprep.subr.bf16.mxu0 0
        %3502 = vmatpush1.bf16.msra.mxu0 %v3478
        %3503 = vmatprep.subr.bf16.mxu0 0
        %3504 = vmatpush1.bf16.msra.mxu0 0
        %3505 = vmatprep.subr.bf16.mxu0 0
        %3506 = vmatpush1.bf16.msra.mxu0 0
        %3507 = vmatprep.subr.bf16.mxu0 0
        %3508 = vmatpush1.bf16.msra.mxu0 0
        %3509 = vmatprep.subr.bf16.mxu0 0
        %3510 = vmatpush1.bf16.msra.mxu0 0
        %3511 = vmatprep.subr.bf16.mxu0 0
        %3512 = vmatpush1.bf16.msra.mxu0 0
        %3513 = vmatprep.subr.bf16.mxu0 0
        %3514 = vmatpush1.bf16.msra.mxu0 0
        %3515 = vmatprep.subr.bf16.mxu0 0
        %3516 = vmatpush1.bf16.msra.mxu0 0
        %3517 = vmatprep.subr.bf16.mxu0 0
        %3518 = vmatpush1.bf16.msra.mxu0 0
        %3519 = vmatprep.mubr.bf16.mxu0 0
        %3520 = vmatmul.mubr.bf16.gmra.mrb[0].mxu0 %v3406
        %v3521 = vpop.f32.mrb[0].mxu0
        %v3522 = vadd.f32 0.0, %v3521
        %v3523 = vpop.f32.mrb[0].mxu0
        %v3524 = vpop.f32.mrb[0].mxu0
        %v3525 = vadd.f32 0.0, %v3524
        %v3526 = vpop.f32.mrb[0].mxu0
        %3527 = vmatprep.mubr.bf16.mxu0 0
        %3528 = vmatmul.mubr.bf16.gmra.mrb[0].mxu0 %v3407
        %v3529 = vpop.f32.mrb[0].mxu0
        %v3530 = vadd.f32 0.0, %v3529
        %v3531 = vpop.f32.mrb[0].mxu0
        %v3532 = vpop.f32.mrb[0].mxu0
        %v3533 = vadd.f32 0.0, %v3532
        %v3534 = vpop.f32.mrb[0].mxu0
        %3535 = vmatprep.mubr.bf16.mxu0 0
        %3536 = vmatmul.mubr.bf16.gmra.mrb[0].mxu0 %v3408
        %v3537 = vpop.f32.mrb[0].mxu0
        %v3538 = vadd.f32 0.0, %v3537
        %v3539 = vpop.f32.mrb[0].mxu0
        %v3540 = vpop.f32.mrb[0].mxu0
        %v3541 = vadd.f32 0.0, %v3540
        %v3542 = vpop.f32.mrb[0].mxu0
        %3543 = vmatprep.mubr.bf16.mxu0 0
        %3544 = vmatmul.mubr.bf16.gmra.mrb[0].mxu0 %v3409
        %v3545 = vpop.f32.mrb[0].mxu0
        %v3546 = vadd.f32 0.0, %v3545
        %v3547 = vpop.f32.mrb[0].mxu0
        %v3548 = vpop.f32.mrb[0].mxu0
        %v3549 = vadd.f32 0.0, %v3548
        %v3550 = vpop.f32.mrb[0].mxu0
        %3551 = vmatprep.mubr.bf16.mxu0 0
        %3552 = vmatmul.mubr.bf16.gmra.mrb[0].mxu0 %v3410
        %v3553 = vpop.f32.mrb[0].mxu0
        %v3554 = vadd.f32 0.0, %v3553
        %v3555 = vpop.f32.mrb[0].mxu0
        %v3556 = vpop.f32.mrb[0].mxu0
        %v3557 = vadd.f32 0.0, %v3556
        %v3558 = vpop.f32.mrb[0].mxu0
        %3559 = vmatprep.mubr.bf16.mxu0 0
        %3560 = vmatmul.mubr.bf16.gmra.mrb[0].mxu0 %v3411
        %v3561 = vpop.f32.mrb[0].mxu0
        %v3562 = vadd.f32 0.0, %v3561
        %v3563 = vpop.f32.mrb[0].mxu0
        %v3564 = vpop.f32.mrb[0].mxu0
        %v3565 = vadd.f32 0.0, %v3564
        %v3566 = vpop.f32.mrb[0].mxu0
        %3567 = vmatprep.mubr.bf16.mxu0 0
        %3568 = vmatmul.mubr.bf16.gmra.mrb[0].mxu0 %v3412
        %v3569 = vpop.f32.mrb[0].mxu0
        %v3570 = vadd.f32 0.0, %v3569
        %v3571 = vpop.f32.mrb[0].mxu0
        %v3572 = vpop.f32.mrb[0].mxu0
        %v3573 = vadd.f32 0.0, %v3572
        %v3574 = vpop.f32.mrb[0].mxu0
        %3575 = vmatprep.mubr.bf16.mxu0 0
        %3576 = vmatmul.mubr.bf16.gmra.mrb[0].mxu0 %v3413
        %v3577 = vpop.f32.mrb[0].mxu0
        %v3578 = vadd.f32 0.0, %v3577
        %v3579 = vpop.f32.mrb[0].mxu0
        %v3580 = vpop.f32.mrb[0].mxu0
        %v3581 = vadd.f32 0.0, %v3580
        %v3582 = vpop.f32.mrb[0].mxu0
        %3583 = vmatprep.mubr.bf16.mxu0 0
        %3584 = vmatmul.mubr.bf16.gmra.mrb[0].mxu0 %v3414
        %v3585 = vpop.f32.mrb[0].mxu0
        %v3586 = vadd.f32 0.0, %v3585
        %v3587 = vpop.f32.mrb[0].mxu0
        %v3588 = vpop.f32.mrb[0].mxu0
        %v3589 = vadd.f32 0.0, %v3588
        %v3590 = vpop.f32.mrb[0].mxu0
        %3591 = vmatprep.mubr.bf16.mxu0 0
        %3592 = vmatmul.mubr.bf16.gmra.mrb[0].mxu0 %v3415
        %v3593 = vpop.f32.mrb[0].mxu0
        %v3594 = vadd.f32 0.0, %v3593
        %v3595 = vpop.f32.mrb[0].mxu0
        %v3596 = vpop.f32.mrb[0].mxu0
        %v3597 = vadd.f32 0.0, %v3596
        %v3598 = vpop.f32.mrb[0].mxu0
        %3599 = vmatprep.mubr.bf16.mxu0 0
        %3600 = vmatmul.mubr.bf16.gmra.mrb[0].mxu0 %v3416
        %v3601 = vpop.f32.mrb[0].mxu0
        %v3602 = vadd.f32 0.0, %v3601
        %v3603 = vpop.f32.mrb[0].mxu0
        %v3604 = vpop.f32.mrb[0].mxu0
        %v3605 = vadd.f32 0.0, %v3604
        %v3606 = vpop.f32.mrb[0].mxu0
        %3607 = vmatprep.mubr.bf16.mxu0 0
        %3608 = vmatmul.mubr.bf16.gmra.mrb[0].mxu0 %v3417
        %v3609 = vpop.f32.mrb[0].mxu0
        %v3610 = vadd.f32 0.0, %v3609
        %v3611 = vpop.f32.mrb[0].mxu0
        %v3612 = vpop.f32.mrb[0].mxu0
        %v3613 = vadd.f32 0.0, %v3612
        %v3614 = vpop.f32.mrb[0].mxu0
        %3615 = vmatprep.mubr.bf16.mxu0 0
        %3616 = vmatmul.mubr.bf16.gmra.mrb[0].mxu0 %v3418
        %v3617 = vpop.f32.mrb[0].mxu0
        %v3618 = vadd.f32 0.0, %v3617
        %v3619 = vpop.f32.mrb[0].mxu0
        %v3620 = vpop.f32.mrb[0].mxu0
        %v3621 = vadd.f32 0.0, %v3620
        %v3622 = vpop.f32.mrb[0].mxu0
        %3623 = vmatprep.mubr.bf16.mxu0 0
        %3624 = vmatmul.mubr.bf16.gmra.mrb[0].mxu0 %v3419
        %v3625 = vpop.f32.mrb[0].mxu0
        %v3626 = vadd.f32 0.0, %v3625
        %v3627 = vpop.f32.mrb[0].mxu0
        %v3628 = vpop.f32.mrb[0].mxu0
        %v3629 = vadd.f32 0.0, %v3628
        %v3630 = vpop.f32.mrb[0].mxu0
        %3631 = vmatprep.mubr.bf16.mxu0 0
        %3632 = vmatmul.mubr.bf16.gmra.mrb[0].mxu0 %v3420
        %v3633 = vpop.f32.mrb[0].mxu0
        %v3634 = vadd.f32 0.0, %v3633
        %v3635 = vpop.f32.mrb[0].mxu0
        %v3636 = vpop.f32.mrb[0].mxu0
        %v3637 = vadd.f32 0.0, %v3636
        %v3638 = vpop.f32.mrb[0].mxu0
        %3639 = vmatprep.mubr.bf16.mxu0 0
        %3640 = vmatmul.mubr.bf16.gmra.mrb[0].mxu0 %v3421
        %v3641 = vpop.f32.mrb[0].mxu0
        %v3642 = vadd.f32 0.0, %v3641
        %v3643 = vpop.f32.mrb[0].mxu0
        %v3644 = vpop.f32.mrb[0].mxu0
        %v3645 = vadd.f32 0.0, %v3644
        %v3646 = vpop.f32.mrb[0].mxu0
        %3647 = vdwg.mxu0
        %v3648 = vadd.f32 %v3342, %v3522
        %v3649 = vadd.f32 %v3343, %v3525
        %v3650 = vadd.f32 %v3344, %v3530
        %v3651 = vadd.f32 %v3345, %v3533
        %v3652 = vadd.f32 %v3346, %v3538
        %v3653 = vadd.f32 %v3347, %v3541
        %v3654 = vadd.f32 %v3348, %v3546
        %v3655 = vadd.f32 %v3349, %v3549
        %v3656 = vadd.f32 %v3350, %v3554
        %v3657 = vadd.f32 %v3351, %v3557
        %v3658 = vadd.f32 %v3352, %v3562
        %v3659 = vadd.f32 %v3353, %v3565
        %v3660 = vadd.f32 %v3354, %v3570
        %v3661 = vadd.f32 %v3355, %v3573
        %v3662 = vadd.f32 %v3356, %v3578
        %v3663 = vadd.f32 %v3357, %v3581
        %v3664 = vadd.f32 %v3358, %v3586
        %v3665 = vadd.f32 %v3359, %v3589
        %v3666 = vadd.f32 %v3360, %v3594
        %v3667 = vadd.f32 %v3361, %v3597
        %v3668 = vadd.f32 %v3362, %v3602
        %v3669 = vadd.f32 %v3363, %v3605
        %v3670 = vadd.f32 %v3364, %v3610
        %v3671 = vadd.f32 %v3365, %v3613
        %v3672 = vadd.f32 %v3366, %v3618
        %v3673 = vadd.f32 %v3367, %v3621
        %v3674 = vadd.f32 %v3368, %v3626
        %v3675 = vadd.f32 %v3369, %v3629
        %v3676 = vadd.f32 %v3370, %v3634
        %v3677 = vadd.f32 %v3371, %v3637
        %v3678 = vadd.f32 %v3372, %v3642
        %v3679 = vadd.f32 %v3373, %v3645
        %v3680 = vld [vmem:[%s3067 + $0x2] sm:$0xff]
        %v3681 = vld [vmem:[%s3067 + $0xa] sm:$0xff]
        %v3682 = vld [vmem:[%s3067 + $0x1a] sm:$0xff]
        %v3683 = vld [vmem:[%s3067 + $0x22] sm:$0xff]
        %v3684 = vld [vmem:[%s3067 + $0x32] sm:$0xff]
        %v3685 = vld [vmem:[%s3067 + $0x3a] sm:$0xff]
        %v3686 = vld [vmem:[%s3067 + $0x4a] sm:$0xff]
        %v3687 = vld [vmem:[%s3067 + $0x52] sm:$0xff]
        %v3688 = vld [vmem:[%s3067 + $0x62] sm:$0xff]
        %v3689 = vld [vmem:[%s3067 + $0x6a] sm:$0xff]
        %v3690 = vld [vmem:[%s3067 + $0x7a] sm:$0xff]
        %v3691 = vld [vmem:[%s3067 + $0x82] sm:$0xff]
        %v3692 = vld [vmem:[%s3067 + $0x92] sm:$0xff]
        %v3693 = vld [vmem:[%s3067 + $0x9a] sm:$0xff]
        %v3694 = vld [vmem:[%s3067 + $0xaa] sm:$0xff]
        %v3695 = vld [vmem:[%s3067 + $0xb2] sm:$0xff]
        %v3696 = vld [vmem:[%s3067 + $0xc2] sm:$0xff]
        %v3697 = vld [vmem:[%s3067 + $0xca] sm:$0xff]
        %v3698 = vld [vmem:[%s3067 + $0xda] sm:$0xff]
        %v3699 = vld [vmem:[%s3067 + $0xe2] sm:$0xff]
        %v3700 = vld [vmem:[%s3067 + $0xf2] sm:$0xff]
        %v3701 = vld [vmem:[%s3067 + $0xfa] sm:$0xff]
        %v3702 = vld [vmem:[%s3067 + $0x10a] sm:$0xff]
        %v3703 = vld [vmem:[%s3067 + $0x112] sm:$0xff]
        %v3704 = vld [vmem:[%s3067 + $0x122] sm:$0xff]
        %v3705 = vld [vmem:[%s3067 + $0x12a] sm:$0xff]
        %v3706 = vld [vmem:[%s3067 + $0x13a] sm:$0xff]
        %v3707 = vld [vmem:[%s3067 + $0x142] sm:$0xff]
        %v3708 = vld [vmem:[%s3067 + $0x152] sm:$0xff]
        %v3709 = vld [vmem:[%s3067 + $0x15a] sm:$0xff]
        %v3710 = vld [vmem:[%s3067 + $0x16a] sm:$0xff]
        %v3711 = vld [vmem:[%s3067 + $0x172] sm:$0xff]
        %v3712 = vpack.c.bf16 %v3681, %v3680
        %v3713 = vpack.c.bf16 %v3683, %v3682
        %v3714 = vpack.c.bf16 %v3685, %v3684
        %v3715 = vpack.c.bf16 %v3687, %v3686
        %v3716 = vpack.c.bf16 %v3689, %v3688
        %v3717 = vpack.c.bf16 %v3691, %v3690
        %v3718 = vpack.c.bf16 %v3693, %v3692
        %v3719 = vpack.c.bf16 %v3695, %v3694
        %v3720 = vpack.c.bf16 %v3697, %v3696
        %v3721 = vpack.c.bf16 %v3699, %v3698
        %v3722 = vpack.c.bf16 %v3701, %v3700
        %v3723 = vpack.c.bf16 %v3703, %v3702
        %v3724 = vpack.c.bf16 %v3705, %v3704
        %v3725 = vpack.c.bf16 %v3707, %v3706
        %v3726 = vpack.c.bf16 %v3709, %v3708
        %v3727 = vpack.c.bf16 %v3711, %v3710
        %s3728 = scalar_lea.vmem %s6, 512
        %v3729 = vld [vmem:[%s3728] sm:$0xf]
        %v3730 = vld [vmem:[%s3728 + $0x4] sm:$0xf]
        %v3731 = vld [vmem:[%s3728 + $0x8] sm:$0xf]
        %v3732 = vld [vmem:[%s3728 + $0xc] sm:$0xf]
        %v3733 = vld [vmem:[%s3728 + $0x10] sm:$0xf]
        %v3734 = vld [vmem:[%s3728 + $0x14] sm:$0xf]
        %v3735 = vld [vmem:[%s3728 + $0x18] sm:$0xf]
        %v3736 = vld [vmem:[%s3728 + $0x1c] sm:$0xf]
        %v3737 = vld [vmem:[%s3728 + $0x20] sm:$0xf]
        %v3738 = vld [vmem:[%s3728 + $0x24] sm:$0xf]
        %v3739 = vld [vmem:[%s3728 + $0x28] sm:$0xf]
        %v3740 = vld [vmem:[%s3728 + $0x2c] sm:$0xf]
        %v3741 = vld [vmem:[%s3728 + $0x30] sm:$0xf]
        %v3742 = vld [vmem:[%s3728 + $0x34] sm:$0xf]
        %v3743 = vld [vmem:[%s3728 + $0x38] sm:$0xf]
        %v3744 = vld [vmem:[%s3728 + $0x3c] sm:$0xf]
        %v3761 = vunpack.c.l.b16 %v3729
        %v3762 = vunpack.c.l.b16 %v3730
        %v3763 = vunpack.c.l.b16 %v3731
        %v3764 = vunpack.c.l.b16 %v3732
        %v3765 = vunpack.c.l.b16 %v3733
        %v3766 = vunpack.c.l.b16 %v3734
        %v3767 = vunpack.c.l.b16 %v3735
        %v3768 = vunpack.c.l.b16 %v3736
        %v3769 = vunpack.c.l.b16 %v3737
        %v3770 = vunpack.c.l.b16 %v3738
        %v3771 = vunpack.c.l.b16 %v3739
        %v3772 = vunpack.c.l.b16 %v3740
        %v3773 = vunpack.c.l.b16 %v3741
        %v3774 = vunpack.c.l.b16 %v3742
        %v3775 = vunpack.c.l.b16 %v3743
        %v3776 = vunpack.c.l.b16 %v3744
        %v3777 = vpack.c.b16 %v3762, %v3761
        %v3778 = vpack.c.b16 %v3764, %v3763
        %v3779 = vpack.c.b16 %v3766, %v3765
        %v3780 = vpack.c.b16 %v3768, %v3767
        %v3781 = vpack.c.b16 %v3770, %v3769
        %v3782 = vpack.c.b16 %v3772, %v3771
        %v3783 = vpack.c.b16 %v3774, %v3773
        %v3784 = vpack.c.b16 %v3776, %v3775
        %3793 = vmatprep.subr.bf16.mxu0 0
        %3794 = vmatpush1.bf16.msra.mxu0 %v3777
        %3795 = vmatprep.subr.bf16.mxu0 0
        %3796 = vmatpush1.bf16.msra.mxu0 %v3778
        %3797 = vmatprep.subr.bf16.mxu0 0
        %3798 = vmatpush1.bf16.msra.mxu0 %v3779
        %3799 = vmatprep.subr.bf16.mxu0 0
        %3800 = vmatpush1.bf16.msra.mxu0 %v3780
        %3801 = vmatprep.subr.bf16.mxu0 0
        %3802 = vmatpush1.bf16.msra.mxu0 %v3781
        %3803 = vmatprep.subr.bf16.mxu0 0
        %3804 = vmatpush1.bf16.msra.mxu0 %v3782
        %3805 = vmatprep.subr.bf16.mxu0 0
        %3806 = vmatpush1.bf16.msra.mxu0 %v3783
        %3807 = vmatprep.subr.bf16.mxu0 0
        %3808 = vmatpush1.bf16.msra.mxu0 %v3784
        %3809 = vmatprep.subr.bf16.mxu0 0
        %3810 = vmatpush1.bf16.msra.mxu0 0
        %3811 = vmatprep.subr.bf16.mxu0 0
        %3812 = vmatpush1.bf16.msra.mxu0 0
        %3813 = vmatprep.subr.bf16.mxu0 0
        %3814 = vmatpush1.bf16.msra.mxu0 0
        %3815 = vmatprep.subr.bf16.mxu0 0
        %3816 = vmatpush1.bf16.msra.mxu0 0
        %3817 = vmatprep.subr.bf16.mxu0 0
        %3818 = vmatpush1.bf16.msra.mxu0 0
        %3819 = vmatprep.subr.bf16.mxu0 0
        %3820 = vmatpush1.bf16.msra.mxu0 0
        %3821 = vmatprep.subr.bf16.mxu0 0
        %3822 = vmatpush1.bf16.msra.mxu0 0
        %3823 = vmatprep.subr.bf16.mxu0 0
        %3824 = vmatpush1.bf16.msra.mxu0 0
        %3825 = vmatprep.mubr.bf16.mxu0 0
        %3826 = vmatmul.mubr.bf16.gmra.mrb[0].mxu0 %v3712
        %v3827 = vpop.f32.mrb[0].mxu0
        %v3828 = vadd.f32 0.0, %v3827
        %v3829 = vpop.f32.mrb[0].mxu0
        %v3830 = vpop.f32.mrb[0].mxu0
        %v3831 = vadd.f32 0.0, %v3830
        %v3832 = vpop.f32.mrb[0].mxu0
        %3833 = vmatprep.mubr.bf16.mxu0 0
        %3834 = vmatmul.mubr.bf16.gmra.mrb[0].mxu0 %v3713
        %v3835 = vpop.f32.mrb[0].mxu0
        %v3836 = vadd.f32 0.0, %v3835
        %v3837 = vpop.f32.mrb[0].mxu0
        %v3838 = vpop.f32.mrb[0].mxu0
        %v3839 = vadd.f32 0.0, %v3838
        %v3840 = vpop.f32.mrb[0].mxu0
        %3841 = vmatprep.mubr.bf16.mxu0 0
        %3842 = vmatmul.mubr.bf16.gmra.mrb[0].mxu0 %v3714
        %v3843 = vpop.f32.mrb[0].mxu0
        %v3844 = vadd.f32 0.0, %v3843
        %v3845 = vpop.f32.mrb[0].mxu0
        %v3846 = vpop.f32.mrb[0].mxu0
        %v3847 = vadd.f32 0.0, %v3846
        %v3848 = vpop.f32.mrb[0].mxu0
        %3849 = vmatprep.mubr.bf16.mxu0 0
        %3850 = vmatmul.mubr.bf16.gmra.mrb[0].mxu0 %v3715
        %v3851 = vpop.f32.mrb[0].mxu0
        %v3852 = vadd.f32 0.0, %v3851
        %v3853 = vpop.f32.mrb[0].mxu0
        %v3854 = vpop.f32.mrb[0].mxu0
        %v3855 = vadd.f32 0.0, %v3854
        %v3856 = vpop.f32.mrb[0].mxu0
        %3857 = vmatprep.mubr.bf16.mxu0 0
        %3858 = vmatmul.mubr.bf16.gmra.mrb[0].mxu0 %v3716
        %v3859 = vpop.f32.mrb[0].mxu0
        %v3860 = vadd.f32 0.0, %v3859
        %v3861 = vpop.f32.mrb[0].mxu0
        %v3862 = vpop.f32.mrb[0].mxu0
        %v3863 = vadd.f32 0.0, %v3862
        %v3864 = vpop.f32.mrb[0].mxu0
        %3865 = vmatprep.mubr.bf16.mxu0 0
        %3866 = vmatmul.mubr.bf16.gmra.mrb[0].mxu0 %v3717
        %v3867 = vpop.f32.mrb[0].mxu0
        %v3868 = vadd.f32 0.0, %v3867
        %v3869 = vpop.f32.mrb[0].mxu0
        %v3870 = vpop.f32.mrb[0].mxu0
        %v3871 = vadd.f32 0.0, %v3870
        %v3872 = vpop.f32.mrb[0].mxu0
        %3873 = vmatprep.mubr.bf16.mxu0 0
        %3874 = vmatmul.mubr.bf16.gmra.mrb[0].mxu0 %v3718
        %v3875 = vpop.f32.mrb[0].mxu0
        %v3876 = vadd.f32 0.0, %v3875
        %v3877 = vpop.f32.mrb[0].mxu0
        %v3878 = vpop.f32.mrb[0].mxu0
        %v3879 = vadd.f32 0.0, %v3878
        %v3880 = vpop.f32.mrb[0].mxu0
        %3881 = vmatprep.mubr.bf16.mxu0 0
        %3882 = vmatmul.mubr.bf16.gmra.mrb[0].mxu0 %v3719
        %v3883 = vpop.f32.mrb[0].mxu0
        %v3884 = vadd.f32 0.0, %v3883
        %v3885 = vpop.f32.mrb[0].mxu0
        %v3886 = vpop.f32.mrb[0].mxu0
        %v3887 = vadd.f32 0.0, %v3886
        %v3888 = vpop.f32.mrb[0].mxu0
        %3889 = vmatprep.mubr.bf16.mxu0 0
        %3890 = vmatmul.mubr.bf16.gmra.mrb[0].mxu0 %v3720
        %v3891 = vpop.f32.mrb[0].mxu0
        %v3892 = vadd.f32 0.0, %v3891
        %v3893 = vpop.f32.mrb[0].mxu0
        %v3894 = vpop.f32.mrb[0].mxu0
        %v3895 = vadd.f32 0.0, %v3894
        %v3896 = vpop.f32.mrb[0].mxu0
        %3897 = vmatprep.mubr.bf16.mxu0 0
        %3898 = vmatmul.mubr.bf16.gmra.mrb[0].mxu0 %v3721
        %v3899 = vpop.f32.mrb[0].mxu0
        %v3900 = vadd.f32 0.0, %v3899
        %v3901 = vpop.f32.mrb[0].mxu0
        %v3902 = vpop.f32.mrb[0].mxu0
        %v3903 = vadd.f32 0.0, %v3902
        %v3904 = vpop.f32.mrb[0].mxu0
        %3905 = vmatprep.mubr.bf16.mxu0 0
        %3906 = vmatmul.mubr.bf16.gmra.mrb[0].mxu0 %v3722
        %v3907 = vpop.f32.mrb[0].mxu0
        %v3908 = vadd.f32 0.0, %v3907
        %v3909 = vpop.f32.mrb[0].mxu0
        %v3910 = vpop.f32.mrb[0].mxu0
        %v3911 = vadd.f32 0.0, %v3910
        %v3912 = vpop.f32.mrb[0].mxu0
        %3913 = vmatprep.mubr.bf16.mxu0 0
        %3914 = vmatmul.mubr.bf16.gmra.mrb[0].mxu0 %v3723
        %v3915 = vpop.f32.mrb[0].mxu0
        %v3916 = vadd.f32 0.0, %v3915
        %v3917 = vpop.f32.mrb[0].mxu0
        %v3918 = vpop.f32.mrb[0].mxu0
        %v3919 = vadd.f32 0.0, %v3918
        %v3920 = vpop.f32.mrb[0].mxu0
        %3921 = vmatprep.mubr.bf16.mxu0 0
        %3922 = vmatmul.mubr.bf16.gmra.mrb[0].mxu0 %v3724
        %v3923 = vpop.f32.mrb[0].mxu0
        %v3924 = vadd.f32 0.0, %v3923
        %v3925 = vpop.f32.mrb[0].mxu0
        %v3926 = vpop.f32.mrb[0].mxu0
        %v3927 = vadd.f32 0.0, %v3926
        %v3928 = vpop.f32.mrb[0].mxu0
        %3929 = vmatprep.mubr.bf16.mxu0 0
        %3930 = vmatmul.mubr.bf16.gmra.mrb[0].mxu0 %v3725
        %v3931 = vpop.f32.mrb[0].mxu0
        %v3932 = vadd.f32 0.0, %v3931
        %v3933 = vpop.f32.mrb[0].mxu0
        %v3934 = vpop.f32.mrb[0].mxu0
        %v3935 = vadd.f32 0.0, %v3934
        %v3936 = vpop.f32.mrb[0].mxu0
        %3937 = vmatprep.mubr.bf16.mxu0 0
        %3938 = vmatmul.mubr.bf16.gmra.mrb[0].mxu0 %v3726
        %v3939 = vpop.f32.mrb[0].mxu0
        %v3940 = vadd.f32 0.0, %v3939
        %v3941 = vpop.f32.mrb[0].mxu0
        %v3942 = vpop.f32.mrb[0].mxu0
        %v3943 = vadd.f32 0.0, %v3942
        %v3944 = vpop.f32.mrb[0].mxu0
        %3945 = vmatprep.mubr.bf16.mxu0 0
        %3946 = vmatmul.mubr.bf16.gmra.mrb[0].mxu0 %v3727
        %v3947 = vpop.f32.mrb[0].mxu0
        %v3948 = vadd.f32 0.0, %v3947
        %v3949 = vpop.f32.mrb[0].mxu0
        %v3950 = vpop.f32.mrb[0].mxu0
        %v3951 = vadd.f32 0.0, %v3950
        %v3952 = vpop.f32.mrb[0].mxu0
        %3953 = vdwg.mxu0
        %v3954 = vadd.f32 %v3648, %v3828
        %v3955 = vadd.f32 %v3649, %v3831
        %v3956 = vadd.f32 %v3650, %v3836
        %v3957 = vadd.f32 %v3651, %v3839
        %v3958 = vadd.f32 %v3652, %v3844
        %v3959 = vadd.f32 %v3653, %v3847
        %v3960 = vadd.f32 %v3654, %v3852
        %v3961 = vadd.f32 %v3655, %v3855
        %v3962 = vadd.f32 %v3656, %v3860
        %v3963 = vadd.f32 %v3657, %v3863
        %v3964 = vadd.f32 %v3658, %v3868
        %v3965 = vadd.f32 %v3659, %v3871
        %v3966 = vadd.f32 %v3660, %v3876
        %v3967 = vadd.f32 %v3661, %v3879
        %v3968 = vadd.f32 %v3662, %v3884
        %v3969 = vadd.f32 %v3663, %v3887
        %v3970 = vadd.f32 %v3664, %v3892
        %v3971 = vadd.f32 %v3665, %v3895
        %v3972 = vadd.f32 %v3666, %v3900
        %v3973 = vadd.f32 %v3667, %v3903
        %v3974 = vadd.f32 %v3668, %v3908
        %v3975 = vadd.f32 %v3669, %v3911
        %v3976 = vadd.f32 %v3670, %v3916
        %v3977 = vadd.f32 %v3671, %v3919
        %v3978 = vadd.f32 %v3672, %v3924
        %v3979 = vadd.f32 %v3673, %v3927
        %v3980 = vadd.f32 %v3674, %v3932
        %v3981 = vadd.f32 %v3675, %v3935
        %v3982 = vadd.f32 %v3676, %v3940
        %v3983 = vadd.f32 %v3677, %v3943
        %v3984 = vadd.f32 %v3678, %v3948
        %v3985 = vadd.f32 %v3679, %v3951
        %v3986 = vld [vmem:[%s7] sm:$0x1]
        %v3988 = vlaneseq
        %v3989 = vshrl.u32 %v3988, 7
        %v3990 = vsub.s32 0, %v3989
        %v3991 = vrot.slane %v3986, %v3990
        %v3993 = vmul.f32 %v3954, %v3991
        %v3994 = vmul.f32 %v3955, %v3991
        %v3995 = vmul.f32 %v3956, %v3991
        %v3996 = vmul.f32 %v3957, %v3991
        %v3997 = vmul.f32 %v3958, %v3991
        %v3998 = vmul.f32 %v3959, %v3991
        %v3999 = vmul.f32 %v3960, %v3991
        %v4000 = vmul.f32 %v3961, %v3991
        %v4001 = vmul.f32 %v3962, %v3991
        %v4002 = vmul.f32 %v3963, %v3991
        %v4003 = vmul.f32 %v3964, %v3991
        %v4004 = vmul.f32 %v3965, %v3991
        %v4005 = vmul.f32 %v3966, %v3991
        %v4006 = vmul.f32 %v3967, %v3991
        %v4007 = vmul.f32 %v3968, %v3991
        %v4008 = vmul.f32 %v3969, %v3991
        %v4009 = vmul.f32 %v3970, %v3991
        %v4010 = vmul.f32 %v3971, %v3991
        %v4011 = vmul.f32 %v3972, %v3991
        %v4012 = vmul.f32 %v3973, %v3991
        %v4013 = vmul.f32 %v3974, %v3991
        %v4014 = vmul.f32 %v3975, %v3991
        %v4015 = vmul.f32 %v3976, %v3991
        %v4016 = vmul.f32 %v3977, %v3991
        %v4017 = vmul.f32 %v3978, %v3991
        %v4018 = vmul.f32 %v3979, %v3991
        %v4019 = vmul.f32 %v3980, %v3991
        %v4020 = vmul.f32 %v3981, %v3991
        %v4021 = vmul.f32 %v3982, %v3991
        %v4022 = vmul.f32 %v3983, %v3991
        %v4023 = vmul.f32 %v3984, %v3991
        %v4024 = vmul.f32 %v3985, %v3991
        %v4025 = vld [vmem:[%s8] sm:$0x1]
        %v4027 = vlaneseq
        %v4028 = vshrl.u32 %v4027, 7
        %v4029 = vsub.s32 0, %v4028
        %v4030 = vrot.slane %v4025, %v4029
        %v4032 = vadd.f32 %v3993, %v4030
        %v4033 = vadd.f32 %v3994, %v4030
        %v4034 = vadd.f32 %v3995, %v4030
        %v4035 = vadd.f32 %v3996, %v4030
        %v4036 = vadd.f32 %v3997, %v4030
        %v4037 = vadd.f32 %v3998, %v4030
        %v4038 = vadd.f32 %v3999, %v4030
        %v4039 = vadd.f32 %v4000, %v4030
        %v4040 = vadd.f32 %v4001, %v4030
        %v4041 = vadd.f32 %v4002, %v4030
        %v4042 = vadd.f32 %v4003, %v4030
        %v4043 = vadd.f32 %v4004, %v4030
        %v4044 = vadd.f32 %v4005, %v4030
        %v4045 = vadd.f32 %v4006, %v4030
        %v4046 = vadd.f32 %v4007, %v4030
        %v4047 = vadd.f32 %v4008, %v4030
        %v4048 = vadd.f32 %v4009, %v4030
        %v4049 = vadd.f32 %v4010, %v4030
        %v4050 = vadd.f32 %v4011, %v4030
        %v4051 = vadd.f32 %v4012, %v4030
        %v4052 = vadd.f32 %v4013, %v4030
        %v4053 = vadd.f32 %v4014, %v4030
        %v4054 = vadd.f32 %v4015, %v4030
        %v4055 = vadd.f32 %v4016, %v4030
        %v4056 = vadd.f32 %v4017, %v4030
        %v4057 = vadd.f32 %v4018, %v4030
        %v4058 = vadd.f32 %v4019, %v4030
        %v4059 = vadd.f32 %v4020, %v4030
        %v4060 = vadd.f32 %v4021, %v4030
        %v4061 = vadd.f32 %v4022, %v4030
        %v4062 = vadd.f32 %v4023, %v4030
        %v4063 = vadd.f32 %v4024, %v4030
        %v4064 = vmax.f32 %v4032, 0.0
        %v4065 = vmax.f32 %v4033, 0.0
        %v4066 = vmax.f32 %v4034, 0.0
        %v4067 = vmax.f32 %v4035, 0.0
        %v4068 = vmax.f32 %v4036, 0.0
        %v4069 = vmax.f32 %v4037, 0.0
        %v4070 = vmax.f32 %v4038, 0.0
        %v4071 = vmax.f32 %v4039, 0.0
        %v4072 = vmax.f32 %v4040, 0.0
        %v4073 = vmax.f32 %v4041, 0.0
        %v4074 = vmax.f32 %v4042, 0.0
        %v4075 = vmax.f32 %v4043, 0.0
        %v4076 = vmax.f32 %v4044, 0.0
        %v4077 = vmax.f32 %v4045, 0.0
        %v4078 = vmax.f32 %v4046, 0.0
        %v4079 = vmax.f32 %v4047, 0.0
        %v4080 = vmax.f32 %v4048, 0.0
        %v4081 = vmax.f32 %v4049, 0.0
        %v4082 = vmax.f32 %v4050, 0.0
        %v4083 = vmax.f32 %v4051, 0.0
        %v4084 = vmax.f32 %v4052, 0.0
        %v4085 = vmax.f32 %v4053, 0.0
        %v4086 = vmax.f32 %v4054, 0.0
        %v4087 = vmax.f32 %v4055, 0.0
        %v4088 = vmax.f32 %v4056, 0.0
        %v4089 = vmax.f32 %v4057, 0.0
        %v4090 = vmax.f32 %v4058, 0.0
        %v4091 = vmax.f32 %v4059, 0.0
        %v4092 = vmax.f32 %v4060, 0.0
        %v4093 = vmax.f32 %v4061, 0.0
        %v4094 = vmax.f32 %v4062, 0.0
        %v4095 = vmax.f32 %v4063, 0.0
        %v4096 = vpack.c.bf16 %v4065, %v4064
        %v4097 = vpack.c.bf16 %v4067, %v4066
        %v4098 = vpack.c.bf16 %v4069, %v4068
        %v4099 = vpack.c.bf16 %v4071, %v4070
        %v4100 = vpack.c.bf16 %v4073, %v4072
        %v4101 = vpack.c.bf16 %v4075, %v4074
        %v4102 = vpack.c.bf16 %v4077, %v4076
        %v4103 = vpack.c.bf16 %v4079, %v4078
        %v4104 = vpack.c.bf16 %v4081, %v4080
        %v4105 = vpack.c.bf16 %v4083, %v4082
        %v4106 = vpack.c.bf16 %v4085, %v4084
        %v4107 = vpack.c.bf16 %v4087, %v4086
        %v4108 = vpack.c.bf16 %v4089, %v4088
        %v4109 = vpack.c.bf16 %v4091, %v4090
        %v4110 = vpack.c.bf16 %v4093, %v4092
        %v4111 = vpack.c.bf16 %v4095, %v4094
        %v4112 = vld [vmem:[%s9] sm:$0xf]
        %v4113 = vld [vmem:[%s9 + $0x4] sm:$0xf]
        %v4114 = vld [vmem:[%s9 + $0x8] sm:$0xf]
        %v4115 = vld [vmem:[%s9 + $0xc] sm:$0xf]
        %v4116 = vld [vmem:[%s9 + $0x10] sm:$0xf]
        %v4117 = vld [vmem:[%s9 + $0x14] sm:$0xf]
        %v4118 = vld [vmem:[%s9 + $0x18] sm:$0xf]
        %v4119 = vld [vmem:[%s9 + $0x1c] sm:$0xf]
        %v4120 = vld [vmem:[%s9 + $0x20] sm:$0xf]
        %v4121 = vld [vmem:[%s9 + $0x24] sm:$0xf]
        %v4122 = vld [vmem:[%s9 + $0x28] sm:$0xf]
        %v4123 = vld [vmem:[%s9 + $0x2c] sm:$0xf]
        %v4124 = vld [vmem:[%s9 + $0x30] sm:$0xf]
        %v4125 = vld [vmem:[%s9 + $0x34] sm:$0xf]
        %v4126 = vld [vmem:[%s9 + $0x38] sm:$0xf]
        %v4127 = vld [vmem:[%s9 + $0x3c] sm:$0xf]
        %v4144 = vunpack.c.l.b16 %v4112
        %v4145 = vunpack.c.l.b16 %v4113
        %v4146 = vunpack.c.l.b16 %v4114
        %v4147 = vunpack.c.l.b16 %v4115
        %v4148 = vunpack.c.l.b16 %v4116
        %v4149 = vunpack.c.l.b16 %v4117
        %v4150 = vunpack.c.l.b16 %v4118
        %v4151 = vunpack.c.l.b16 %v4119
        %v4152 = vunpack.c.l.b16 %v4120
        %v4153 = vunpack.c.l.b16 %v4121
        %v4154 = vunpack.c.l.b16 %v4122
        %v4155 = vunpack.c.l.b16 %v4123
        %v4156 = vunpack.c.l.b16 %v4124
        %v4157 = vunpack.c.l.b16 %v4125
        %v4158 = vunpack.c.l.b16 %v4126
        %v4159 = vunpack.c.l.b16 %v4127
        %v4160 = vpack.c.b16 %v4145, %v4144
        %v4161 = vpack.c.b16 %v4147, %v4146
        %v4162 = vpack.c.b16 %v4149, %v4148
        %v4163 = vpack.c.b16 %v4151, %v4150
        %v4164 = vpack.c.b16 %v4153, %v4152
        %v4165 = vpack.c.b16 %v4155, %v4154
        %v4166 = vpack.c.b16 %v4157, %v4156
        %v4167 = vpack.c.b16 %v4159, %v4158
        %4176 = vmatprep.subr.bf16.mxu0 0
        %4177 = vmatpush1.bf16.msra.mxu0 %v4160
        %4178 = vmatprep.subr.bf16.mxu0 0
        %4179 = vmatpush1.bf16.msra.mxu0 %v4161
        %4180 = vmatprep.subr.bf16.mxu0 0
        %4181 = vmatpush1.bf16.msra.mxu0 %v4162
        %4182 = vmatprep.subr.bf16.mxu0 0
        %4183 = vmatpush1.bf16.msra.mxu0 %v4163
        %4184 = vmatprep.subr.bf16.mxu0 0
        %4185 = vmatpush1.bf16.msra.mxu0 %v4164
        %4186 = vmatprep.subr.bf16.mxu0 0
        %4187 = vmatpush1.bf16.msra.mxu0 %v4165
        %4188 = vmatprep.subr.bf16.mxu0 0
        %4189 = vmatpush1.bf16.msra.mxu0 %v4166
        %4190 = vmatprep.subr.bf16.mxu0 0
        %4191 = vmatpush1.bf16.msra.mxu0 %v4167
        %4192 = vmatprep.subr.bf16.mxu0 0
        %4193 = vmatpush1.bf16.msra.mxu0 0
        %4194 = vmatprep.subr.bf16.mxu0 0
        %4195 = vmatpush1.bf16.msra.mxu0 0
        %4196 = vmatprep.subr.bf16.mxu0 0
        %4197 = vmatpush1.bf16.msra.mxu0 0
        %4198 = vmatprep.subr.bf16.mxu0 0
        %4199 = vmatpush1.bf16.msra.mxu0 0
        %4200 = vmatprep.subr.bf16.mxu0 0
        %4201 = vmatpush1.bf16.msra.mxu0 0
        %4202 = vmatprep.subr.bf16.mxu0 0
        %4203 = vmatpush1.bf16.msra.mxu0 0
        %4204 = vmatprep.subr.bf16.mxu0 0
        %4205 = vmatpush1.bf16.msra.mxu0 0
        %4206 = vmatprep.subr.bf16.mxu0 0
        %4207 = vmatpush1.bf16.msra.mxu0 0
        %4208 = vmatprep.mubr.bf16.mxu0 0
        %4209 = vmatmul.mubr.bf16.gmra.mrb[0].mxu0 %v4096
        %v4210 = vpop.f32.mrb[0].mxu0
        %v4211 = vadd.f32 0.0, %v4210
        %v4212 = vpop.f32.mrb[0].mxu0
        %v4213 = vpop.f32.mrb[0].mxu0
        %v4214 = vadd.f32 0.0, %v4213
        %v4215 = vpop.f32.mrb[0].mxu0
        %4216 = vmatprep.mubr.bf16.mxu0 0
        %4217 = vmatmul.mubr.bf16.gmra.mrb[0].mxu0 %v4097
        %v4218 = vpop.f32.mrb[0].mxu0
        %v4219 = vadd.f32 0.0, %v4218
        %v4220 = vpop.f32.mrb[0].mxu0
        %v4221 = vpop.f32.mrb[0].mxu0
        %v4222 = vadd.f32 0.0, %v4221
        %v4223 = vpop.f32.mrb[0].mxu0
        %4224 = vmatprep.mubr.bf16.mxu0 0
        %4225 = vmatmul.mubr.bf16.gmra.mrb[0].mxu0 %v4098
        %v4226 = vpop.f32.mrb[0].mxu0
        %v4227 = vadd.f32 0.0, %v4226
        %v4228 = vpop.f32.mrb[0].mxu0
        %v4229 = vpop.f32.mrb[0].mxu0
        %v4230 = vadd.f32 0.0, %v4229
        %v4231 = vpop.f32.mrb[0].mxu0
        %4232 = vmatprep.mubr.bf16.mxu0 0
        %4233 = vmatmul.mubr.bf16.gmra.mrb[0].mxu0 %v4099
        %v4234 = vpop.f32.mrb[0].mxu0
        %v4235 = vadd.f32 0.0, %v4234
        %v4236 = vpop.f32.mrb[0].mxu0
        %v4237 = vpop.f32.mrb[0].mxu0
        %v4238 = vadd.f32 0.0, %v4237
        %v4239 = vpop.f32.mrb[0].mxu0
        %4240 = vmatprep.mubr.bf16.mxu0 0
        %4241 = vmatmul.mubr.bf16.gmra.mrb[0].mxu0 %v4100
        %v4242 = vpop.f32.mrb[0].mxu0
        %v4243 = vadd.f32 0.0, %v4242
        %v4244 = vpop.f32.mrb[0].mxu0
        %v4245 = vpop.f32.mrb[0].mxu0
        %v4246 = vadd.f32 0.0, %v4245
        %v4247 = vpop.f32.mrb[0].mxu0
        %4248 = vmatprep.mubr.bf16.mxu0 0
        %4249 = vmatmul.mubr.bf16.gmra.mrb[0].mxu0 %v4101
        %v4250 = vpop.f32.mrb[0].mxu0
        %v4251 = vadd.f32 0.0, %v4250
        %v4252 = vpop.f32.mrb[0].mxu0
        %v4253 = vpop.f32.mrb[0].mxu0
        %v4254 = vadd.f32 0.0, %v4253
        %v4255 = vpop.f32.mrb[0].mxu0
        %4256 = vmatprep.mubr.bf16.mxu0 0
        %4257 = vmatmul.mubr.bf16.gmra.mrb[0].mxu0 %v4102
        %v4258 = vpop.f32.mrb[0].mxu0
        %v4259 = vadd.f32 0.0, %v4258
        %v4260 = vpop.f32.mrb[0].mxu0
        %v4261 = vpop.f32.mrb[0].mxu0
        %v4262 = vadd.f32 0.0, %v4261
        %v4263 = vpop.f32.mrb[0].mxu0
        %4264 = vmatprep.mubr.bf16.mxu0 0
        %4265 = vmatmul.mubr.bf16.gmra.mrb[0].mxu0 %v4103
        %v4266 = vpop.f32.mrb[0].mxu0
        %v4267 = vadd.f32 0.0, %v4266
        %v4268 = vpop.f32.mrb[0].mxu0
        %v4269 = vpop.f32.mrb[0].mxu0
        %v4270 = vadd.f32 0.0, %v4269
        %v4271 = vpop.f32.mrb[0].mxu0
        %4272 = vmatprep.mubr.bf16.mxu0 0
        %4273 = vmatmul.mubr.bf16.gmra.mrb[0].mxu0 %v4104
        %v4274 = vpop.f32.mrb[0].mxu0
        %v4275 = vadd.f32 0.0, %v4274
        %v4276 = vpop.f32.mrb[0].mxu0
        %v4277 = vpop.f32.mrb[0].mxu0
        %v4278 = vadd.f32 0.0, %v4277
        %v4279 = vpop.f32.mrb[0].mxu0
        %4280 = vmatprep.mubr.bf16.mxu0 0
        %4281 = vmatmul.mubr.bf16.gmra.mrb[0].mxu0 %v4105
        %v4282 = vpop.f32.mrb[0].mxu0
        %v4283 = vadd.f32 0.0, %v4282
        %v4284 = vpop.f32.mrb[0].mxu0
        %v4285 = vpop.f32.mrb[0].mxu0
        %v4286 = vadd.f32 0.0, %v4285
        %v4287 = vpop.f32.mrb[0].mxu0
        %4288 = vmatprep.mubr.bf16.mxu0 0
        %4289 = vmatmul.mubr.bf16.gmra.mrb[0].mxu0 %v4106
        %v4290 = vpop.f32.mrb[0].mxu0
        %v4291 = vadd.f32 0.0, %v4290
        %v4292 = vpop.f32.mrb[0].mxu0
        %v4293 = vpop.f32.mrb[0].mxu0
        %v4294 = vadd.f32 0.0, %v4293
        %v4295 = vpop.f32.mrb[0].mxu0
        %4296 = vmatprep.mubr.bf16.mxu0 0
        %4297 = vmatmul.mubr.bf16.gmra.mrb[0].mxu0 %v4107
        %v4298 = vpop.f32.mrb[0].mxu0
        %v4299 = vadd.f32 0.0, %v4298
        %v4300 = vpop.f32.mrb[0].mxu0
        %v4301 = vpop.f32.mrb[0].mxu0
        %v4302 = vadd.f32 0.0, %v4301
        %v4303 = vpop.f32.mrb[0].mxu0
        %4304 = vmatprep.mubr.bf16.mxu0 0
        %4305 = vmatmul.mubr.bf16.gmra.mrb[0].mxu0 %v4108
        %v4306 = vpop.f32.mrb[0].mxu0
        %v4307 = vadd.f32 0.0, %v4306
        %v4308 = vpop.f32.mrb[0].mxu0
        %v4309 = vpop.f32.mrb[0].mxu0
        %v4310 = vadd.f32 0.0, %v4309
        %v4311 = vpop.f32.mrb[0].mxu0
        %4312 = vmatprep.mubr.bf16.mxu0 0
        %4313 = vmatmul.mubr.bf16.gmra.mrb[0].mxu0 %v4109
        %v4314 = vpop.f32.mrb[0].mxu0
        %v4315 = vadd.f32 0.0, %v4314
        %v4316 = vpop.f32.mrb[0].mxu0
        %v4317 = vpop.f32.mrb[0].mxu0
        %v4318 = vadd.f32 0.0, %v4317
        %v4319 = vpop.f32.mrb[0].mxu0
        %4320 = vmatprep.mubr.bf16.mxu0 0
        %4321 = vmatmul.mubr.bf16.gmra.mrb[0].mxu0 %v4110
        %v4322 = vpop.f32.mrb[0].mxu0
        %v4323 = vadd.f32 0.0, %v4322
        %v4324 = vpop.f32.mrb[0].mxu0
        %v4325 = vpop.f32.mrb[0].mxu0
        %v4326 = vadd.f32 0.0, %v4325
        %v4327 = vpop.f32.mrb[0].mxu0
        %4328 = vmatprep.mubr.bf16.mxu0 0
        %4329 = vmatmul.mubr.bf16.gmra.mrb[0].mxu0 %v4111
        %v4330 = vpop.f32.mrb[0].mxu0
        %v4331 = vadd.f32 0.0, %v4330
        %v4332 = vpop.f32.mrb[0].mxu0
        %v4333 = vpop.f32.mrb[0].mxu0
        %v4334 = vadd.f32 0.0, %v4333
        %v4335 = vpop.f32.mrb[0].mxu0
        %4336 = vdwg.mxu0
        %v4337 = vld [vmem:[%s10] sm:$0x1]
        %v4339 = vlaneseq
        %v4340 = vshrl.u32 %v4339, 7
        %v4341 = vsub.s32 0, %v4340
        %v4342 = vrot.slane %v4337, %v4341
        %v4344 = vmul.f32 %v4211, %v4342
        %v4345 = vmul.f32 %v4214, %v4342
        %v4346 = vmul.f32 %v4219, %v4342
        %v4347 = vmul.f32 %v4222, %v4342
        %v4348 = vmul.f32 %v4227, %v4342
        %v4349 = vmul.f32 %v4230, %v4342
        %v4350 = vmul.f32 %v4235, %v4342
        %v4351 = vmul.f32 %v4238, %v4342
        %v4352 = vmul.f32 %v4243, %v4342
        %v4353 = vmul.f32 %v4246, %v4342
        %v4354 = vmul.f32 %v4251, %v4342
        %v4355 = vmul.f32 %v4254, %v4342
        %v4356 = vmul.f32 %v4259, %v4342
        %v4357 = vmul.f32 %v4262, %v4342
        %v4358 = vmul.f32 %v4267, %v4342
        %v4359 = vmul.f32 %v4270, %v4342
        %v4360 = vmul.f32 %v4275, %v4342
        %v4361 = vmul.f32 %v4278, %v4342
        %v4362 = vmul.f32 %v4283, %v4342
        %v4363 = vmul.f32 %v4286, %v4342
        %v4364 = vmul.f32 %v4291, %v4342
        %v4365 = vmul.f32 %v4294, %v4342
        %v4366 = vmul.f32 %v4299, %v4342
        %v4367 = vmul.f32 %v4302, %v4342
        %v4368 = vmul.f32 %v4307, %v4342
        %v4369 = vmul.f32 %v4310, %v4342
        %v4370 = vmul.f32 %v4315, %v4342
        %v4371 = vmul.f32 %v4318, %v4342
        %v4372 = vmul.f32 %v4323, %v4342
        %v4373 = vmul.f32 %v4326, %v4342
        %v4374 = vmul.f32 %v4331, %v4342
        %v4375 = vmul.f32 %v4334, %v4342
        %v4376 = vld [vmem:[%s11] sm:$0x1]
        %v4378 = vlaneseq
        %v4379 = vshrl.u32 %v4378, 7
        %v4380 = vsub.s32 0, %v4379
        %v4381 = vrot.slane %v4376, %v4380
        %v4383 = vadd.f32 %v4344, %v4381
        %v4384 = vadd.f32 %v4345, %v4381
        %v4385 = vadd.f32 %v4346, %v4381
        %v4386 = vadd.f32 %v4347, %v4381
        %v4387 = vadd.f32 %v4348, %v4381
        %v4388 = vadd.f32 %v4349, %v4381
        %v4389 = vadd.f32 %v4350, %v4381
        %v4390 = vadd.f32 %v4351, %v4381
        %v4391 = vadd.f32 %v4352, %v4381
        %v4392 = vadd.f32 %v4353, %v4381
        %v4393 = vadd.f32 %v4354, %v4381
        %v4394 = vadd.f32 %v4355, %v4381
        %v4395 = vadd.f32 %v4356, %v4381
        %v4396 = vadd.f32 %v4357, %v4381
        %v4397 = vadd.f32 %v4358, %v4381
        %v4398 = vadd.f32 %v4359, %v4381
        %v4399 = vadd.f32 %v4360, %v4381
        %v4400 = vadd.f32 %v4361, %v4381
        %v4401 = vadd.f32 %v4362, %v4381
        %v4402 = vadd.f32 %v4363, %v4381
        %v4403 = vadd.f32 %v4364, %v4381
        %v4404 = vadd.f32 %v4365, %v4381
        %v4405 = vadd.f32 %v4366, %v4381
        %v4406 = vadd.f32 %v4367, %v4381
        %v4407 = vadd.f32 %v4368, %v4381
        %v4408 = vadd.f32 %v4369, %v4381
        %v4409 = vadd.f32 %v4370, %v4381
        %v4410 = vadd.f32 %v4371, %v4381
        %v4411 = vadd.f32 %v4372, %v4381
        %v4412 = vadd.f32 %v4373, %v4381
        %v4413 = vadd.f32 %v4374, %v4381
        %v4414 = vadd.f32 %v4375, %v4381
        %v4415 = vmax.f32 %v4383, 0.0
        %v4416 = vmax.f32 %v4384, 0.0
        %v4417 = vmax.f32 %v4385, 0.0
        %v4418 = vmax.f32 %v4386, 0.0
        %v4419 = vmax.f32 %v4387, 0.0
        %v4420 = vmax.f32 %v4388, 0.0
        %v4421 = vmax.f32 %v4389, 0.0
        %v4422 = vmax.f32 %v4390, 0.0
        %v4423 = vmax.f32 %v4391, 0.0
        %v4424 = vmax.f32 %v4392, 0.0
        %v4425 = vmax.f32 %v4393, 0.0
        %v4426 = vmax.f32 %v4394, 0.0
        %v4427 = vmax.f32 %v4395, 0.0
        %v4428 = vmax.f32 %v4396, 0.0
        %v4429 = vmax.f32 %v4397, 0.0
        %v4430 = vmax.f32 %v4398, 0.0
        %v4431 = vmax.f32 %v4399, 0.0
        %v4432 = vmax.f32 %v4400, 0.0
        %v4433 = vmax.f32 %v4401, 0.0
        %v4434 = vmax.f32 %v4402, 0.0
        %v4435 = vmax.f32 %v4403, 0.0
        %v4436 = vmax.f32 %v4404, 0.0
        %v4437 = vmax.f32 %v4405, 0.0
        %v4438 = vmax.f32 %v4406, 0.0
        %v4439 = vmax.f32 %v4407, 0.0
        %v4440 = vmax.f32 %v4408, 0.0
        %v4441 = vmax.f32 %v4409, 0.0
        %v4442 = vmax.f32 %v4410, 0.0
        %v4443 = vmax.f32 %v4411, 0.0
        %v4444 = vmax.f32 %v4412, 0.0
        %v4445 = vmax.f32 %v4413, 0.0
        %v4446 = vmax.f32 %v4414, 0.0
        %v4447 = vld [vmem:[%s533] sm:$0xff]
        %v4448 = vld [vmem:[%s533 + $0x8] sm:$0xff]
        %v4449 = vld [vmem:[%s533 + $0x10] sm:$0xff]
        %v4450 = vld [vmem:[%s533 + $0x18] sm:$0xff]
        %v4451 = vld [vmem:[%s533 + $0x20] sm:$0xff]
        %v4452 = vld [vmem:[%s533 + $0x28] sm:$0xff]
        %v4453 = vld [vmem:[%s533 + $0x30] sm:$0xff]
        %v4454 = vld [vmem:[%s533 + $0x38] sm:$0xff]
        %v4455 = vld [vmem:[%s533 + $0x40] sm:$0xff]
        %v4456 = vld [vmem:[%s533 + $0x48] sm:$0xff]
        %v4457 = vld [vmem:[%s533 + $0x50] sm:$0xff]
        %v4458 = vld [vmem:[%s533 + $0x58] sm:$0xff]
        %v4459 = vld [vmem:[%s533 + $0x60] sm:$0xff]
        %v4460 = vld [vmem:[%s533 + $0x68] sm:$0xff]
        %v4461 = vld [vmem:[%s533 + $0x70] sm:$0xff]
        %v4462 = vld [vmem:[%s533 + $0x78] sm:$0xff]
        %v4463 = vld [vmem:[%s533 + $0x80] sm:$0xff]
        %v4464 = vld [vmem:[%s533 + $0x88] sm:$0xff]
        %v4465 = vld [vmem:[%s533 + $0x90] sm:$0xff]
        %v4466 = vld [vmem:[%s533 + $0x98] sm:$0xff]
        %v4467 = vld [vmem:[%s533 + $0xa0] sm:$0xff]
        %v4468 = vld [vmem:[%s533 + $0xa8] sm:$0xff]
        %v4469 = vld [vmem:[%s533 + $0xb0] sm:$0xff]
        %v4470 = vld [vmem:[%s533 + $0xb8] sm:$0xff]
        %v4471 = vld [vmem:[%s533 + $0xc0] sm:$0xff]
        %v4472 = vld [vmem:[%s533 + $0xc8] sm:$0xff]
        %v4473 = vld [vmem:[%s533 + $0xd0] sm:$0xff]
        %v4474 = vld [vmem:[%s533 + $0xd8] sm:$0xff]
        %v4475 = vld [vmem:[%s533 + $0xe0] sm:$0xff]
        %v4476 = vld [vmem:[%s533 + $0xe8] sm:$0xff]
        %v4477 = vld [vmem:[%s533 + $0xf0] sm:$0xff]
        %v4478 = vld [vmem:[%s533 + $0xf8] sm:$0xff]
        %v4479 = vadd.f32 %v4415, %v4447
        %v4480 = vadd.f32 %v4416, %v4448
        %v4481 = vadd.f32 %v4417, %v4449
        %v4482 = vadd.f32 %v4418, %v4450
        %v4483 = vadd.f32 %v4419, %v4451
        %v4484 = vadd.f32 %v4420, %v4452
        %v4485 = vadd.f32 %v4421, %v4453
        %v4486 = vadd.f32 %v4422, %v4454
        %v4487 = vadd.f32 %v4423, %v4455
        %v4488 = vadd.f32 %v4424, %v4456
        %v4489 = vadd.f32 %v4425, %v4457
        %v4490 = vadd.f32 %v4426, %v4458
        %v4491 = vadd.f32 %v4427, %v4459
        %v4492 = vadd.f32 %v4428, %v4460
        %v4493 = vadd.f32 %v4429, %v4461
        %v4494 = vadd.f32 %v4430, %v4462
        %v4495 = vadd.f32 %v4431, %v4463
        %v4496 = vadd.f32 %v4432, %v4464
        %v4497 = vadd.f32 %v4433, %v4465
        %v4498 = vadd.f32 %v4434, %v4466
        %v4499 = vadd.f32 %v4435, %v4467
        %v4500 = vadd.f32 %v4436, %v4468
        %v4501 = vadd.f32 %v4437, %v4469
        %v4502 = vadd.f32 %v4438, %v4470
        %v4503 = vadd.f32 %v4439, %v4471
        %v4504 = vadd.f32 %v4440, %v4472
        %v4505 = vadd.f32 %v4441, %v4473
        %v4506 = vadd.f32 %v4442, %v4474
        %v4507 = vadd.f32 %v4443, %v4475
        %v4508 = vadd.f32 %v4444, %v4476
        %v4509 = vadd.f32 %v4445, %v4477
        %v4510 = vadd.f32 %v4446, %v4478
        %v4511 = vmax.f32 %v4479, 0.0
        %v4512 = vmax.f32 %v4480, 0.0
        %v4513 = vmax.f32 %v4481, 0.0
        %v4514 = vmax.f32 %v4482, 0.0
        %v4515 = vmax.f32 %v4483, 0.0
        %v4516 = vmax.f32 %v4484, 0.0
        %v4517 = vmax.f32 %v4485, 0.0
        %v4518 = vmax.f32 %v4486, 0.0
        %v4519 = vmax.f32 %v4487, 0.0
        %v4520 = vmax.f32 %v4488, 0.0
        %v4521 = vmax.f32 %v4489, 0.0
        %v4522 = vmax.f32 %v4490, 0.0
        %v4523 = vmax.f32 %v4491, 0.0
        %v4524 = vmax.f32 %v4492, 0.0
        %v4525 = vmax.f32 %v4493, 0.0
        %v4526 = vmax.f32 %v4494, 0.0
        %v4527 = vmax.f32 %v4495, 0.0
        %v4528 = vmax.f32 %v4496, 0.0
        %v4529 = vmax.f32 %v4497, 0.0
        %v4530 = vmax.f32 %v4498, 0.0
        %v4531 = vmax.f32 %v4499, 0.0
        %v4532 = vmax.f32 %v4500, 0.0
        %v4533 = vmax.f32 %v4501, 0.0
        %v4534 = vmax.f32 %v4502, 0.0
        %v4535 = vmax.f32 %v4503, 0.0
        %v4536 = vmax.f32 %v4504, 0.0
        %v4537 = vmax.f32 %v4505, 0.0
        %v4538 = vmax.f32 %v4506, 0.0
        %v4539 = vmax.f32 %v4507, 0.0
        %v4540 = vmax.f32 %v4508, 0.0
        %v4541 = vmax.f32 %v4509, 0.0
        %v4542 = vmax.f32 %v4510, 0.0
        %4543 = vst [vmem:[%s523] sm:$0xff] %v4511
        %4544 = vst [vmem:[%s523 + $0x8] sm:$0xff] %v4512
        %4545 = vst [vmem:[%s523 + $0x10] sm:$0xff] %v4513
        %4546 = vst [vmem:[%s523 + $0x18] sm:$0xff] %v4514
        %4547 = vst [vmem:[%s523 + $0x20] sm:$0xff] %v4515
        %4548 = vst [vmem:[%s523 + $0x28] sm:$0xff] %v4516
        %4549 = vst [vmem:[%s523 + $0x30] sm:$0xff] %v4517
        %4550 = vst [vmem:[%s523 + $0x38] sm:$0xff] %v4518
        %4551 = vst [vmem:[%s523 + $0x40] sm:$0xff] %v4519
        %4552 = vst [vmem:[%s523 + $0x48] sm:$0xff] %v4520
        %4553 = vst [vmem:[%s523 + $0x50] sm:$0xff] %v4521
        %4554 = vst [vmem:[%s523 + $0x58] sm:$0xff] %v4522
        %4555 = vst [vmem:[%s523 + $0x60] sm:$0xff] %v4523
        %4556 = vst [vmem:[%s523 + $0x68] sm:$0xff] %v4524
        %4557 = vst [vmem:[%s523 + $0x70] sm:$0xff] %v4525
        %4558 = vst [vmem:[%s523 + $0x78] sm:$0xff] %v4526
        %4559 = vst [vmem:[%s523 + $0x80] sm:$0xff] %v4527
        %4560 = vst [vmem:[%s523 + $0x88] sm:$0xff] %v4528
        %4561 = vst [vmem:[%s523 + $0x90] sm:$0xff] %v4529
        %4562 = vst [vmem:[%s523 + $0x98] sm:$0xff] %v4530
        %4563 = vst [vmem:[%s523 + $0xa0] sm:$0xff] %v4531
        %4564 = vst [vmem:[%s523 + $0xa8] sm:$0xff] %v4532
        %4565 = vst [vmem:[%s523 + $0xb0] sm:$0xff] %v4533
        %4566 = vst [vmem:[%s523 + $0xb8] sm:$0xff] %v4534
        %4567 = vst [vmem:[%s523 + $0xc0] sm:$0xff] %v4535
        %4568 = vst [vmem:[%s523 + $0xc8] sm:$0xff] %v4536
        %4569 = vst [vmem:[%s523 + $0xd0] sm:$0xff] %v4537
        %4570 = vst [vmem:[%s523 + $0xd8] sm:$0xff] %v4538
        %4571 = vst [vmem:[%s523 + $0xe0] sm:$0xff] %v4539
        %4572 = vst [vmem:[%s523 + $0xe8] sm:$0xff] %v4540
        %4573 = vst [vmem:[%s523 + $0xf0] sm:$0xff] %v4541
        %4574 = vst [vmem:[%s523 + $0xf8] sm:$0xff] %v4542
        %s4575 = sand.u32 %s337, 1
        %s4576 = scalar_lea.sflag [#allocation4], %s4575
        %s4577 = sand.u32 %s337, 1
        %s4578 = smul.addr %s4577, 256
        %s4579 = scalar_lea.vmem [#allocation3], %s4578
        // Predicated region
        $region69: #{block_forward.1} parent=67 // pred_check
          %p4580 = pneg %p347
        $region70: #{block_forward.1} parent=67 // pred_check_branch
          %4582 = sbr.rel (%p4580) target = $region72
        $region71: #{block_forward.1} parent=67 // pred_region
          %s4583 = smul.u32 16, %s31
          %s4585 = ssub.s32 4096, 4096
          %4586 = vsyncadd %s4576, %s4585
          %s4587 = smul.addr %s4583, 2
          %s4588 = smul.addr %s30, 32
          %s4589 = sadd.s32 %s4587, %s4588
          %s4590 = smul.addr %s4589, 128
          %s4591 = scalar_lea.hbm %s12, %s4590
          %s4592 = sshll.u32 %s4579, 4
          %s4593 = int_to_ptr.vmem [resolvable:$true] %s4592
          %4598 = dma.vmem_to_hbm [thread:$0]  %s4593, 4096, %s4591, %s4576, 128, 128, 8
        $region72: #{block_forward.1} parent=67 // pred_fallthru
          _
      $region68: #{block_forward.1} parent=5 // pred_fallthru
        _
      %p4599 = scmp.le.s32.totalorder 2, %s21
      // Predicated region
      $region73: #{block_forward.1} parent=5 // pred_check
        %p4600 = pneg %p4599
      $region74: #{block_forward.1} parent=5 // pred_check_branch
        %4602 = sbr.rel (%p4600) target = $region76
      $region75: #{block_forward.1} parent=5 // pred_region
        %s4603 = ssub.s32 %s21, 2
        // Predicated region
        $region77: #{block_forward.1} parent=75 // pred_check
          %p4604 = pneg %p353
        $region78: #{block_forward.1} parent=75 // pred_check_branch
          %4606 = sbr.rel (%p4604) target = $region80
        $region79: #{block_forward.1} parent=75 // pred_region
          %s4607 = sand.u32 %s338, 1
          %s4608 = scalar_lea.sflag [#allocation4], %s4607
          %s4609 = sand.u32 %s338, 1
          %s4610 = smul.addr %s4609, 256
          %s4611 = scalar_lea.vmem [#allocation3], %s4610
          %4612 = dma.done %s4608, 4096
        $region80: #{block_forward.1} parent=75 // pred_fallthru
          _
      $region76: #{block_forward.1} parent=5 // pred_fallthru
        _
    $region6: #{block_forward.1} parent=1 // loop_footer
      %s25 = sadd.s32 1, %s21
    $region7: #{block_forward.1} parent=1 // loop_footer_branch
      %20 = sbr.rel target = $region3
    $region8: #{block_forward.1} parent=1 // loop_exit
      _
    %4613 = vsyncpa [#allocation4], 1
    %s4614 = scalar_lea.sflag [#allocation4], 1
    %4615 = vsyncpa %s4614, 1

</llo_original>
